<compile_context>
chip_gen: v5e
topology: v5e:2x2
jax: 0.10.0
libtpu: 0.0.40
codegen_flags: <defaults>
</compile_context>

<pallas_src>
import math

import jax
import jax.numpy as jnp
from jax.experimental import pallas as pl
from jax.experimental.pallas import tpu as pltpu


# ----------------------------------------------------------------------------
# Kernel 1: conv1x1 (+ fused BN) + SiLU + global average pool
# ----------------------------------------------------------------------------
def _make_conv_pool_kernel(tile_b, tile_hw, lanes, inv_hw):
    """tile_b images per step; lane-group accumulation into (tile_b, C_, lanes)."""
    n_groups = tile_hw // lanes  # >= 1; lanes == tile_hw when HW % 128 != 0

    def kernel(x_ref, wc_ref, bnb_ref, po_ref, acc_ref):
        # x_ref:   (tile_b, C1, tile_hw)  spatial tile(s), channel-major (NCHW)
        # wc_ref:  (C_, C1)   1x1 conv weight, BN scale folded in (bf16)
        # bnb_ref: (C_, 1)    fused BN bias = beta - mean*scale (f32)
        # po_ref:  (tile_b, C_, 1) pooled means (f32 output)
        # acc_ref: (tile_b, C_, lanes) f32 lane-dense running pooled-sum scratch
        k = pl.program_id(1)

        @pl.when(k == 0)
        def _init():
            acc_ref[...] = jnp.zeros_like(acc_ref)

        wc = wc_ref[...]
        bnb = bnb_ref[...]
        for b in range(tile_b):  # static unroll; tile_b kept small by the wrapper
            # 1x1 conv == one 2-D MXU matmul over channels, f32 accumulation.
            x_tile = x_ref[b].astype(wc.dtype)                           # (C1, tile_hw)
            y = jnp.dot(wc, x_tile, preferred_element_type=jnp.float32)  # (C_, tile_hw)
            # Fused BN bias + exact SiLU (tanh form: single EUP op per element).
            y = y + bnb
            y = y * (0.5 * jnp.tanh(0.5 * y) + 0.5)
            # Lane-group partial sums: static 128-aligned slices -> whole-vreg
            # VPU adds; no per-step cross-lane (XLU) reduction.
            part = y[:, 0:lanes]
            for g in range(1, n_groups):
                part = part + y[:, g * lanes:(g + 1) * lanes]
            acc_ref[b] += part

        @pl.when(k == pl.num_programs(1) - 1)
        def _finalize():
            # Single cross-lane reduce per image, once, at the very end.
            po_ref[...] = (jnp.sum(acc_ref[...], axis=-1, keepdims=True)
                           * inv_hw).astype(po_ref.dtype)

    return kernel


# ----------------------------------------------------------------------------
# Kernel 2: linear + softmax over the whole (small) batch at once
# ----------------------------------------------------------------------------
def _linear_softmax_kernel(p_ref, w_ref, b_ref, o_ref):
    # p_ref: (B, C_) pooled features (f32), w_ref: (C_, C2) bf16, b_ref: (1, C2) f32
    p = p_ref[...].astype(w_ref.dtype)
    logits = jnp.dot(p, w_ref[...], preferred_element_type=jnp.float32) + b_ref[...]
    m = jnp.max(logits, axis=-1, keepdims=True)
    e = jnp.exp(logits - m)
    s = jnp.sum(e, axis=-1, keepdims=True)
    o_ref[...] = (e / s).astype(o_ref.dtype)   # exact division: rows sum to 1


# ----------------------------------------------------------------------------
# Tiling heuristics
# ----------------------------------------------------------------------------
def _chip_vmem_bytes():
    try:
        info = pltpu.get_tpu_info()
        return int(getattr(info, "vmem_capacity_bytes", 0) or 0)
    except Exception:
        return 0


def _default_tile_cap():
    # v5e / v6e have 128 MiB physical VMEM -> bigger x tiles amortize step overhead.
    # v7x (64 MiB per TC) or unknown -> conservative.
    return 1024 if _chip_vmem_bytes() >= 100 * 1024 * 1024 else 512


def _pick_tile_hw(hw, cap):
    """Largest multiple of 128 that divides hw and is <= cap (else the full hw)."""
    if hw <= 128 or hw % 128 != 0:
        return hw            # full-extent block is always legal
    t = min(cap, hw)
    t -= t % 128
    t = max(t, 128)
    while hw % t:
        t -= 128
    return t


def _pick_tile_b(batch, c_mid, tile_hw, num_k):
    """Pack several images per grid step when the spatial extent is small."""
    if num_k != 1:
        return 1
    budget = 6 * 1024 * 1024                       # f32 y temps + acc per step
    per_image = 2 * c_mid * tile_hw * 4
    tb = int(min(8, max(1, budget // max(per_image, 1))))
    tb = min(tb, batch)
    while batch % tb:
        tb -= 1
    return max(tb, 1)


# ----------------------------------------------------------------------------
# Wrapper
# ----------------------------------------------------------------------------
def classify_forward(x, params, *, max_tile_hw=None):
    """x: (B, C1, H, W) (or list to concat on channels) -> (B, C2) softmax probs."""
    if isinstance(x, (list, tuple)):
        x = jnp.concatenate(x, axis=1)
    wc_fused, bn_bias, wl_t, bl_row = params
    B, C1, H, W = x.shape
    HW = H * W
    C_ = wc_fused.shape[0]
    C2 = wl_t.shape[1]

    if max_tile_hw is None:
        max_tile_hw = _default_tile_cap()
    tile_hw = _pick_tile_hw(HW, max_tile_hw)
    num_k = HW // tile_hw
    lanes = 128 if tile_hw % 128 == 0 else tile_hw
    tile_b = _pick_tile_b(B, C_, tile_hw, num_k)

    vmem_limit = (64 * 1024 * 1024
                  if _chip_vmem_bytes() >= 100 * 1024 * 1024
                  else 32 * 1024 * 1024)

    # Free reshape only (contiguous NCHW) -- no HBM transpose / no wrapper cast
    # of the big tensor (accepts bf16 NCHW from upstream unchanged).
    x3 = x.reshape(B, C1, HW)

    kernel1 = _make_conv_pool_kernel(tile_b, tile_hw, lanes, 1.0 / float(HW))

    pooled = pl.pallas_call(
        kernel1,
        out_shape=jax.ShapeDtypeStruct((B, C_, 1), jnp.float32),
        grid_spec=pltpu.PrefetchScalarGridSpec(
            num_scalar_prefetch=0,
            grid=(B // tile_b, num_k),               # HW (reduction) axis last
            in_specs=[
                pl.BlockSpec((tile_b, C1, tile_hw), lambda bi, k: (bi, 0, k)),
                pl.BlockSpec((C_, C1), lambda bi, k: (0, 0)),
                pl.BlockSpec((C_, 1), lambda bi, k: (0, 0)),
            ],
            out_specs=pl.BlockSpec((tile_b, C_, 1), lambda bi, k: (bi, 0, 0)),
            scratch_shapes=[pltpu.VMEM((tile_b, C_, lanes), jnp.float32)],
        ),
        compiler_params=pltpu.CompilerParams(
            dimension_semantics=("parallel", "arbitrary"),
            vmem_limit_bytes=vmem_limit,
        ),
    )(x3, wc_fused, bn_bias)

    pooled2 = pooled.reshape(B, C_)   # free: drop trailing 1 of contiguous output

    # Dropout(p=0.0) is the identity in eval -> skipped.
    out = pl.pallas_call(
        _linear_softmax_kernel,
        out_shape=jax.ShapeDtypeStruct((B, C2), jnp.float32),
        grid_spec=pltpu.PrefetchScalarGridSpec(
            num_scalar_prefetch=0,
            grid=(1,),
            in_specs=[
                pl.BlockSpec((B, C_), lambda i: (0, 0)),
                pl.BlockSpec((C_, C2), lambda i: (0, 0)),
                pl.BlockSpec((1, C2), lambda i: (0, 0)),
            ],
            out_specs=pl.BlockSpec((B, C2), lambda i: (0, 0)),
        ),
        compiler_params=pltpu.CompilerParams(
            dimension_semantics=("arbitrary",),
        ),
    )(pooled2, wl_t, bl_row)
    return out


# ----------------------------------------------------------------------------
# Parameters (torch layouts) and prep (BN fold + dtype)
# ----------------------------------------------------------------------------
def make_params(key, c1, c2, c_=1280):
    """Deterministic synthetic params matching Classify.__init__ shapes (torch layout)."""
    ks = jax.random.split(key, 7)
    conv_w = jax.random.normal(ks[0], (c_, c1), jnp.float32) / math.sqrt(c1)  # (c_,c1,1,1) squeezed
    gamma = 1.0 + 0.1 * jax.random.normal(ks[1], (c_,), jnp.float32)
    beta = 0.1 * jax.random.normal(ks[2], (c_,), jnp.float32)
    mean = 0.1 * jax.random.normal(ks[3], (c_,), jnp.float32)
    var = jnp.abs(1.0 + 0.1 * jax.random.normal(ks[4], (c_,), jnp.float32))
    lw = jax.random.normal(ks[5], (c2, c_), jnp.float32) / math.sqrt(c_)      # torch Linear weight
    lb = 0.01 * jax.random.normal(ks[6], (c2,), jnp.float32)
    return conv_w, gamma, beta, mean, var, lw, lb


def prepare_params(raw, eps=1e-5, matmul_dtype=jnp.bfloat16):
    """Fold BN scale into the conv weight; bf16 matmul operands; lane-dense layouts."""
    conv_w, gamma, beta, mean, var, lw, lb = raw
    scale = gamma / jnp.sqrt(var + eps)
    wc_fused = (conv_w * scale[:, None]).astype(matmul_dtype)           # (C_, C1) bf16
    bn_bias = (beta - mean * scale).reshape(-1, 1).astype(jnp.float32)  # (C_, 1)  f32
    wl_t = lw.T.astype(matmul_dtype)                                    # (C_, C2) bf16
    bl_row = lb.reshape(1, -1).astype(jnp.float32)                      # (1, C2)  f32
    return wc_fused, bn_bias, wl_t, bl_row


# ----------------------------------------------------------------------------
# Pure-JAX references
# ----------------------------------------------------------------------------
def reference_forward(x_nchw, raw, eps=1e-5):
    """Faithful f32 mirror of the PyTorch eval forward."""
    conv_w, gamma, beta, mean, var, lw, lb = raw
    B, C1, H, W = x_nchw.shape
    x = x_nchw.reshape(B, C1, H * W)
    y = jnp.einsum('dc,bcs->bds', conv_w, x)
    y = (y - mean[None, :, None]) * (gamma / jnp.sqrt(var + eps))[None, :, None] + beta[None, :, None]
    y = y * jax.nn.sigmoid(y)
    p = jnp.mean(y, axis=2)
    logits = p @ lw.T + lb
    return jax.nn.softmax(logits, axis=-1)


def reference_forward_matched(x_nchw, raw, eps=1e-5):
    """Reference matching the kernel's mixed precision (bf16 matmul operands, f32 rest)."""
    conv_w, gamma, beta, mean, var, lw, lb = raw
    scale = gamma / jnp.sqrt(var + eps)
    wc = (conv_w * scale[:, None]).astype(jnp.bfloat16)
    bias = (beta - mean * scale).astype(jnp.float32)
    B, C1, H, W = x_nchw.shape
    xb = x_nchw.reshape(B, C1, H * W).astype(jnp.bfloat16)
    y = jnp.einsum('dc,bcs->bds', wc, xb, preferred_element_type=jnp.float32)
    y = y + bias[None, :, None]
    y = y * jax.nn.sigmoid(y)
    p = jnp.mean(y, axis=2)
    logits = jnp.dot(p.astype(jnp.bfloat16), lw.T.astype(jnp.bfloat16),
                     preferred_element_type=jnp.float32) + lb
    return jax.nn.softmax(logits, axis=-1)


# ----------------------------------------------------------------------------
# Self-test
# ----------------------------------------------------------------------------
def _check(x, raw, params, **kw):
    out = jax.block_until_ready(classify_forward(x, params, **kw))
    ref_f32 = reference_forward(x, raw)
    ref_match = reference_forward_matched(x, raw)
    B, C2 = ref_f32.shape
    assert out.shape == (B, C2)
    assert bool(jnp.all(jnp.isfinite(out)))
    assert jnp.allclose(jnp.sum(out, axis=-1), 1.0, atol=1e-4), "softmax rows != 1"
    assert jnp.allclose(out, ref_match, atol=2e-3), "mismatch vs precision-matched reference"
    assert jnp.allclose(out, ref_f32, atol=3e-2), "mismatch vs f32 reference"


if __name__ == "__main__":
    key = jax.random.PRNGKey(0)
    k_x, k_x2, k_p = jax.random.split(key, 3)

    B, C1, C2 = 2, 4, 10
    raw = make_params(k_p, C1, C2)
    params = prepare_params(raw)

    # A) H=W=16, forced 128-wide tiles: multi-step HW reduction (accumulator path).
    x_a = jax.random.normal(k_x, (B, C1, 16, 16), jnp.float32)
    _check(x_a, raw, params, max_tile_hw=128)

    # B) H=W=16, default tiles: single k step, 2 lane-groups folded by VPU adds.
    _check(x_a, raw, params)

    # C) H=W=7 (real Classify regime, HW=49): batch-packed step, ragged lane count.
    x_c = jax.random.normal(k_x2, (B, C1, 7, 7), jnp.float32)
    _check(x_c, raw, params)

    print("KERNEL_OK")
</pallas_src>

<mosaic_0001>
module attributes {stable_mosaic.version = 11 : i64} {
  func.func @kernel(%arg0: i32, %arg1: i32, %arg2: memref<1x4x128xf32, #tpu.memory_space<vmem>>, %arg3: memref<1280x4xbf16, #tpu.memory_space<vmem>>, %arg4: memref<1280x1xf32, #tpu.memory_space<vmem>>, %arg5: memref<1x1280x1xf32, #tpu.memory_space<vmem>>, %arg6: memref<1x1280x128xf32, #tpu.memory_space<vmem>>) attributes {dimension_semantics = [#tpu.dimension_semantics<parallel>, #tpu.dimension_semantics<arbitrary>], iteration_bounds = array<i64: 2, 2>, scalar_prefetch = 0 : i64, scratch_operands = 1 : i64, tpu.core_type = #tpu.core_type<tc>, window_params = [{transform_indices = @transform_0, window_bounds = array<i64: 1, 4, 128>}, {pipeline_mode = #tpu.pipeline_mode<synchronous>, transform_indices = @transform_1, window_bounds = array<i64: 1280, 4>}, {pipeline_mode = #tpu.pipeline_mode<synchronous>, transform_indices = @transform_2, window_bounds = array<i64: 1280, 1>}, {transform_indices = @transform_3, window_bounds = array<i64: 1, 1280, 1>}]} {
    %c0_i32 = arith.constant 0 : i32
    %0 = arith.cmpi eq, %arg1, %c0_i32 : i32
    %1 = arith.extui %0 : i1 to i32
    %c0_i32_0 = arith.constant 0 : i32
    %2 = arith.cmpi ne, %1, %c0_i32_0 : i32
    scf.if %2 {
      %cst_17 = arith.constant 0.000000e+00 : f32
      %28 = vector.broadcast %cst_17 : f32 to vector<1x1280x128xf32>
      %c0_18 = arith.constant 0 : index
      %c0_19 = arith.constant 0 : index
      %c0_20 = arith.constant 0 : index
      %29 = vector.load %arg6[%c0_18, %c0_19, %c0_20] : memref<1x1280x128xf32, #tpu.memory_space<vmem>>, vector<1x1280x128xf32>
      tpu.vector_store %arg6[%c0_18, %c0_19, %c0_20], %28 {strides = array<i32>} : memref<1x1280x128xf32, #tpu.memory_space<vmem>>, vector<1x1280x128xf32>,
    } else {
    }
    %c0 = arith.constant 0 : index
    %c0_1 = arith.constant 0 : index
    %3 = vector.load %arg3[%c0, %c0_1] : memref<1280x4xbf16, #tpu.memory_space<vmem>>, vector<1280x4xbf16>
    %c0_2 = arith.constant 0 : index
    %c0_3 = arith.constant 0 : index
    %4 = vector.load %arg4[%c0_2, %c0_3] : memref<1280x1xf32, #tpu.memory_space<vmem>>, vector<1280x1xf32>
    %c0_4 = arith.constant 0 : index
    %c0_5 = arith.constant 0 : index
    %c0_6 = arith.constant 0 : index
    %5 = vector.load %arg2[%c0_4, %c0_5, %c0_6] : memref<1x4x128xf32, #tpu.memory_space<vmem>>, vector<1x4x128xf32>
    %6 = vector.shape_cast %5 : vector<1x4x128xf32> to vector<4x128xf32>
    %7 = arith.truncf %6 : vector<4x128xf32> to vector<4x128xbf16>
    %cst = arith.constant dense<0.000000e+00> : vector<1280x128xf32>
    %8 = tpu.matmul %3, %7, %cst {dimension_numbers = #tpu.dot_dimension_numbers<[1], [0], [0], [1], [0, 0, 1, 1], [], []>} : vector<1280x4xbf16>, vector<4x128xbf16>, vector<1280x128xf32> -> vector<1280x128xf32>
    %9 = vector.broadcast %4 : vector<1280x1xf32> to vector<1280x128xf32>
    %10 = arith.addf %8, %9 : vector<1280x128xf32>
    %cst_7 = arith.constant 5.000000e-01 : f32
    %11 = vector.broadcast %cst_7 : f32 to vector<1280x128xf32>
    %12 = arith.mulf %11, %10 : vector<1280x128xf32>
    %13 = math.tanh %12 : vector<1280x128xf32>
    %cst_8 = arith.constant 5.000000e-01 : f32
    %14 = vector.broadcast %cst_8 : f32 to vector<1280x128xf32>
    %15 = arith.mulf %14, %13 : vector<1280x128xf32>
    %cst_9 = arith.constant 5.000000e-01 : f32
    %16 = vector.broadcast %cst_9 : f32 to vector<1280x128xf32>
    %17 = arith.addf %15, %16 : vector<1280x128xf32>
    %18 = arith.mulf %10, %17 : vector<1280x128xf32>
    %c0_10 = arith.constant 0 : index
    %c0_11 = arith.constant 0 : index
    %c0_12 = arith.constant 0 : index
    %19 = vector.load %arg6[%c0_10, %c0_11, %c0_12] : memref<1x1280x128xf32, #tpu.memory_space<vmem>>, vector<1x1280x128xf32>
    %20 = vector.shape_cast %19 : vector<1x1280x128xf32> to vector<1280x128xf32>
    %21 = arith.addf %20, %18 : vector<1280x128xf32>
    %c0_13 = arith.constant 0 : index
    %c0_14 = arith.constant 0 : index
    %c0_15 = arith.constant 0 : index
    %22 = vector.load %arg6[%c0_13, %c0_14, %c0_15] : memref<1x1280x128xf32, #tpu.memory_space<vmem>>, vector<1x1280x128xf32>
    %23 = vector.shape_cast %22 : vector<1x1280x128xf32> to vector<1280x128xf32>
    %24 = vector.shape_cast %21 : vector<1280x128xf32> to vector<1x1280x128xf32>
    tpu.vector_store %arg6[%c0_13, %c0_14, %c0_15], %24 {strides = array<i32>} : memref<1x1280x128xf32, #tpu.memory_space<vmem>>, vector<1x1280x128xf32>,
    %c1_i32 = arith.constant 1 : i32
    %25 = arith.cmpi eq, %arg1, %c1_i32 : i32
    %26 = arith.extui %25 : i1 to i32
    %c0_i32_16 = arith.constant 0 : i32
    %27 = arith.cmpi ne, %26, %c0_i32_16 : i32
    scf.if %27 {
      %c0_17 = arith.constant 0 : index
      %c0_18 = arith.constant 0 : index
      %c0_19 = arith.constant 0 : index
      %28 = vector.load %arg6[%c0_17, %c0_18, %c0_19] : memref<1x1280x128xf32, #tpu.memory_space<vmem>>, vector<1x1280x128xf32>
      %cst_20 = arith.constant dense<0.000000e+00> : vector<1x1280xf32>
      %29 = vector.multi_reduction <add>, %28, %cst_20 [2] : vector<1x1280x128xf32> to vector<1x1280xf32>
      %30 = vector.shape_cast %29 : vector<1x1280xf32> to vector<1x1280x1xf32>
      %cst_21 = arith.constant 3.906250e-03 : f32
      %31 = vector.broadcast %cst_21 : f32 to vector<1x1280x1xf32>
      %32 = arith.mulf %30, %31 : vector<1x1280x1xf32>
      %c0_22 = arith.constant 0 : index
      %c0_23 = arith.constant 0 : index
      %c0_24 = arith.constant 0 : index
      %33 = vector.load %arg5[%c0_22, %c0_23, %c0_24] : memref<1x1280x1xf32, #tpu.memory_space<vmem>>, vector<1x1280x1xf32>
      tpu.vector_store %arg5[%c0_22, %c0_23, %c0_24], %32 {strides = array<i32>} : memref<1x1280x1xf32, #tpu.memory_space<vmem>>, vector<1x1280x1xf32>,
    } else {
    }
    return
  }
  func.func @transform_0(%arg0: i32, %arg1: i32) -> (i32, i32, i32) {
    %c0_i32 = arith.constant 0 : i32
    %c0_i32_0 = arith.constant 0 : i32
    return %arg0, %c0_i32, %arg1 : i32, i32, i32
  }
  func.func @transform_1(%arg0: i32, %arg1: i32) -> (i32, i32) {
    %c0_i32 = arith.constant 0 : i32
    %c0_i32_0 = arith.constant 0 : i32
    %c0_i32_1 = arith.constant 0 : i32
    return %c0_i32, %c0_i32_0 : i32, i32
  }
  func.func @transform_2(%arg0: i32, %arg1: i32) -> (i32, i32) {
    %c0_i32 = arith.constant 0 : i32
    %c0_i32_0 = arith.constant 0 : i32
    %c0_i32_1 = arith.constant 0 : i32
    return %c0_i32, %c0_i32_0 : i32, i32
  }
  func.func @transform_3(%arg0: i32, %arg1: i32) -> (i32, i32, i32) {
    %c0_i32 = arith.constant 0 : i32
    %c0_i32_0 = arith.constant 0 : i32
    %c0_i32_1 = arith.constant 0 : i32
    return %arg0, %c0_i32, %c0_i32_0 : i32, i32, i32
  }
}

</mosaic_0001>

<llo_original>
// kernel: tpu_custom_call.1
$region0: #{tpu_custom_call.1}
  #allocation0 [shape = 'u32[]', space=smem, size = 0x4, offset = 0x4, fixed_abs, tag = 'smem constant byte address 0x4 - core index']
  #allocation1 [shape = 'u32[72,128]{1,0:T(1,128)}', space=vmem, size = 0x9000, scoped, tag = 'internal scratch']
  #allocation2 [shape = 'f32[1,1280,128]{2,1,0:T(8,128)}', space=vmem, size = 0xa0000, scoped, tag = 'scratch operand']
  %s0 = inlined_call_operand.hbm [shape: f32[2,4,256], index: 0, kind: input, shape index: {}]
  %s1 = inlined_call_operand.vmem [shape: bf16[1280,4], index: 1, kind: input, shape index: {}]
  %s2 = inlined_call_operand.vmem [shape: f32[1280,1], index: 2, kind: input, shape index: {}]
  %s3 = inlined_call_operand.vmem [shape: f32[2,1280,1], index: 3, kind: output, shape index: {}]
  %s4 = sld [smem:[#allocation0]]
  $region57: #{tpu_custom_call.1} parent=0
    _
  %s6 = ssub.s32 1, %s4
  %s7 = scalar_select 0, %s6, %s4
  $region1: #{tpu_custom_call.1} parent=0
    #allocation3 [shape = 'u8[4096]{0}', space=vmem, size = 0x1000, scoped, tag = 'input window, operand 0']
    #allocation4 [shape = 's32[2]{0}', space=sflag, size = 0x8, scoped, tag = 'scoped memory for tpu_custom_call.1']
    %8 = vsyncpa [#allocation4], 0
    %s9 = scalar_lea.sflag [#allocation4], 1
    %10 = vsyncpa %s9, 0
    loop: start=0, step=1, limit=6
    $region2: #{tpu_custom_call.1} parent=1 // loop_pre_header
      _
    $region3: #{tpu_custom_call.1} parent=1 // loop_header
      %s12 = sphi 0, %s16
      %p13 = scmp.ge.s32.totalorder %s12, 6
      %s19 = sphi 0, %s31
      %s20 = sphi 0, %s27
      %s21 = sphi 0, %s19
      %s22 = sphi 0, %s20
      %s23 = sphi 0, %s21
      %s24 = sphi 0, %s22
      %s36 = sphi 0, %s38
      %s39 = sphi 0, %s36
      %s40 = sphi 0, %s39
      %s56 = sphi 0, %s40
      %s60 = sphi 0, %s60
      %s62 = sphi 0, %s60
      %s63 = sphi 0, %s62
      %s77 = sphi 0, %s63
      %s81 = sphi 0, %s81
      %s83 = sphi 0, %s81
      %s84 = sphi 0, %s83
      %s98 = sphi 0, %s84
      %s104 = sphi 0, %s106
      %s107 = sphi 0, %s104
      %s108 = sphi 0, %s107
      %s124 = sphi 0, %s108
    $region4: #{tpu_custom_call.1} parent=1 // loop_header_branch
      %15 = sbr.rel (%p13) target = $region8
    $region5: #{tpu_custom_call.1} parent=1 // loop_body
      %s17 = ssub.s32 %s12, 1
      %s18 = ssub.s32 %s12, 2
      %s25 = sadd.s32 1, %s20
      %p26 = scmp.ge.s32.totalorder %s25, 2
      %s27 = scalar_select %p26, 0, %s25
      %s28 = sadd.s32 1, %s19
      %s29 = scalar_select %p26, %s28, %s19
      %p30 = scmp.ge.s32.totalorder %s29, 2
      %s31 = scalar_select %p30, 0, %s29
      %s32 = ssub.s32 %s19, %s31
      %s33 = ssub.s32 %s20, %s27
      %s34 = sor.u32 %s32, %s33
      %p35 = scmp.eq.s32.totalorder %s34, 0
      %s37 = sadd.s32 %s36, 1
      %s38 = scalar_select %p35, %s36, %s37
      %p41 = pneg %p35
      %p42 = scmp.eq.s32.totalorder %s12, 3
      %p43 = por %p41, %p42
      %p44 = scmp.ne.s32.totalorder %s36, %s39
      %p45 = scmp.eq.s32.totalorder %s12, 0
      %p46 = por %p44, %p45
      %p47 = scmp.ne.s32.totalorder %s36, %s39
      %p48 = scmp.eq.s32.totalorder %s17, 3
      %p49 = por %p47, %p48
      %p50 = scmp.ne.s32.totalorder %s39, %s40
      %p51 = scmp.eq.s32.totalorder %s17, 0
      %p52 = por %p50, %p51
      %p53 = scmp.ne.s32.totalorder %s39, %s40
      %p54 = scmp.eq.s32.totalorder %s18, 3
      %p55 = por %p53, %p54
      %p57 = scmp.ne.s32.totalorder %s40, %s56
      %p58 = scmp.eq.s32.totalorder %s18, 0
      %p59 = por %p57, %p58
      %s61 = sadd.s32 %s60, 1
      %p64 = scmp.eq.s32.totalorder %s12, 3
      %p65 = scmp.ne.s32.totalorder %s60, %s62
      %p66 = scmp.eq.s32.totalorder %s12, 0
      %p67 = por %p65, %p66
      %p68 = scmp.ne.s32.totalorder %s60, %s62
      %p69 = scmp.eq.s32.totalorder %s17, 3
      %p70 = por %p68, %p69
      %p71 = scmp.ne.s32.totalorder %s62, %s63
      %p72 = scmp.eq.s32.totalorder %s17, 0
      %p73 = por %p71, %p72
      %p74 = scmp.ne.s32.totalorder %s62, %s63
      %p75 = scmp.eq.s32.totalorder %s18, 3
      %p76 = por %p74, %p75
      %p78 = scmp.ne.s32.totalorder %s63, %s77
      %p79 = scmp.eq.s32.totalorder %s18, 0
      %p80 = por %p78, %p79
      %s82 = sadd.s32 %s81, 1
      %p85 = scmp.eq.s32.totalorder %s12, 3
      %p86 = scmp.ne.s32.totalorder %s81, %s83
      %p87 = scmp.eq.s32.totalorder %s12, 0
      %p88 = por %p86, %p87
      %p89 = scmp.ne.s32.totalorder %s81, %s83
      %p90 = scmp.eq.s32.totalorder %s17, 3
      %p91 = por %p89, %p90
      %p92 = scmp.ne.s32.totalorder %s83, %s84
      %p93 = scmp.eq.s32.totalorder %s17, 0
      %p94 = por %p92, %p93
      %p95 = scmp.ne.s32.totalorder %s83, %s84
      %p96 = scmp.eq.s32.totalorder %s18, 3
      %p97 = por %p95, %p96
      %p99 = scmp.ne.s32.totalorder %s84, %s98
      %p100 = scmp.eq.s32.totalorder %s18, 0
      %p101 = por %p99, %p100
      %s102 = ssub.s32 %s19, %s31
      %p103 = scmp.eq.s32.totalorder %s102, 0
      %s105 = sadd.s32 %s104, 1
      %s106 = scalar_select %p103, %s104, %s105
      %p109 = pneg %p103
      %p110 = scmp.eq.s32.totalorder %s12, 3
      %p111 = por %p109, %p110
      %p112 = scmp.ne.s32.totalorder %s104, %s107
      %p113 = scmp.eq.s32.totalorder %s12, 0
      %p114 = por %p112, %p113
      %p115 = scmp.ne.s32.totalorder %s104, %s107
      %p116 = scmp.eq.s32.totalorder %s17, 3
      %p117 = por %p115, %p116
      %p118 = scmp.ne.s32.totalorder %s107, %s108
      %p119 = scmp.eq.s32.totalorder %s17, 0
      %p120 = por %p118, %p119
      %p121 = scmp.ne.s32.totalorder %s107, %s108
      %p122 = scmp.eq.s32.totalorder %s18, 3
      %p123 = por %p121, %p122
      %p125 = scmp.ne.s32.totalorder %s108, %s124
      %p126 = scmp.eq.s32.totalorder %s18, 0
      %p127 = por %p125, %p126
      %p128 = scmp.le.s32.totalorder 1, %s12
      %p129 = scmp.lt.s32.totalorder %s12, 5
      %p130 = pnand %p128, %p129
      %p131 = pneg %p130
      // Predicated region
      $region9: #{tpu_custom_call.1} parent=5 // pred_check
        _
      $region10: #{tpu_custom_call.1} parent=5 // pred_check_branch
        %133 = sbr.rel (%p130) target = $region12
      $region11: #{tpu_custom_call.1} parent=5 // pred_region
        %s134 = ssub.s32 %s12, 1
        // Predicated region
        $region13: #{tpu_custom_call.1} parent=11 // pred_check
          %p135 = pneg %p73
        $region14: #{tpu_custom_call.1} parent=11 // pred_check_branch
          %137 = sbr.rel (%p135) target = $region16
        $region15: #{tpu_custom_call.1} parent=11 // pred_region
          _
        $region16: #{tpu_custom_call.1} parent=11 // pred_fallthru
          _
        // Predicated region
        $region17: #{tpu_custom_call.1} parent=11 // pred_check
          %p138 = pneg %p94
        $region18: #{tpu_custom_call.1} parent=11 // pred_check_branch
          %140 = sbr.rel (%p138) target = $region20
        $region19: #{tpu_custom_call.1} parent=11 // pred_region
          _
        $region20: #{tpu_custom_call.1} parent=11 // pred_fallthru
          _
      $region12: #{tpu_custom_call.1} parent=5 // pred_fallthru
        _
      %p141 = scmp.lt.s32.totalorder %s12, 4
      // Predicated region
      $region21: #{tpu_custom_call.1} parent=5 // pred_check
        %p142 = pneg %p141
      $region22: #{tpu_custom_call.1} parent=5 // pred_check_branch
        %144 = sbr.rel (%p142) target = $region24
      $region23: #{tpu_custom_call.1} parent=5 // pred_region
        // Predicated region
        $region25: #{tpu_custom_call.1} parent=23 // pred_check
          %p145 = pneg %p46
        $region26: #{tpu_custom_call.1} parent=23 // pred_check_branch
          %147 = sbr.rel (%p145) target = $region28
        $region27: #{tpu_custom_call.1} parent=23 // pred_region
          %s148 = sand.u32 %s36, 1
          %s149 = scalar_lea.sflag [#allocation4], %s148
          %s150 = sand.u32 %s36, 1
          %s151 = smul.addr %s150, 4
          %s152 = scalar_lea.vmem [#allocation3], %s151
          %154 = vsyncadd %s149, 0
          %s155 = smul.addr %s19, 2
          %s156 = sadd.s32 %s20, %s155
          %s157 = smul.addr %s156, 4
          %s158 = scalar_lea.hbm %s0, %s157
          %s160 = sshll.u32 %s158, 4
          %s161 = int_to_ptr.hbm [resolvable:$true] %s160
          %s162 = sshll.u32 %s152, 4
          %s163 = int_to_ptr.vmem [resolvable:$true] %s162
          %165 = dma.hbm_to_vmem [thread:$0]  %s161, 64, %s163, %s149
        $region28: #{tpu_custom_call.1} parent=23 // pred_fallthru
          _
      $region24: #{tpu_custom_call.1} parent=5 // pred_fallthru
        _
      %p166 = scmp.le.s32.totalorder 1, %s12
      %p167 = scmp.lt.s32.totalorder %s12, 5
      %p168 = pnand %p166, %p167
      %p169 = pneg %p168
      // Predicated region
      $region29: #{tpu_custom_call.1} parent=5 // pred_check
        _
      $region30: #{tpu_custom_call.1} parent=5 // pred_check_branch
        %171 = sbr.rel (%p168) target = $region32
      $region31: #{tpu_custom_call.1} parent=5 // pred_region
        %s172 = ssub.s32 %s12, 1
        %s173 = sand.u32 %s39, 1
        %s174 = scalar_lea.sflag [#allocation4], %s173
        %s175 = sand.u32 %s39, 1
        %s176 = smul.addr %s175, 4
        %s177 = scalar_lea.vmem [#allocation3], %s176
        // Predicated region
        $region33: #{tpu_custom_call.1} parent=31 // pred_check
          %p178 = pneg %p52
        $region34: #{tpu_custom_call.1} parent=31 // pred_check_branch
          %180 = sbr.rel (%p178) target = $region36
        $region35: #{tpu_custom_call.1} parent=31 // pred_region
          %182 = dma.done %s174, 64
        $region36: #{tpu_custom_call.1} parent=31 // pred_fallthru
          _
        %s183 = sand.u32 %s39, 1
        %s184 = scalar_lea.sflag [#allocation4], %s183
        %s185 = sand.u32 %s39, 1
        %s186 = smul.addr %s185, 4
        %s187 = scalar_lea.vmem [#allocation3], %s186
        %p188 = pneg %p52
        %p189 = pneg %p49
        %p190 = pneg %p73
        %p191 = pneg %p70
        %p192 = pneg %p94
        %p193 = pneg %p91
        %p194 = pneg %p120
        %p195 = pneg %p117
        %p196 = scmp.lt.s32.totalorder %s21, 1
        %s197 = scalar_select %p196, %s21, 1
        %s198 = smul.addr %s197, 160
        %s199 = smul.addr %s198, 8
        %s200 = scalar_lea.vmem %s3, %s199
        %p201 = scmp.lt.s32.totalorder %s21, 1
        %s202 = scalar_select %p201, %s21, 1
        %s203 = smul.addr %s202, 160
        %s204 = smul.addr %s203, 8
        %s205 = scalar_lea.vmem %s3, %s204
        %p207 = scmp.eq.s32.totalorder %s22, 0
        // Predicated region
        $region37: #{tpu_custom_call.1} parent=31 // pred_check
          %p208 = pneg %p207
        $region38: #{tpu_custom_call.1} parent=31 // pred_check_branch
          %210 = sbr.rel (%p208) target = $region40
        $region39: #{tpu_custom_call.1} parent=31 // pred_region
          %211 = vst [vmem:[#allocation2] sm:$0xff] 0.0
          %212 = vst [vmem:[#allocation2 + $0x8] sm:$0xff] 0.0
          %213 = vst [vmem:[#allocation2 + $0x10] sm:$0xff] 0.0
          %214 = vst [vmem:[#allocation2 + $0x18] sm:$0xff] 0.0
          %215 = vst [vmem:[#allocation2 + $0x20] sm:$0xff] 0.0
          %216 = vst [vmem:[#allocation2 + $0x28] sm:$0xff] 0.0
          %217 = vst [vmem:[#allocation2 + $0x30] sm:$0xff] 0.0
          %218 = vst [vmem:[#allocation2 + $0x38] sm:$0xff] 0.0
          %219 = vst [vmem:[#allocation2 + $0x40] sm:$0xff] 0.0
          %220 = vst [vmem:[#allocation2 + $0x48] sm:$0xff] 0.0
          %221 = vst [vmem:[#allocation2 + $0x50] sm:$0xff] 0.0
          %222 = vst [vmem:[#allocation2 + $0x58] sm:$0xff] 0.0
          %223 = vst [vmem:[#allocation2 + $0x60] sm:$0xff] 0.0
          %224 = vst [vmem:[#allocation2 + $0x68] sm:$0xff] 0.0
          %225 = vst [vmem:[#allocation2 + $0x70] sm:$0xff] 0.0
          %226 = vst [vmem:[#allocation2 + $0x78] sm:$0xff] 0.0
          %227 = vst [vmem:[#allocation2 + $0x80] sm:$0xff] 0.0
          %228 = vst [vmem:[#allocation2 + $0x88] sm:$0xff] 0.0
          %229 = vst [vmem:[#allocation2 + $0x90] sm:$0xff] 0.0
          %230 = vst [vmem:[#allocation2 + $0x98] sm:$0xff] 0.0
          %231 = vst [vmem:[#allocation2 + $0xa0] sm:$0xff] 0.0
          %232 = vst [vmem:[#allocation2 + $0xa8] sm:$0xff] 0.0
          %233 = vst [vmem:[#allocation2 + $0xb0] sm:$0xff] 0.0
          %234 = vst [vmem:[#allocation2 + $0xb8] sm:$0xff] 0.0
          %235 = vst [vmem:[#allocation2 + $0xc0] sm:$0xff] 0.0
          %236 = vst [vmem:[#allocation2 + $0xc8] sm:$0xff] 0.0
          %237 = vst [vmem:[#allocation2 + $0xd0] sm:$0xff] 0.0
          %238 = vst [vmem:[#allocation2 + $0xd8] sm:$0xff] 0.0
          %239 = vst [vmem:[#allocation2 + $0xe0] sm:$0xff] 0.0
          %240 = vst [vmem:[#allocation2 + $0xe8] sm:$0xff] 0.0
          %241 = vst [vmem:[#allocation2 + $0xf0] sm:$0xff] 0.0
          %242 = vst [vmem:[#allocation2 + $0xf8] sm:$0xff] 0.0
          %243 = vst [vmem:[#allocation2 + $0x100] sm:$0xff] 0.0
          %244 = vst [vmem:[#allocation2 + $0x108] sm:$0xff] 0.0
          %245 = vst [vmem:[#allocation2 + $0x110] sm:$0xff] 0.0
          %246 = vst [vmem:[#allocation2 + $0x118] sm:$0xff] 0.0
          %247 = vst [vmem:[#allocation2 + $0x120] sm:$0xff] 0.0
          %248 = vst [vmem:[#allocation2 + $0x128] sm:$0xff] 0.0
          %249 = vst [vmem:[#allocation2 + $0x130] sm:$0xff] 0.0
          %250 = vst [vmem:[#allocation2 + $0x138] sm:$0xff] 0.0
          %251 = vst [vmem:[#allocation2 + $0x140] sm:$0xff] 0.0
          %252 = vst [vmem:[#allocation2 + $0x148] sm:$0xff] 0.0
          %253 = vst [vmem:[#allocation2 + $0x150] sm:$0xff] 0.0
          %254 = vst [vmem:[#allocation2 + $0x158] sm:$0xff] 0.0
          %255 = vst [vmem:[#allocation2 + $0x160] sm:$0xff] 0.0
          %256 = vst [vmem:[#allocation2 + $0x168] sm:$0xff] 0.0
          %257 = vst [vmem:[#allocation2 + $0x170] sm:$0xff] 0.0
          %258 = vst [vmem:[#allocation2 + $0x178] sm:$0xff] 0.0
          %259 = vst [vmem:[#allocation2 + $0x180] sm:$0xff] 0.0
          %260 = vst [vmem:[#allocation2 + $0x188] sm:$0xff] 0.0
          %261 = vst [vmem:[#allocation2 + $0x190] sm:$0xff] 0.0
          %262 = vst [vmem:[#allocation2 + $0x198] sm:$0xff] 0.0
          %263 = vst [vmem:[#allocation2 + $0x1a0] sm:$0xff] 0.0
          %264 = vst [vmem:[#allocation2 + $0x1a8] sm:$0xff] 0.0
          %265 = vst [vmem:[#allocation2 + $0x1b0] sm:$0xff] 0.0
          %266 = vst [vmem:[#allocation2 + $0x1b8] sm:$0xff] 0.0
          %267 = vst [vmem:[#allocation2 + $0x1c0] sm:$0xff] 0.0
          %268 = vst [vmem:[#allocation2 + $0x1c8] sm:$0xff] 0.0
          %269 = vst [vmem:[#allocation2 + $0x1d0] sm:$0xff] 0.0
          %270 = vst [vmem:[#allocation2 + $0x1d8] sm:$0xff] 0.0
          %271 = vst [vmem:[#allocation2 + $0x1e0] sm:$0xff] 0.0
          %272 = vst [vmem:[#allocation2 + $0x1e8] sm:$0xff] 0.0
          %273 = vst [vmem:[#allocation2 + $0x1f0] sm:$0xff] 0.0
          %274 = vst [vmem:[#allocation2 + $0x1f8] sm:$0xff] 0.0
          %275 = vst [vmem:[#allocation2 + $0x200] sm:$0xff] 0.0
          %276 = vst [vmem:[#allocation2 + $0x208] sm:$0xff] 0.0
          %277 = vst [vmem:[#allocation2 + $0x210] sm:$0xff] 0.0
          %278 = vst [vmem:[#allocation2 + $0x218] sm:$0xff] 0.0
          %279 = vst [vmem:[#allocation2 + $0x220] sm:$0xff] 0.0
          %280 = vst [vmem:[#allocation2 + $0x228] sm:$0xff] 0.0
          %281 = vst [vmem:[#allocation2 + $0x230] sm:$0xff] 0.0
          %282 = vst [vmem:[#allocation2 + $0x238] sm:$0xff] 0.0
          %283 = vst [vmem:[#allocation2 + $0x240] sm:$0xff] 0.0
          %284 = vst [vmem:[#allocation2 + $0x248] sm:$0xff] 0.0
          %285 = vst [vmem:[#allocation2 + $0x250] sm:$0xff] 0.0
          %286 = vst [vmem:[#allocation2 + $0x258] sm:$0xff] 0.0
          %287 = vst [vmem:[#allocation2 + $0x260] sm:$0xff] 0.0
          %288 = vst [vmem:[#allocation2 + $0x268] sm:$0xff] 0.0
          %289 = vst [vmem:[#allocation2 + $0x270] sm:$0xff] 0.0
          %290 = vst [vmem:[#allocation2 + $0x278] sm:$0xff] 0.0
          %291 = vst [vmem:[#allocation2 + $0x280] sm:$0xff] 0.0
          %292 = vst [vmem:[#allocation2 + $0x288] sm:$0xff] 0.0
          %293 = vst [vmem:[#allocation2 + $0x290] sm:$0xff] 0.0
          %294 = vst [vmem:[#allocation2 + $0x298] sm:$0xff] 0.0
          %295 = vst [vmem:[#allocation2 + $0x2a0] sm:$0xff] 0.0
          %296 = vst [vmem:[#allocation2 + $0x2a8] sm:$0xff] 0.0
          %297 = vst [vmem:[#allocation2 + $0x2b0] sm:$0xff] 0.0
          %298 = vst [vmem:[#allocation2 + $0x2b8] sm:$0xff] 0.0
          %299 = vst [vmem:[#allocation2 + $0x2c0] sm:$0xff] 0.0
          %300 = vst [vmem:[#allocation2 + $0x2c8] sm:$0xff] 0.0
          %301 = vst [vmem:[#allocation2 + $0x2d0] sm:$0xff] 0.0
          %302 = vst [vmem:[#allocation2 + $0x2d8] sm:$0xff] 0.0
          %303 = vst [vmem:[#allocation2 + $0x2e0] sm:$0xff] 0.0
          %304 = vst [vmem:[#allocation2 + $0x2e8] sm:$0xff] 0.0
          %305 = vst [vmem:[#allocation2 + $0x2f0] sm:$0xff] 0.0
          %306 = vst [vmem:[#allocation2 + $0x2f8] sm:$0xff] 0.0
          %307 = vst [vmem:[#allocation2 + $0x300] sm:$0xff] 0.0
          %308 = vst [vmem:[#allocation2 + $0x308] sm:$0xff] 0.0
          %309 = vst [vmem:[#allocation2 + $0x310] sm:$0xff] 0.0
          %310 = vst [vmem:[#allocation2 + $0x318] sm:$0xff] 0.0
          %311 = vst [vmem:[#allocation2 + $0x320] sm:$0xff] 0.0
          %312 = vst [vmem:[#allocation2 + $0x328] sm:$0xff] 0.0
          %313 = vst [vmem:[#allocation2 + $0x330] sm:$0xff] 0.0
          %314 = vst [vmem:[#allocation2 + $0x338] sm:$0xff] 0.0
          %315 = vst [vmem:[#allocation2 + $0x340] sm:$0xff] 0.0
          %316 = vst [vmem:[#allocation2 + $0x348] sm:$0xff] 0.0
          %317 = vst [vmem:[#allocation2 + $0x350] sm:$0xff] 0.0
          %318 = vst [vmem:[#allocation2 + $0x358] sm:$0xff] 0.0
          %319 = vst [vmem:[#allocation2 + $0x360] sm:$0xff] 0.0
          %320 = vst [vmem:[#allocation2 + $0x368] sm:$0xff] 0.0
          %321 = vst [vmem:[#allocation2 + $0x370] sm:$0xff] 0.0
          %322 = vst [vmem:[#allocation2 + $0x378] sm:$0xff] 0.0
          %323 = vst [vmem:[#allocation2 + $0x380] sm:$0xff] 0.0
          %324 = vst [vmem:[#allocation2 + $0x388] sm:$0xff] 0.0
          %325 = vst [vmem:[#allocation2 + $0x390] sm:$0xff] 0.0
          %326 = vst [vmem:[#allocation2 + $0x398] sm:$0xff] 0.0
          %327 = vst [vmem:[#allocation2 + $0x3a0] sm:$0xff] 0.0
          %328 = vst [vmem:[#allocation2 + $0x3a8] sm:$0xff] 0.0
          %329 = vst [vmem:[#allocation2 + $0x3b0] sm:$0xff] 0.0
          %330 = vst [vmem:[#allocation2 + $0x3b8] sm:$0xff] 0.0
          %331 = vst [vmem:[#allocation2 + $0x3c0] sm:$0xff] 0.0
          %332 = vst [vmem:[#allocation2 + $0x3c8] sm:$0xff] 0.0
          %333 = vst [vmem:[#allocation2 + $0x3d0] sm:$0xff] 0.0
          %334 = vst [vmem:[#allocation2 + $0x3d8] sm:$0xff] 0.0
          %335 = vst [vmem:[#allocation2 + $0x3e0] sm:$0xff] 0.0
          %336 = vst [vmem:[#allocation2 + $0x3e8] sm:$0xff] 0.0
          %337 = vst [vmem:[#allocation2 + $0x3f0] sm:$0xff] 0.0
          %338 = vst [vmem:[#allocation2 + $0x3f8] sm:$0xff] 0.0
          %339 = vst [vmem:[#allocation2 + $0x400] sm:$0xff] 0.0
          %340 = vst [vmem:[#allocation2 + $0x408] sm:$0xff] 0.0
          %341 = vst [vmem:[#allocation2 + $0x410] sm:$0xff] 0.0
          %342 = vst [vmem:[#allocation2 + $0x418] sm:$0xff] 0.0
          %343 = vst [vmem:[#allocation2 + $0x420] sm:$0xff] 0.0
          %344 = vst [vmem:[#allocation2 + $0x428] sm:$0xff] 0.0
          %345 = vst [vmem:[#allocation2 + $0x430] sm:$0xff] 0.0
          %346 = vst [vmem:[#allocation2 + $0x438] sm:$0xff] 0.0
          %347 = vst [vmem:[#allocation2 + $0x440] sm:$0xff] 0.0
          %348 = vst [vmem:[#allocation2 + $0x448] sm:$0xff] 0.0
          %349 = vst [vmem:[#allocation2 + $0x450] sm:$0xff] 0.0
          %350 = vst [vmem:[#allocation2 + $0x458] sm:$0xff] 0.0
          %351 = vst [vmem:[#allocation2 + $0x460] sm:$0xff] 0.0
          %352 = vst [vmem:[#allocation2 + $0x468] sm:$0xff] 0.0
          %353 = vst [vmem:[#allocation2 + $0x470] sm:$0xff] 0.0
          %354 = vst [vmem:[#allocation2 + $0x478] sm:$0xff] 0.0
          %355 = vst [vmem:[#allocation2 + $0x480] sm:$0xff] 0.0
          %356 = vst [vmem:[#allocation2 + $0x488] sm:$0xff] 0.0
          %357 = vst [vmem:[#allocation2 + $0x490] sm:$0xff] 0.0
          %358 = vst [vmem:[#allocation2 + $0x498] sm:$0xff] 0.0
          %359 = vst [vmem:[#allocation2 + $0x4a0] sm:$0xff] 0.0
          %360 = vst [vmem:[#allocation2 + $0x4a8] sm:$0xff] 0.0
          %361 = vst [vmem:[#allocation2 + $0x4b0] sm:$0xff] 0.0
          %362 = vst [vmem:[#allocation2 + $0x4b8] sm:$0xff] 0.0
          %363 = vst [vmem:[#allocation2 + $0x4c0] sm:$0xff] 0.0
          %364 = vst [vmem:[#allocation2 + $0x4c8] sm:$0xff] 0.0
          %365 = vst [vmem:[#allocation2 + $0x4d0] sm:$0xff] 0.0
          %366 = vst [vmem:[#allocation2 + $0x4d8] sm:$0xff] 0.0
          %367 = vst [vmem:[#allocation2 + $0x4e0] sm:$0xff] 0.0
          %368 = vst [vmem:[#allocation2 + $0x4e8] sm:$0xff] 0.0
          %369 = vst [vmem:[#allocation2 + $0x4f0] sm:$0xff] 0.0
          %370 = vst [vmem:[#allocation2 + $0x4f8] sm:$0xff] 0.0
        $region40: #{tpu_custom_call.1} parent=31 // pred_fallthru
          _
        %v371 = vld [vmem:[%s1] sm:$0xf]
        %v372 = vld [vmem:[%s1 + $0x4] sm:$0xf]
        %v373 = vld [vmem:[%s1 + $0x8] sm:$0xf]
        %v374 = vld [vmem:[%s1 + $0xc] sm:$0xf]
        %v375 = vld [vmem:[%s1 + $0x10] sm:$0xf]
        %v376 = vld [vmem:[%s1 + $0x14] sm:$0xf]
        %v377 = vld [vmem:[%s1 + $0x18] sm:$0xf]
        %v378 = vld [vmem:[%s1 + $0x1c] sm:$0xf]
        %v379 = vld [vmem:[%s1 + $0x20] sm:$0xf]
        %v380 = vld [vmem:[%s1 + $0x24] sm:$0xf]
        %v381 = vld [vmem:[%s1 + $0x28] sm:$0xf]
        %v382 = vld [vmem:[%s1 + $0x2c] sm:$0xf]
        %v383 = vld [vmem:[%s1 + $0x30] sm:$0xf]
        %v384 = vld [vmem:[%s1 + $0x34] sm:$0xf]
        %v385 = vld [vmem:[%s1 + $0x38] sm:$0xf]
        %v386 = vld [vmem:[%s1 + $0x3c] sm:$0xf]
        %v387 = vld [vmem:[%s1 + $0x40] sm:$0xf]
        %v388 = vld [vmem:[%s1 + $0x44] sm:$0xf]
        %v389 = vld [vmem:[%s1 + $0x48] sm:$0xf]
        %v390 = vld [vmem:[%s1 + $0x4c] sm:$0xf]
        %v391 = vld [vmem:[%s1 + $0x50] sm:$0xf]
        %v392 = vld [vmem:[%s1 + $0x54] sm:$0xf]
        %v393 = vld [vmem:[%s1 + $0x58] sm:$0xf]
        %v394 = vld [vmem:[%s1 + $0x5c] sm:$0xf]
        %v395 = vld [vmem:[%s1 + $0x60] sm:$0xf]
        %v396 = vld [vmem:[%s1 + $0x64] sm:$0xf]
        %v397 = vld [vmem:[%s1 + $0x68] sm:$0xf]
        %v398 = vld [vmem:[%s1 + $0x6c] sm:$0xf]
        %v399 = vld [vmem:[%s1 + $0x70] sm:$0xf]
        %v400 = vld [vmem:[%s1 + $0x74] sm:$0xf]
        %v401 = vld [vmem:[%s1 + $0x78] sm:$0xf]
        %v402 = vld [vmem:[%s1 + $0x7c] sm:$0xf]
        %v403 = vld [vmem:[%s1 + $0x80] sm:$0xf]
        %v404 = vld [vmem:[%s1 + $0x84] sm:$0xf]
        %v405 = vld [vmem:[%s1 + $0x88] sm:$0xf]
        %v406 = vld [vmem:[%s1 + $0x8c] sm:$0xf]
        %v407 = vld [vmem:[%s1 + $0x90] sm:$0xf]
        %v408 = vld [vmem:[%s1 + $0x94] sm:$0xf]
        %v409 = vld [vmem:[%s1 + $0x98] sm:$0xf]
        %v410 = vld [vmem:[%s1 + $0x9c] sm:$0xf]
        %v411 = vld [vmem:[%s1 + $0xa0] sm:$0xf]
        %v412 = vld [vmem:[%s1 + $0xa4] sm:$0xf]
        %v413 = vld [vmem:[%s1 + $0xa8] sm:$0xf]
        %v414 = vld [vmem:[%s1 + $0xac] sm:$0xf]
        %v415 = vld [vmem:[%s1 + $0xb0] sm:$0xf]
        %v416 = vld [vmem:[%s1 + $0xb4] sm:$0xf]
        %v417 = vld [vmem:[%s1 + $0xb8] sm:$0xf]
        %v418 = vld [vmem:[%s1 + $0xbc] sm:$0xf]
        %v419 = vld [vmem:[%s1 + $0xc0] sm:$0xf]
        %v420 = vld [vmem:[%s1 + $0xc4] sm:$0xf]
        %v421 = vld [vmem:[%s1 + $0xc8] sm:$0xf]
        %v422 = vld [vmem:[%s1 + $0xcc] sm:$0xf]
        %v423 = vld [vmem:[%s1 + $0xd0] sm:$0xf]
        %v424 = vld [vmem:[%s1 + $0xd4] sm:$0xf]
        %v425 = vld [vmem:[%s1 + $0xd8] sm:$0xf]
        %v426 = vld [vmem:[%s1 + $0xdc] sm:$0xf]
        %v427 = vld [vmem:[%s1 + $0xe0] sm:$0xf]
        %v428 = vld [vmem:[%s1 + $0xe4] sm:$0xf]
        %v429 = vld [vmem:[%s1 + $0xe8] sm:$0xf]
        %v430 = vld [vmem:[%s1 + $0xec] sm:$0xf]
        %v431 = vld [vmem:[%s1 + $0xf0] sm:$0xf]
        %v432 = vld [vmem:[%s1 + $0xf4] sm:$0xf]
        %v433 = vld [vmem:[%s1 + $0xf8] sm:$0xf]
        %v434 = vld [vmem:[%s1 + $0xfc] sm:$0xf]
        %v435 = vld [vmem:[%s1 + $0x100] sm:$0xf]
        %v436 = vld [vmem:[%s1 + $0x104] sm:$0xf]
        %v437 = vld [vmem:[%s1 + $0x108] sm:$0xf]
        %v438 = vld [vmem:[%s1 + $0x10c] sm:$0xf]
        %v439 = vld [vmem:[%s1 + $0x110] sm:$0xf]
        %v440 = vld [vmem:[%s1 + $0x114] sm:$0xf]
        %v441 = vld [vmem:[%s1 + $0x118] sm:$0xf]
        %v442 = vld [vmem:[%s1 + $0x11c] sm:$0xf]
        %v443 = vld [vmem:[%s1 + $0x120] sm:$0xf]
        %v444 = vld [vmem:[%s1 + $0x124] sm:$0xf]
        %v445 = vld [vmem:[%s1 + $0x128] sm:$0xf]
        %v446 = vld [vmem:[%s1 + $0x12c] sm:$0xf]
        %v447 = vld [vmem:[%s1 + $0x130] sm:$0xf]
        %v448 = vld [vmem:[%s1 + $0x134] sm:$0xf]
        %v449 = vld [vmem:[%s1 + $0x138] sm:$0xf]
        %v450 = vld [vmem:[%s1 + $0x13c] sm:$0xf]
        %v451 = vld [vmem:[%s1 + $0x140] sm:$0xf]
        %v452 = vld [vmem:[%s1 + $0x144] sm:$0xf]
        %v453 = vld [vmem:[%s1 + $0x148] sm:$0xf]
        %v454 = vld [vmem:[%s1 + $0x14c] sm:$0xf]
        %v455 = vld [vmem:[%s1 + $0x150] sm:$0xf]
        %v456 = vld [vmem:[%s1 + $0x154] sm:$0xf]
        %v457 = vld [vmem:[%s1 + $0x158] sm:$0xf]
        %v458 = vld [vmem:[%s1 + $0x15c] sm:$0xf]
        %v459 = vld [vmem:[%s1 + $0x160] sm:$0xf]
        %v460 = vld [vmem:[%s1 + $0x164] sm:$0xf]
        %v461 = vld [vmem:[%s1 + $0x168] sm:$0xf]
        %v462 = vld [vmem:[%s1 + $0x16c] sm:$0xf]
        %v463 = vld [vmem:[%s1 + $0x170] sm:$0xf]
        %v464 = vld [vmem:[%s1 + $0x174] sm:$0xf]
        %v465 = vld [vmem:[%s1 + $0x178] sm:$0xf]
        %v466 = vld [vmem:[%s1 + $0x17c] sm:$0xf]
        %v467 = vld [vmem:[%s1 + $0x180] sm:$0xf]
        %v468 = vld [vmem:[%s1 + $0x184] sm:$0xf]
        %v469 = vld [vmem:[%s1 + $0x188] sm:$0xf]
        %v470 = vld [vmem:[%s1 + $0x18c] sm:$0xf]
        %v471 = vld [vmem:[%s1 + $0x190] sm:$0xf]
        %v472 = vld [vmem:[%s1 + $0x194] sm:$0xf]
        %v473 = vld [vmem:[%s1 + $0x198] sm:$0xf]
        %v474 = vld [vmem:[%s1 + $0x19c] sm:$0xf]
        %v475 = vld [vmem:[%s1 + $0x1a0] sm:$0xf]
        %v476 = vld [vmem:[%s1 + $0x1a4] sm:$0xf]
        %v477 = vld [vmem:[%s1 + $0x1a8] sm:$0xf]
        %v478 = vld [vmem:[%s1 + $0x1ac] sm:$0xf]
        %v479 = vld [vmem:[%s1 + $0x1b0] sm:$0xf]
        %v480 = vld [vmem:[%s1 + $0x1b4] sm:$0xf]
        %v481 = vld [vmem:[%s1 + $0x1b8] sm:$0xf]
        %v482 = vld [vmem:[%s1 + $0x1bc] sm:$0xf]
        %v483 = vld [vmem:[%s1 + $0x1c0] sm:$0xf]
        %v484 = vld [vmem:[%s1 + $0x1c4] sm:$0xf]
        %v485 = vld [vmem:[%s1 + $0x1c8] sm:$0xf]
        %v486 = vld [vmem:[%s1 + $0x1cc] sm:$0xf]
        %v487 = vld [vmem:[%s1 + $0x1d0] sm:$0xf]
        %v488 = vld [vmem:[%s1 + $0x1d4] sm:$0xf]
        %v489 = vld [vmem:[%s1 + $0x1d8] sm:$0xf]
        %v490 = vld [vmem:[%s1 + $0x1dc] sm:$0xf]
        %v491 = vld [vmem:[%s1 + $0x1e0] sm:$0xf]
        %v492 = vld [vmem:[%s1 + $0x1e4] sm:$0xf]
        %v493 = vld [vmem:[%s1 + $0x1e8] sm:$0xf]
        %v494 = vld [vmem:[%s1 + $0x1ec] sm:$0xf]
        %v495 = vld [vmem:[%s1 + $0x1f0] sm:$0xf]
        %v496 = vld [vmem:[%s1 + $0x1f4] sm:$0xf]
        %v497 = vld [vmem:[%s1 + $0x1f8] sm:$0xf]
        %v498 = vld [vmem:[%s1 + $0x1fc] sm:$0xf]
        %v499 = vld [vmem:[%s1 + $0x200] sm:$0xf]
        %v500 = vld [vmem:[%s1 + $0x204] sm:$0xf]
        %v501 = vld [vmem:[%s1 + $0x208] sm:$0xf]
        %v502 = vld [vmem:[%s1 + $0x20c] sm:$0xf]
        %v503 = vld [vmem:[%s1 + $0x210] sm:$0xf]
        %v504 = vld [vmem:[%s1 + $0x214] sm:$0xf]
        %v505 = vld [vmem:[%s1 + $0x218] sm:$0xf]
        %v506 = vld [vmem:[%s1 + $0x21c] sm:$0xf]
        %v507 = vld [vmem:[%s1 + $0x220] sm:$0xf]
        %v508 = vld [vmem:[%s1 + $0x224] sm:$0xf]
        %v509 = vld [vmem:[%s1 + $0x228] sm:$0xf]
        %v510 = vld [vmem:[%s1 + $0x22c] sm:$0xf]
        %v511 = vld [vmem:[%s1 + $0x230] sm:$0xf]
        %v512 = vld [vmem:[%s1 + $0x234] sm:$0xf]
        %v513 = vld [vmem:[%s1 + $0x238] sm:$0xf]
        %v514 = vld [vmem:[%s1 + $0x23c] sm:$0xf]
        %v515 = vld [vmem:[%s1 + $0x240] sm:$0xf]
        %v516 = vld [vmem:[%s1 + $0x244] sm:$0xf]
        %v517 = vld [vmem:[%s1 + $0x248] sm:$0xf]
        %v518 = vld [vmem:[%s1 + $0x24c] sm:$0xf]
        %v519 = vld [vmem:[%s1 + $0x250] sm:$0xf]
        %v520 = vld [vmem:[%s1 + $0x254] sm:$0xf]
        %v521 = vld [vmem:[%s1 + $0x258] sm:$0xf]
        %v522 = vld [vmem:[%s1 + $0x25c] sm:$0xf]
        %v523 = vld [vmem:[%s1 + $0x260] sm:$0xf]
        %v524 = vld [vmem:[%s1 + $0x264] sm:$0xf]
        %v525 = vld [vmem:[%s1 + $0x268] sm:$0xf]
        %v526 = vld [vmem:[%s1 + $0x26c] sm:$0xf]
        %v527 = vld [vmem:[%s1 + $0x270] sm:$0xf]
        %v528 = vld [vmem:[%s1 + $0x274] sm:$0xf]
        %v529 = vld [vmem:[%s1 + $0x278] sm:$0xf]
        %v530 = vld [vmem:[%s1 + $0x27c] sm:$0xf]
        %v531 = vld [vmem:[%s2] sm:$0xff]
        %v532 = vld [vmem:[%s2 + $0x8] sm:$0xff]
        %v533 = vld [vmem:[%s2 + $0x10] sm:$0xff]
        %v534 = vld [vmem:[%s2 + $0x18] sm:$0xff]
        %v535 = vld [vmem:[%s2 + $0x20] sm:$0xff]
        %v536 = vld [vmem:[%s2 + $0x28] sm:$0xff]
        %v537 = vld [vmem:[%s2 + $0x30] sm:$0xff]
        %v538 = vld [vmem:[%s2 + $0x38] sm:$0xff]
        %v539 = vld [vmem:[%s2 + $0x40] sm:$0xff]
        %v540 = vld [vmem:[%s2 + $0x48] sm:$0xff]
        %v541 = vld [vmem:[%s2 + $0x50] sm:$0xff]
        %v542 = vld [vmem:[%s2 + $0x58] sm:$0xff]
        %v543 = vld [vmem:[%s2 + $0x60] sm:$0xff]
        %v544 = vld [vmem:[%s2 + $0x68] sm:$0xff]
        %v545 = vld [vmem:[%s2 + $0x70] sm:$0xff]
        %v546 = vld [vmem:[%s2 + $0x78] sm:$0xff]
        %v547 = vld [vmem:[%s2 + $0x80] sm:$0xff]
        %v548 = vld [vmem:[%s2 + $0x88] sm:$0xff]
        %v549 = vld [vmem:[%s2 + $0x90] sm:$0xff]
        %v550 = vld [vmem:[%s2 + $0x98] sm:$0xff]
        %v551 = vld [vmem:[%s2 + $0xa0] sm:$0xff]
        %v552 = vld [vmem:[%s2 + $0xa8] sm:$0xff]
        %v553 = vld [vmem:[%s2 + $0xb0] sm:$0xff]
        %v554 = vld [vmem:[%s2 + $0xb8] sm:$0xff]
        %v555 = vld [vmem:[%s2 + $0xc0] sm:$0xff]
        %v556 = vld [vmem:[%s2 + $0xc8] sm:$0xff]
        %v557 = vld [vmem:[%s2 + $0xd0] sm:$0xff]
        %v558 = vld [vmem:[%s2 + $0xd8] sm:$0xff]
        %v559 = vld [vmem:[%s2 + $0xe0] sm:$0xff]
        %v560 = vld [vmem:[%s2 + $0xe8] sm:$0xff]
        %v561 = vld [vmem:[%s2 + $0xf0] sm:$0xff]
        %v562 = vld [vmem:[%s2 + $0xf8] sm:$0xff]
        %v563 = vld [vmem:[%s2 + $0x100] sm:$0xff]
        %v564 = vld [vmem:[%s2 + $0x108] sm:$0xff]
        %v565 = vld [vmem:[%s2 + $0x110] sm:$0xff]
        %v566 = vld [vmem:[%s2 + $0x118] sm:$0xff]
        %v567 = vld [vmem:[%s2 + $0x120] sm:$0xff]
        %v568 = vld [vmem:[%s2 + $0x128] sm:$0xff]
        %v569 = vld [vmem:[%s2 + $0x130] sm:$0xff]
        %v570 = vld [vmem:[%s2 + $0x138] sm:$0xff]
        %v571 = vld [vmem:[%s2 + $0x140] sm:$0xff]
        %v572 = vld [vmem:[%s2 + $0x148] sm:$0xff]
        %v573 = vld [vmem:[%s2 + $0x150] sm:$0xff]
        %v574 = vld [vmem:[%s2 + $0x158] sm:$0xff]
        %v575 = vld [vmem:[%s2 + $0x160] sm:$0xff]
        %v576 = vld [vmem:[%s2 + $0x168] sm:$0xff]
        %v577 = vld [vmem:[%s2 + $0x170] sm:$0xff]
        %v578 = vld [vmem:[%s2 + $0x178] sm:$0xff]
        %v579 = vld [vmem:[%s2 + $0x180] sm:$0xff]
        %v580 = vld [vmem:[%s2 + $0x188] sm:$0xff]
        %v581 = vld [vmem:[%s2 + $0x190] sm:$0xff]
        %v582 = vld [vmem:[%s2 + $0x198] sm:$0xff]
        %v583 = vld [vmem:[%s2 + $0x1a0] sm:$0xff]
        %v584 = vld [vmem:[%s2 + $0x1a8] sm:$0xff]
        %v585 = vld [vmem:[%s2 + $0x1b0] sm:$0xff]
        %v586 = vld [vmem:[%s2 + $0x1b8] sm:$0xff]
        %v587 = vld [vmem:[%s2 + $0x1c0] sm:$0xff]
        %v588 = vld [vmem:[%s2 + $0x1c8] sm:$0xff]
        %v589 = vld [vmem:[%s2 + $0x1d0] sm:$0xff]
        %v590 = vld [vmem:[%s2 + $0x1d8] sm:$0xff]
        %v591 = vld [vmem:[%s2 + $0x1e0] sm:$0xff]
        %v592 = vld [vmem:[%s2 + $0x1e8] sm:$0xff]
        %v593 = vld [vmem:[%s2 + $0x1f0] sm:$0xff]
        %v594 = vld [vmem:[%s2 + $0x1f8] sm:$0xff]
        %v595 = vld [vmem:[%s2 + $0x200] sm:$0xff]
        %v596 = vld [vmem:[%s2 + $0x208] sm:$0xff]
        %v597 = vld [vmem:[%s2 + $0x210] sm:$0xff]
        %v598 = vld [vmem:[%s2 + $0x218] sm:$0xff]
        %v599 = vld [vmem:[%s2 + $0x220] sm:$0xff]
        %v600 = vld [vmem:[%s2 + $0x228] sm:$0xff]
        %v601 = vld [vmem:[%s2 + $0x230] sm:$0xff]
        %v602 = vld [vmem:[%s2 + $0x238] sm:$0xff]
        %v603 = vld [vmem:[%s2 + $0x240] sm:$0xff]
        %v604 = vld [vmem:[%s2 + $0x248] sm:$0xff]
        %v605 = vld [vmem:[%s2 + $0x250] sm:$0xff]
        %v606 = vld [vmem:[%s2 + $0x258] sm:$0xff]
        %v607 = vld [vmem:[%s2 + $0x260] sm:$0xff]
        %v608 = vld [vmem:[%s2 + $0x268] sm:$0xff]
        %v609 = vld [vmem:[%s2 + $0x270] sm:$0xff]
        %v610 = vld [vmem:[%s2 + $0x278] sm:$0xff]
        %v611 = vld [vmem:[%s2 + $0x280] sm:$0xff]
        %v612 = vld [vmem:[%s2 + $0x288] sm:$0xff]
        %v613 = vld [vmem:[%s2 + $0x290] sm:$0xff]
        %v614 = vld [vmem:[%s2 + $0x298] sm:$0xff]
        %v615 = vld [vmem:[%s2 + $0x2a0] sm:$0xff]
        %v616 = vld [vmem:[%s2 + $0x2a8] sm:$0xff]
        %v617 = vld [vmem:[%s2 + $0x2b0] sm:$0xff]
        %v618 = vld [vmem:[%s2 + $0x2b8] sm:$0xff]
        %v619 = vld [vmem:[%s2 + $0x2c0] sm:$0xff]
        %v620 = vld [vmem:[%s2 + $0x2c8] sm:$0xff]
        %v621 = vld [vmem:[%s2 + $0x2d0] sm:$0xff]
        %v622 = vld [vmem:[%s2 + $0x2d8] sm:$0xff]
        %v623 = vld [vmem:[%s2 + $0x2e0] sm:$0xff]
        %v624 = vld [vmem:[%s2 + $0x2e8] sm:$0xff]
        %v625 = vld [vmem:[%s2 + $0x2f0] sm:$0xff]
        %v626 = vld [vmem:[%s2 + $0x2f8] sm:$0xff]
        %v627 = vld [vmem:[%s2 + $0x300] sm:$0xff]
        %v628 = vld [vmem:[%s2 + $0x308] sm:$0xff]
        %v629 = vld [vmem:[%s2 + $0x310] sm:$0xff]
        %v630 = vld [vmem:[%s2 + $0x318] sm:$0xff]
        %v631 = vld [vmem:[%s2 + $0x320] sm:$0xff]
        %v632 = vld [vmem:[%s2 + $0x328] sm:$0xff]
        %v633 = vld [vmem:[%s2 + $0x330] sm:$0xff]
        %v634 = vld [vmem:[%s2 + $0x338] sm:$0xff]
        %v635 = vld [vmem:[%s2 + $0x340] sm:$0xff]
        %v636 = vld [vmem:[%s2 + $0x348] sm:$0xff]
        %v637 = vld [vmem:[%s2 + $0x350] sm:$0xff]
        %v638 = vld [vmem:[%s2 + $0x358] sm:$0xff]
        %v639 = vld [vmem:[%s2 + $0x360] sm:$0xff]
        %v640 = vld [vmem:[%s2 + $0x368] sm:$0xff]
        %v641 = vld [vmem:[%s2 + $0x370] sm:$0xff]
        %v642 = vld [vmem:[%s2 + $0x378] sm:$0xff]
        %v643 = vld [vmem:[%s2 + $0x380] sm:$0xff]
        %v644 = vld [vmem:[%s2 + $0x388] sm:$0xff]
        %v645 = vld [vmem:[%s2 + $0x390] sm:$0xff]
        %v646 = vld [vmem:[%s2 + $0x398] sm:$0xff]
        %v647 = vld [vmem:[%s2 + $0x3a0] sm:$0xff]
        %v648 = vld [vmem:[%s2 + $0x3a8] sm:$0xff]
        %v649 = vld [vmem:[%s2 + $0x3b0] sm:$0xff]
        %v650 = vld [vmem:[%s2 + $0x3b8] sm:$0xff]
        %v651 = vld [vmem:[%s2 + $0x3c0] sm:$0xff]
        %v652 = vld [vmem:[%s2 + $0x3c8] sm:$0xff]
        %v653 = vld [vmem:[%s2 + $0x3d0] sm:$0xff]
        %v654 = vld [vmem:[%s2 + $0x3d8] sm:$0xff]
        %v655 = vld [vmem:[%s2 + $0x3e0] sm:$0xff]
        %v656 = vld [vmem:[%s2 + $0x3e8] sm:$0xff]
        %v657 = vld [vmem:[%s2 + $0x3f0] sm:$0xff]
        %v658 = vld [vmem:[%s2 + $0x3f8] sm:$0xff]
        %v659 = vld [vmem:[%s2 + $0x400] sm:$0xff]
        %v660 = vld [vmem:[%s2 + $0x408] sm:$0xff]
        %v661 = vld [vmem:[%s2 + $0x410] sm:$0xff]
        %v662 = vld [vmem:[%s2 + $0x418] sm:$0xff]
        %v663 = vld [vmem:[%s2 + $0x420] sm:$0xff]
        %v664 = vld [vmem:[%s2 + $0x428] sm:$0xff]
        %v665 = vld [vmem:[%s2 + $0x430] sm:$0xff]
        %v666 = vld [vmem:[%s2 + $0x438] sm:$0xff]
        %v667 = vld [vmem:[%s2 + $0x440] sm:$0xff]
        %v668 = vld [vmem:[%s2 + $0x448] sm:$0xff]
        %v669 = vld [vmem:[%s2 + $0x450] sm:$0xff]
        %v670 = vld [vmem:[%s2 + $0x458] sm:$0xff]
        %v671 = vld [vmem:[%s2 + $0x460] sm:$0xff]
        %v672 = vld [vmem:[%s2 + $0x468] sm:$0xff]
        %v673 = vld [vmem:[%s2 + $0x470] sm:$0xff]
        %v674 = vld [vmem:[%s2 + $0x478] sm:$0xff]
        %v675 = vld [vmem:[%s2 + $0x480] sm:$0xff]
        %v676 = vld [vmem:[%s2 + $0x488] sm:$0xff]
        %v677 = vld [vmem:[%s2 + $0x490] sm:$0xff]
        %v678 = vld [vmem:[%s2 + $0x498] sm:$0xff]
        %v679 = vld [vmem:[%s2 + $0x4a0] sm:$0xff]
        %v680 = vld [vmem:[%s2 + $0x4a8] sm:$0xff]
        %v681 = vld [vmem:[%s2 + $0x4b0] sm:$0xff]
        %v682 = vld [vmem:[%s2 + $0x4b8] sm:$0xff]
        %v683 = vld [vmem:[%s2 + $0x4c0] sm:$0xff]
        %v684 = vld [vmem:[%s2 + $0x4c8] sm:$0xff]
        %v685 = vld [vmem:[%s2 + $0x4d0] sm:$0xff]
        %v686 = vld [vmem:[%s2 + $0x4d8] sm:$0xff]
        %v687 = vld [vmem:[%s2 + $0x4e0] sm:$0xff]
        %v688 = vld [vmem:[%s2 + $0x4e8] sm:$0xff]
        %v689 = vld [vmem:[%s2 + $0x4f0] sm:$0xff]
        %v690 = vld [vmem:[%s2 + $0x4f8] sm:$0xff]
        %v691 = vld [vmem:[%s177] sm:$0xf]
        %v692 = vpack.c.bf16 %v691, %v691
        %694 = vset.pattern.permute.xlu0 0
        %695 = vperm.xlu0 %694, %v531
        %v696 = vpop.permute.xlu0 %695
        %699 = vset.pattern.permute.xlu0 0
        %700 = vperm.xlu0 %699, %v532
        %v701 = vpop.permute.xlu0 %700
        %704 = vset.pattern.permute.xlu0 0
        %705 = vperm.xlu0 %704, %v533
        %v706 = vpop.permute.xlu0 %705
        %709 = vset.pattern.permute.xlu0 0
        %710 = vperm.xlu0 %709, %v534
        %v711 = vpop.permute.xlu0 %710
        %714 = vset.pattern.permute.xlu0 0
        %715 = vperm.xlu0 %714, %v535
        %v716 = vpop.permute.xlu0 %715
        %719 = vset.pattern.permute.xlu0 0
        %720 = vperm.xlu0 %719, %v536
        %v721 = vpop.permute.xlu0 %720
        %724 = vset.pattern.permute.xlu0 0
        %725 = vperm.xlu0 %724, %v537
        %v726 = vpop.permute.xlu0 %725
        %729 = vset.pattern.permute.xlu0 0
        %730 = vperm.xlu0 %729, %v538
        %v731 = vpop.permute.xlu0 %730
        %734 = vset.pattern.permute.xlu0 0
        %735 = vperm.xlu0 %734, %v539
        %v736 = vpop.permute.xlu0 %735
        %739 = vset.pattern.permute.xlu0 0
        %740 = vperm.xlu0 %739, %v540
        %v741 = vpop.permute.xlu0 %740
        %744 = vset.pattern.permute.xlu0 0
        %745 = vperm.xlu0 %744, %v541
        %v746 = vpop.permute.xlu0 %745
        %749 = vset.pattern.permute.xlu0 0
        %750 = vperm.xlu0 %749, %v542
        %v751 = vpop.permute.xlu0 %750
        %754 = vset.pattern.permute.xlu0 0
        %755 = vperm.xlu0 %754, %v543
        %v756 = vpop.permute.xlu0 %755
        %759 = vset.pattern.permute.xlu0 0
        %760 = vperm.xlu0 %759, %v544
        %v761 = vpop.permute.xlu0 %760
        %764 = vset.pattern.permute.xlu0 0
        %765 = vperm.xlu0 %764, %v545
        %v766 = vpop.permute.xlu0 %765
        %769 = vset.pattern.permute.xlu0 0
        %770 = vperm.xlu0 %769, %v546
        %v771 = vpop.permute.xlu0 %770
        %774 = vset.pattern.permute.xlu0 0
        %775 = vperm.xlu0 %774, %v547
        %v776 = vpop.permute.xlu0 %775
        %779 = vset.pattern.permute.xlu0 0
        %780 = vperm.xlu0 %779, %v548
        %v781 = vpop.permute.xlu0 %780
        %784 = vset.pattern.permute.xlu0 0
        %785 = vperm.xlu0 %784, %v549
        %v786 = vpop.permute.xlu0 %785
        %789 = vset.pattern.permute.xlu0 0
        %790 = vperm.xlu0 %789, %v550
        %v791 = vpop.permute.xlu0 %790
        %794 = vset.pattern.permute.xlu0 0
        %795 = vperm.xlu0 %794, %v551
        %v796 = vpop.permute.xlu0 %795
        %799 = vset.pattern.permute.xlu0 0
        %800 = vperm.xlu0 %799, %v552
        %v801 = vpop.permute.xlu0 %800
        %804 = vset.pattern.permute.xlu0 0
        %805 = vperm.xlu0 %804, %v553
        %v806 = vpop.permute.xlu0 %805
        %809 = vset.pattern.permute.xlu0 0
        %810 = vperm.xlu0 %809, %v554
        %v811 = vpop.permute.xlu0 %810
        %814 = vset.pattern.permute.xlu0 0
        %815 = vperm.xlu0 %814, %v555
        %v816 = vpop.permute.xlu0 %815
        %819 = vset.pattern.permute.xlu0 0
        %820 = vperm.xlu0 %819, %v556
        %v821 = vpop.permute.xlu0 %820
        %824 = vset.pattern.permute.xlu0 0
        %825 = vperm.xlu0 %824, %v557
        %v826 = vpop.permute.xlu0 %825
        %829 = vset.pattern.permute.xlu0 0
        %830 = vperm.xlu0 %829, %v558
        %v831 = vpop.permute.xlu0 %830
        %834 = vset.pattern.permute.xlu0 0
        %835 = vperm.xlu0 %834, %v559
        %v836 = vpop.permute.xlu0 %835
        %839 = vset.pattern.permute.xlu0 0
        %840 = vperm.xlu0 %839, %v560
        %v841 = vpop.permute.xlu0 %840
        %844 = vset.pattern.permute.xlu0 0
        %845 = vperm.xlu0 %844, %v561
        %v846 = vpop.permute.xlu0 %845
        %849 = vset.pattern.permute.xlu0 0
        %850 = vperm.xlu0 %849, %v562
        %v851 = vpop.permute.xlu0 %850
        %854 = vset.pattern.permute.xlu0 0
        %855 = vperm.xlu0 %854, %v563
        %v856 = vpop.permute.xlu0 %855
        %859 = vset.pattern.permute.xlu0 0
        %860 = vperm.xlu0 %859, %v564
        %v861 = vpop.permute.xlu0 %860
        %864 = vset.pattern.permute.xlu0 0
        %865 = vperm.xlu0 %864, %v565
        %v866 = vpop.permute.xlu0 %865
        %869 = vset.pattern.permute.xlu0 0
        %870 = vperm.xlu0 %869, %v566
        %v871 = vpop.permute.xlu0 %870
        %874 = vset.pattern.permute.xlu0 0
        %875 = vperm.xlu0 %874, %v567
        %v876 = vpop.permute.xlu0 %875
        %879 = vset.pattern.permute.xlu0 0
        %880 = vperm.xlu0 %879, %v568
        %v881 = vpop.permute.xlu0 %880
        %884 = vset.pattern.permute.xlu0 0
        %885 = vperm.xlu0 %884, %v569
        %v886 = vpop.permute.xlu0 %885
        %889 = vset.pattern.permute.xlu0 0
        %890 = vperm.xlu0 %889, %v570
        %v891 = vpop.permute.xlu0 %890
        %894 = vset.pattern.permute.xlu0 0
        %895 = vperm.xlu0 %894, %v571
        %v896 = vpop.permute.xlu0 %895
        %899 = vset.pattern.permute.xlu0 0
        %900 = vperm.xlu0 %899, %v572
        %v901 = vpop.permute.xlu0 %900
        %904 = vset.pattern.permute.xlu0 0
        %905 = vperm.xlu0 %904, %v573
        %v906 = vpop.permute.xlu0 %905
        %909 = vset.pattern.permute.xlu0 0
        %910 = vperm.xlu0 %909, %v574
        %v911 = vpop.permute.xlu0 %910
        %914 = vset.pattern.permute.xlu0 0
        %915 = vperm.xlu0 %914, %v575
        %v916 = vpop.permute.xlu0 %915
        %919 = vset.pattern.permute.xlu0 0
        %920 = vperm.xlu0 %919, %v576
        %v921 = vpop.permute.xlu0 %920
        %924 = vset.pattern.permute.xlu0 0
        %925 = vperm.xlu0 %924, %v577
        %v926 = vpop.permute.xlu0 %925
        %929 = vset.pattern.permute.xlu0 0
        %930 = vperm.xlu0 %929, %v578
        %v931 = vpop.permute.xlu0 %930
        %934 = vset.pattern.permute.xlu0 0
        %935 = vperm.xlu0 %934, %v579
        %v936 = vpop.permute.xlu0 %935
        %939 = vset.pattern.permute.xlu0 0
        %940 = vperm.xlu0 %939, %v580
        %v941 = vpop.permute.xlu0 %940
        %944 = vset.pattern.permute.xlu0 0
        %945 = vperm.xlu0 %944, %v581
        %v946 = vpop.permute.xlu0 %945
        %949 = vset.pattern.permute.xlu0 0
        %950 = vperm.xlu0 %949, %v582
        %v951 = vpop.permute.xlu0 %950
        %954 = vset.pattern.permute.xlu0 0
        %955 = vperm.xlu0 %954, %v583
        %v956 = vpop.permute.xlu0 %955
        %959 = vset.pattern.permute.xlu0 0
        %960 = vperm.xlu0 %959, %v584
        %v961 = vpop.permute.xlu0 %960
        %964 = vset.pattern.permute.xlu0 0
        %965 = vperm.xlu0 %964, %v585
        %v966 = vpop.permute.xlu0 %965
        %969 = vset.pattern.permute.xlu0 0
        %970 = vperm.xlu0 %969, %v586
        %v971 = vpop.permute.xlu0 %970
        %974 = vset.pattern.permute.xlu0 0
        %975 = vperm.xlu0 %974, %v587
        %v976 = vpop.permute.xlu0 %975
        %979 = vset.pattern.permute.xlu0 0
        %980 = vperm.xlu0 %979, %v588
        %v981 = vpop.permute.xlu0 %980
        %984 = vset.pattern.permute.xlu0 0
        %985 = vperm.xlu0 %984, %v589
        %v986 = vpop.permute.xlu0 %985
        %989 = vset.pattern.permute.xlu0 0
        %990 = vperm.xlu0 %989, %v590
        %v991 = vpop.permute.xlu0 %990
        %994 = vset.pattern.permute.xlu0 0
        %995 = vperm.xlu0 %994, %v591
        %v996 = vpop.permute.xlu0 %995
        %999 = vset.pattern.permute.xlu0 0
        %1000 = vperm.xlu0 %999, %v592
        %v1001 = vpop.permute.xlu0 %1000
        %1004 = vset.pattern.permute.xlu0 0
        %1005 = vperm.xlu0 %1004, %v593
        %v1006 = vpop.permute.xlu0 %1005
        %1009 = vset.pattern.permute.xlu0 0
        %1010 = vperm.xlu0 %1009, %v594
        %v1011 = vpop.permute.xlu0 %1010
        %1014 = vset.pattern.permute.xlu0 0
        %1015 = vperm.xlu0 %1014, %v595
        %v1016 = vpop.permute.xlu0 %1015
        %1019 = vset.pattern.permute.xlu0 0
        %1020 = vperm.xlu0 %1019, %v596
        %v1021 = vpop.permute.xlu0 %1020
        %1024 = vset.pattern.permute.xlu0 0
        %1025 = vperm.xlu0 %1024, %v597
        %v1026 = vpop.permute.xlu0 %1025
        %1029 = vset.pattern.permute.xlu0 0
        %1030 = vperm.xlu0 %1029, %v598
        %v1031 = vpop.permute.xlu0 %1030
        %1034 = vset.pattern.permute.xlu0 0
        %1035 = vperm.xlu0 %1034, %v599
        %v1036 = vpop.permute.xlu0 %1035
        %1039 = vset.pattern.permute.xlu0 0
        %1040 = vperm.xlu0 %1039, %v600
        %v1041 = vpop.permute.xlu0 %1040
        %1044 = vset.pattern.permute.xlu0 0
        %1045 = vperm.xlu0 %1044, %v601
        %v1046 = vpop.permute.xlu0 %1045
        %1049 = vset.pattern.permute.xlu0 0
        %1050 = vperm.xlu0 %1049, %v602
        %v1051 = vpop.permute.xlu0 %1050
        %1054 = vset.pattern.permute.xlu0 0
        %1055 = vperm.xlu0 %1054, %v603
        %v1056 = vpop.permute.xlu0 %1055
        %1059 = vset.pattern.permute.xlu0 0
        %1060 = vperm.xlu0 %1059, %v604
        %v1061 = vpop.permute.xlu0 %1060
        %1064 = vset.pattern.permute.xlu0 0
        %1065 = vperm.xlu0 %1064, %v605
        %v1066 = vpop.permute.xlu0 %1065
        %1069 = vset.pattern.permute.xlu0 0
        %1070 = vperm.xlu0 %1069, %v606
        %v1071 = vpop.permute.xlu0 %1070
        %1074 = vset.pattern.permute.xlu0 0
        %1075 = vperm.xlu0 %1074, %v607
        %v1076 = vpop.permute.xlu0 %1075
        %1079 = vset.pattern.permute.xlu0 0
        %1080 = vperm.xlu0 %1079, %v608
        %v1081 = vpop.permute.xlu0 %1080
        %1084 = vset.pattern.permute.xlu0 0
        %1085 = vperm.xlu0 %1084, %v609
        %v1086 = vpop.permute.xlu0 %1085
        %1089 = vset.pattern.permute.xlu0 0
        %1090 = vperm.xlu0 %1089, %v610
        %v1091 = vpop.permute.xlu0 %1090
        %1094 = vset.pattern.permute.xlu0 0
        %1095 = vperm.xlu0 %1094, %v611
        %v1096 = vpop.permute.xlu0 %1095
        %1099 = vset.pattern.permute.xlu0 0
        %1100 = vperm.xlu0 %1099, %v612
        %v1101 = vpop.permute.xlu0 %1100
        %1104 = vset.pattern.permute.xlu0 0
        %1105 = vperm.xlu0 %1104, %v613
        %v1106 = vpop.permute.xlu0 %1105
        %1109 = vset.pattern.permute.xlu0 0
        %1110 = vperm.xlu0 %1109, %v614
        %v1111 = vpop.permute.xlu0 %1110
        %1114 = vset.pattern.permute.xlu0 0
        %1115 = vperm.xlu0 %1114, %v615
        %v1116 = vpop.permute.xlu0 %1115
        %1119 = vset.pattern.permute.xlu0 0
        %1120 = vperm.xlu0 %1119, %v616
        %v1121 = vpop.permute.xlu0 %1120
        %1124 = vset.pattern.permute.xlu0 0
        %1125 = vperm.xlu0 %1124, %v617
        %v1126 = vpop.permute.xlu0 %1125
        %1129 = vset.pattern.permute.xlu0 0
        %1130 = vperm.xlu0 %1129, %v618
        %v1131 = vpop.permute.xlu0 %1130
        %1134 = vset.pattern.permute.xlu0 0
        %1135 = vperm.xlu0 %1134, %v619
        %v1136 = vpop.permute.xlu0 %1135
        %1139 = vset.pattern.permute.xlu0 0
        %1140 = vperm.xlu0 %1139, %v620
        %v1141 = vpop.permute.xlu0 %1140
        %1144 = vset.pattern.permute.xlu0 0
        %1145 = vperm.xlu0 %1144, %v621
        %v1146 = vpop.permute.xlu0 %1145
        %1149 = vset.pattern.permute.xlu0 0
        %1150 = vperm.xlu0 %1149, %v622
        %v1151 = vpop.permute.xlu0 %1150
        %1154 = vset.pattern.permute.xlu0 0
        %1155 = vperm.xlu0 %1154, %v623
        %v1156 = vpop.permute.xlu0 %1155
        %1159 = vset.pattern.permute.xlu0 0
        %1160 = vperm.xlu0 %1159, %v624
        %v1161 = vpop.permute.xlu0 %1160
        %1164 = vset.pattern.permute.xlu0 0
        %1165 = vperm.xlu0 %1164, %v625
        %v1166 = vpop.permute.xlu0 %1165
        %1169 = vset.pattern.permute.xlu0 0
        %1170 = vperm.xlu0 %1169, %v626
        %v1171 = vpop.permute.xlu0 %1170
        %1174 = vset.pattern.permute.xlu0 0
        %1175 = vperm.xlu0 %1174, %v627
        %v1176 = vpop.permute.xlu0 %1175
        %1179 = vset.pattern.permute.xlu0 0
        %1180 = vperm.xlu0 %1179, %v628
        %v1181 = vpop.permute.xlu0 %1180
        %1184 = vset.pattern.permute.xlu0 0
        %1185 = vperm.xlu0 %1184, %v629
        %v1186 = vpop.permute.xlu0 %1185
        %1189 = vset.pattern.permute.xlu0 0
        %1190 = vperm.xlu0 %1189, %v630
        %v1191 = vpop.permute.xlu0 %1190
        %1194 = vset.pattern.permute.xlu0 0
        %1195 = vperm.xlu0 %1194, %v631
        %v1196 = vpop.permute.xlu0 %1195
        %1199 = vset.pattern.permute.xlu0 0
        %1200 = vperm.xlu0 %1199, %v632
        %v1201 = vpop.permute.xlu0 %1200
        %1204 = vset.pattern.permute.xlu0 0
        %1205 = vperm.xlu0 %1204, %v633
        %v1206 = vpop.permute.xlu0 %1205
        %1209 = vset.pattern.permute.xlu0 0
        %1210 = vperm.xlu0 %1209, %v634
        %v1211 = vpop.permute.xlu0 %1210
        %1214 = vset.pattern.permute.xlu0 0
        %1215 = vperm.xlu0 %1214, %v635
        %v1216 = vpop.permute.xlu0 %1215
        %1219 = vset.pattern.permute.xlu0 0
        %1220 = vperm.xlu0 %1219, %v636
        %v1221 = vpop.permute.xlu0 %1220
        %1224 = vset.pattern.permute.xlu0 0
        %1225 = vperm.xlu0 %1224, %v637
        %v1226 = vpop.permute.xlu0 %1225
        %1229 = vset.pattern.permute.xlu0 0
        %1230 = vperm.xlu0 %1229, %v638
        %v1231 = vpop.permute.xlu0 %1230
        %1234 = vset.pattern.permute.xlu0 0
        %1235 = vperm.xlu0 %1234, %v639
        %v1236 = vpop.permute.xlu0 %1235
        %1239 = vset.pattern.permute.xlu0 0
        %1240 = vperm.xlu0 %1239, %v640
        %v1241 = vpop.permute.xlu0 %1240
        %1244 = vset.pattern.permute.xlu0 0
        %1245 = vperm.xlu0 %1244, %v641
        %v1246 = vpop.permute.xlu0 %1245
        %1249 = vset.pattern.permute.xlu0 0
        %1250 = vperm.xlu0 %1249, %v642
        %v1251 = vpop.permute.xlu0 %1250
        %1254 = vset.pattern.permute.xlu0 0
        %1255 = vperm.xlu0 %1254, %v643
        %v1256 = vpop.permute.xlu0 %1255
        %1259 = vset.pattern.permute.xlu0 0
        %1260 = vperm.xlu0 %1259, %v644
        %v1261 = vpop.permute.xlu0 %1260
        %1264 = vset.pattern.permute.xlu0 0
        %1265 = vperm.xlu0 %1264, %v645
        %v1266 = vpop.permute.xlu0 %1265
        %1269 = vset.pattern.permute.xlu0 0
        %1270 = vperm.xlu0 %1269, %v646
        %v1271 = vpop.permute.xlu0 %1270
        %1274 = vset.pattern.permute.xlu0 0
        %1275 = vperm.xlu0 %1274, %v647
        %v1276 = vpop.permute.xlu0 %1275
        %1279 = vset.pattern.permute.xlu0 0
        %1280 = vperm.xlu0 %1279, %v648
        %v1281 = vpop.permute.xlu0 %1280
        %1284 = vset.pattern.permute.xlu0 0
        %1285 = vperm.xlu0 %1284, %v649
        %v1286 = vpop.permute.xlu0 %1285
        %1289 = vset.pattern.permute.xlu0 0
        %1290 = vperm.xlu0 %1289, %v650
        %v1291 = vpop.permute.xlu0 %1290
        %1294 = vset.pattern.permute.xlu0 0
        %1295 = vperm.xlu0 %1294, %v651
        %v1296 = vpop.permute.xlu0 %1295
        %1299 = vset.pattern.permute.xlu0 0
        %1300 = vperm.xlu0 %1299, %v652
        %v1301 = vpop.permute.xlu0 %1300
        %1304 = vset.pattern.permute.xlu0 0
        %1305 = vperm.xlu0 %1304, %v653
        %v1306 = vpop.permute.xlu0 %1305
        %1309 = vset.pattern.permute.xlu0 0
        %1310 = vperm.xlu0 %1309, %v654
        %v1311 = vpop.permute.xlu0 %1310
        %1314 = vset.pattern.permute.xlu0 0
        %1315 = vperm.xlu0 %1314, %v655
        %v1316 = vpop.permute.xlu0 %1315
        %1319 = vset.pattern.permute.xlu0 0
        %1320 = vperm.xlu0 %1319, %v656
        %v1321 = vpop.permute.xlu0 %1320
        %1324 = vset.pattern.permute.xlu0 0
        %1325 = vperm.xlu0 %1324, %v657
        %v1326 = vpop.permute.xlu0 %1325
        %1329 = vset.pattern.permute.xlu0 0
        %1330 = vperm.xlu0 %1329, %v658
        %v1331 = vpop.permute.xlu0 %1330
        %1334 = vset.pattern.permute.xlu0 0
        %1335 = vperm.xlu0 %1334, %v659
        %v1336 = vpop.permute.xlu0 %1335
        %1339 = vset.pattern.permute.xlu0 0
        %1340 = vperm.xlu0 %1339, %v660
        %v1341 = vpop.permute.xlu0 %1340
        %1344 = vset.pattern.permute.xlu0 0
        %1345 = vperm.xlu0 %1344, %v661
        %v1346 = vpop.permute.xlu0 %1345
        %1349 = vset.pattern.permute.xlu0 0
        %1350 = vperm.xlu0 %1349, %v662
        %v1351 = vpop.permute.xlu0 %1350
        %1354 = vset.pattern.permute.xlu0 0
        %1355 = vperm.xlu0 %1354, %v663
        %v1356 = vpop.permute.xlu0 %1355
        %1359 = vset.pattern.permute.xlu0 0
        %1360 = vperm.xlu0 %1359, %v664
        %v1361 = vpop.permute.xlu0 %1360
        %1364 = vset.pattern.permute.xlu0 0
        %1365 = vperm.xlu0 %1364, %v665
        %v1366 = vpop.permute.xlu0 %1365
        %1369 = vset.pattern.permute.xlu0 0
        %1370 = vperm.xlu0 %1369, %v666
        %v1371 = vpop.permute.xlu0 %1370
        %1374 = vset.pattern.permute.xlu0 0
        %1375 = vperm.xlu0 %1374, %v667
        %v1376 = vpop.permute.xlu0 %1375
        %1379 = vset.pattern.permute.xlu0 0
        %1380 = vperm.xlu0 %1379, %v668
        %v1381 = vpop.permute.xlu0 %1380
        %1384 = vset.pattern.permute.xlu0 0
        %1385 = vperm.xlu0 %1384, %v669
        %v1386 = vpop.permute.xlu0 %1385
        %1389 = vset.pattern.permute.xlu0 0
        %1390 = vperm.xlu0 %1389, %v670
        %v1391 = vpop.permute.xlu0 %1390
        %1394 = vset.pattern.permute.xlu0 0
        %1395 = vperm.xlu0 %1394, %v671
        %v1396 = vpop.permute.xlu0 %1395
        %1399 = vset.pattern.permute.xlu0 0
        %1400 = vperm.xlu0 %1399, %v672
        %v1401 = vpop.permute.xlu0 %1400
        %1404 = vset.pattern.permute.xlu0 0
        %1405 = vperm.xlu0 %1404, %v673
        %v1406 = vpop.permute.xlu0 %1405
        %1409 = vset.pattern.permute.xlu0 0
        %1410 = vperm.xlu0 %1409, %v674
        %v1411 = vpop.permute.xlu0 %1410
        %1414 = vset.pattern.permute.xlu0 0
        %1415 = vperm.xlu0 %1414, %v675
        %v1416 = vpop.permute.xlu0 %1415
        %1419 = vset.pattern.permute.xlu0 0
        %1420 = vperm.xlu0 %1419, %v676
        %v1421 = vpop.permute.xlu0 %1420
        %1424 = vset.pattern.permute.xlu0 0
        %1425 = vperm.xlu0 %1424, %v677
        %v1426 = vpop.permute.xlu0 %1425
        %1429 = vset.pattern.permute.xlu0 0
        %1430 = vperm.xlu0 %1429, %v678
        %v1431 = vpop.permute.xlu0 %1430
        %1434 = vset.pattern.permute.xlu0 0
        %1435 = vperm.xlu0 %1434, %v679
        %v1436 = vpop.permute.xlu0 %1435
        %1439 = vset.pattern.permute.xlu0 0
        %1440 = vperm.xlu0 %1439, %v680
        %v1441 = vpop.permute.xlu0 %1440
        %1444 = vset.pattern.permute.xlu0 0
        %1445 = vperm.xlu0 %1444, %v681
        %v1446 = vpop.permute.xlu0 %1445
        %1449 = vset.pattern.permute.xlu0 0
        %1450 = vperm.xlu0 %1449, %v682
        %v1451 = vpop.permute.xlu0 %1450
        %1454 = vset.pattern.permute.xlu0 0
        %1455 = vperm.xlu0 %1454, %v683
        %v1456 = vpop.permute.xlu0 %1455
        %1459 = vset.pattern.permute.xlu0 0
        %1460 = vperm.xlu0 %1459, %v684
        %v1461 = vpop.permute.xlu0 %1460
        %1464 = vset.pattern.permute.xlu0 0
        %1465 = vperm.xlu0 %1464, %v685
        %v1466 = vpop.permute.xlu0 %1465
        %1469 = vset.pattern.permute.xlu0 0
        %1470 = vperm.xlu0 %1469, %v686
        %v1471 = vpop.permute.xlu0 %1470
        %1474 = vset.pattern.permute.xlu0 0
        %1475 = vperm.xlu0 %1474, %v687
        %v1476 = vpop.permute.xlu0 %1475
        %1479 = vset.pattern.permute.xlu0 0
        %1480 = vperm.xlu0 %1479, %v688
        %v1481 = vpop.permute.xlu0 %1480
        %1484 = vset.pattern.permute.xlu0 0
        %1485 = vperm.xlu0 %1484, %v689
        %v1486 = vpop.permute.xlu0 %1485
        %1489 = vset.pattern.permute.xlu0 0
        %1490 = vperm.xlu0 %1489, %v690
        %v1491 = vpop.permute.xlu0 %1490
        %v1653 = vunpack.c.l.b16 %v371
        %v1654 = vunpack.c.l.b16 %v372
        %v1655 = vunpack.c.l.b16 %v373
        %v1656 = vunpack.c.l.b16 %v374
        %v1657 = vunpack.c.l.b16 %v375
        %v1658 = vunpack.c.l.b16 %v376
        %v1659 = vunpack.c.l.b16 %v377
        %v1660 = vunpack.c.l.b16 %v378
        %v1661 = vunpack.c.l.b16 %v379
        %v1662 = vunpack.c.l.b16 %v380
        %v1663 = vunpack.c.l.b16 %v381
        %v1664 = vunpack.c.l.b16 %v382
        %v1665 = vunpack.c.l.b16 %v383
        %v1666 = vunpack.c.l.b16 %v384
        %v1667 = vunpack.c.l.b16 %v385
        %v1668 = vunpack.c.l.b16 %v386
        %v1669 = vunpack.c.l.b16 %v387
        %v1670 = vunpack.c.l.b16 %v388
        %v1671 = vunpack.c.l.b16 %v389
        %v1672 = vunpack.c.l.b16 %v390
        %v1673 = vunpack.c.l.b16 %v391
        %v1674 = vunpack.c.l.b16 %v392
        %v1675 = vunpack.c.l.b16 %v393
        %v1676 = vunpack.c.l.b16 %v394
        %v1677 = vunpack.c.l.b16 %v395
        %v1678 = vunpack.c.l.b16 %v396
        %v1679 = vunpack.c.l.b16 %v397
        %v1680 = vunpack.c.l.b16 %v398
        %v1681 = vunpack.c.l.b16 %v399
        %v1682 = vunpack.c.l.b16 %v400
        %v1683 = vunpack.c.l.b16 %v401
        %v1684 = vunpack.c.l.b16 %v402
        %v1685 = vunpack.c.l.b16 %v403
        %v1686 = vunpack.c.l.b16 %v404
        %v1687 = vunpack.c.l.b16 %v405
        %v1688 = vunpack.c.l.b16 %v406
        %v1689 = vunpack.c.l.b16 %v407
        %v1690 = vunpack.c.l.b16 %v408
        %v1691 = vunpack.c.l.b16 %v409
        %v1692 = vunpack.c.l.b16 %v410
        %v1693 = vunpack.c.l.b16 %v411
        %v1694 = vunpack.c.l.b16 %v412
        %v1695 = vunpack.c.l.b16 %v413
        %v1696 = vunpack.c.l.b16 %v414
        %v1697 = vunpack.c.l.b16 %v415
        %v1698 = vunpack.c.l.b16 %v416
        %v1699 = vunpack.c.l.b16 %v417
        %v1700 = vunpack.c.l.b16 %v418
        %v1701 = vunpack.c.l.b16 %v419
        %v1702 = vunpack.c.l.b16 %v420
        %v1703 = vunpack.c.l.b16 %v421
        %v1704 = vunpack.c.l.b16 %v422
        %v1705 = vunpack.c.l.b16 %v423
        %v1706 = vunpack.c.l.b16 %v424
        %v1707 = vunpack.c.l.b16 %v425
        %v1708 = vunpack.c.l.b16 %v426
        %v1709 = vunpack.c.l.b16 %v427
        %v1710 = vunpack.c.l.b16 %v428
        %v1711 = vunpack.c.l.b16 %v429
        %v1712 = vunpack.c.l.b16 %v430
        %v1713 = vunpack.c.l.b16 %v431
        %v1714 = vunpack.c.l.b16 %v432
        %v1715 = vunpack.c.l.b16 %v433
        %v1716 = vunpack.c.l.b16 %v434
        %v1717 = vunpack.c.l.b16 %v435
        %v1718 = vunpack.c.l.b16 %v436
        %v1719 = vunpack.c.l.b16 %v437
        %v1720 = vunpack.c.l.b16 %v438
        %v1721 = vunpack.c.l.b16 %v439
        %v1722 = vunpack.c.l.b16 %v440
        %v1723 = vunpack.c.l.b16 %v441
        %v1724 = vunpack.c.l.b16 %v442
        %v1725 = vunpack.c.l.b16 %v443
        %v1726 = vunpack.c.l.b16 %v444
        %v1727 = vunpack.c.l.b16 %v445
        %v1728 = vunpack.c.l.b16 %v446
        %v1729 = vunpack.c.l.b16 %v447
        %v1730 = vunpack.c.l.b16 %v448
        %v1731 = vunpack.c.l.b16 %v449
        %v1732 = vunpack.c.l.b16 %v450
        %v1733 = vunpack.c.l.b16 %v451
        %v1734 = vunpack.c.l.b16 %v452
        %v1735 = vunpack.c.l.b16 %v453
        %v1736 = vunpack.c.l.b16 %v454
        %v1737 = vunpack.c.l.b16 %v455
        %v1738 = vunpack.c.l.b16 %v456
        %v1739 = vunpack.c.l.b16 %v457
        %v1740 = vunpack.c.l.b16 %v458
        %v1741 = vunpack.c.l.b16 %v459
        %v1742 = vunpack.c.l.b16 %v460
        %v1743 = vunpack.c.l.b16 %v461
        %v1744 = vunpack.c.l.b16 %v462
        %v1745 = vunpack.c.l.b16 %v463
        %v1746 = vunpack.c.l.b16 %v464
        %v1747 = vunpack.c.l.b16 %v465
        %v1748 = vunpack.c.l.b16 %v466
        %v1749 = vunpack.c.l.b16 %v467
        %v1750 = vunpack.c.l.b16 %v468
        %v1751 = vunpack.c.l.b16 %v469
        %v1752 = vunpack.c.l.b16 %v470
        %v1753 = vunpack.c.l.b16 %v471
        %v1754 = vunpack.c.l.b16 %v472
        %v1755 = vunpack.c.l.b16 %v473
        %v1756 = vunpack.c.l.b16 %v474
        %v1757 = vunpack.c.l.b16 %v475
        %v1758 = vunpack.c.l.b16 %v476
        %v1759 = vunpack.c.l.b16 %v477
        %v1760 = vunpack.c.l.b16 %v478
        %v1761 = vunpack.c.l.b16 %v479
        %v1762 = vunpack.c.l.b16 %v480
        %v1763 = vunpack.c.l.b16 %v481
        %v1764 = vunpack.c.l.b16 %v482
        %v1765 = vunpack.c.l.b16 %v483
        %v1766 = vunpack.c.l.b16 %v484
        %v1767 = vunpack.c.l.b16 %v485
        %v1768 = vunpack.c.l.b16 %v486
        %v1769 = vunpack.c.l.b16 %v487
        %v1770 = vunpack.c.l.b16 %v488
        %v1771 = vunpack.c.l.b16 %v489
        %v1772 = vunpack.c.l.b16 %v490
        %v1773 = vunpack.c.l.b16 %v491
        %v1774 = vunpack.c.l.b16 %v492
        %v1775 = vunpack.c.l.b16 %v493
        %v1776 = vunpack.c.l.b16 %v494
        %v1777 = vunpack.c.l.b16 %v495
        %v1778 = vunpack.c.l.b16 %v496
        %v1779 = vunpack.c.l.b16 %v497
        %v1780 = vunpack.c.l.b16 %v498
        %v1781 = vunpack.c.l.b16 %v499
        %v1782 = vunpack.c.l.b16 %v500
        %v1783 = vunpack.c.l.b16 %v501
        %v1784 = vunpack.c.l.b16 %v502
        %v1785 = vunpack.c.l.b16 %v503
        %v1786 = vunpack.c.l.b16 %v504
        %v1787 = vunpack.c.l.b16 %v505
        %v1788 = vunpack.c.l.b16 %v506
        %v1789 = vunpack.c.l.b16 %v507
        %v1790 = vunpack.c.l.b16 %v508
        %v1791 = vunpack.c.l.b16 %v509
        %v1792 = vunpack.c.l.b16 %v510
        %v1793 = vunpack.c.l.b16 %v511
        %v1794 = vunpack.c.l.b16 %v512
        %v1795 = vunpack.c.l.b16 %v513
        %v1796 = vunpack.c.l.b16 %v514
        %v1797 = vunpack.c.l.b16 %v515
        %v1798 = vunpack.c.l.b16 %v516
        %v1799 = vunpack.c.l.b16 %v517
        %v1800 = vunpack.c.l.b16 %v518
        %v1801 = vunpack.c.l.b16 %v519
        %v1802 = vunpack.c.l.b16 %v520
        %v1803 = vunpack.c.l.b16 %v521
        %v1804 = vunpack.c.l.b16 %v522
        %v1805 = vunpack.c.l.b16 %v523
        %v1806 = vunpack.c.l.b16 %v524
        %v1807 = vunpack.c.l.b16 %v525
        %v1808 = vunpack.c.l.b16 %v526
        %v1809 = vunpack.c.l.b16 %v527
        %v1810 = vunpack.c.l.b16 %v528
        %v1811 = vunpack.c.l.b16 %v529
        %v1812 = vunpack.c.l.b16 %v530
        %v1813 = vpack.c.b16 %v1654, %v1653
        %v1814 = vpack.c.b16 %v1656, %v1655
        %v1815 = vpack.c.b16 %v1658, %v1657
        %v1816 = vpack.c.b16 %v1660, %v1659
        %v1817 = vpack.c.b16 %v1662, %v1661
        %v1818 = vpack.c.b16 %v1664, %v1663
        %v1819 = vpack.c.b16 %v1666, %v1665
        %v1820 = vpack.c.b16 %v1668, %v1667
        %v1821 = vpack.c.b16 %v1670, %v1669
        %v1822 = vpack.c.b16 %v1672, %v1671
        %v1823 = vpack.c.b16 %v1674, %v1673
        %v1824 = vpack.c.b16 %v1676, %v1675
        %v1825 = vpack.c.b16 %v1678, %v1677
        %v1826 = vpack.c.b16 %v1680, %v1679
        %v1827 = vpack.c.b16 %v1682, %v1681
        %v1828 = vpack.c.b16 %v1684, %v1683
        %v1829 = vpack.c.b16 %v1686, %v1685
        %v1830 = vpack.c.b16 %v1688, %v1687
        %v1831 = vpack.c.b16 %v1690, %v1689
        %v1832 = vpack.c.b16 %v1692, %v1691
        %v1833 = vpack.c.b16 %v1694, %v1693
        %v1834 = vpack.c.b16 %v1696, %v1695
        %v1835 = vpack.c.b16 %v1698, %v1697
        %v1836 = vpack.c.b16 %v1700, %v1699
        %v1837 = vpack.c.b16 %v1702, %v1701
        %v1838 = vpack.c.b16 %v1704, %v1703
        %v1839 = vpack.c.b16 %v1706, %v1705
        %v1840 = vpack.c.b16 %v1708, %v1707
        %v1841 = vpack.c.b16 %v1710, %v1709
        %v1842 = vpack.c.b16 %v1712, %v1711
        %v1843 = vpack.c.b16 %v1714, %v1713
        %v1844 = vpack.c.b16 %v1716, %v1715
        %v1845 = vpack.c.b16 %v1718, %v1717
        %v1846 = vpack.c.b16 %v1720, %v1719
        %v1847 = vpack.c.b16 %v1722, %v1721
        %v1848 = vpack.c.b16 %v1724, %v1723
        %v1849 = vpack.c.b16 %v1726, %v1725
        %v1850 = vpack.c.b16 %v1728, %v1727
        %v1851 = vpack.c.b16 %v1730, %v1729
        %v1852 = vpack.c.b16 %v1732, %v1731
        %v1853 = vpack.c.b16 %v1734, %v1733
        %v1854 = vpack.c.b16 %v1736, %v1735
        %v1855 = vpack.c.b16 %v1738, %v1737
        %v1856 = vpack.c.b16 %v1740, %v1739
        %v1857 = vpack.c.b16 %v1742, %v1741
        %v1858 = vpack.c.b16 %v1744, %v1743
        %v1859 = vpack.c.b16 %v1746, %v1745
        %v1860 = vpack.c.b16 %v1748, %v1747
        %v1861 = vpack.c.b16 %v1750, %v1749
        %v1862 = vpack.c.b16 %v1752, %v1751
        %v1863 = vpack.c.b16 %v1754, %v1753
        %v1864 = vpack.c.b16 %v1756, %v1755
        %v1865 = vpack.c.b16 %v1758, %v1757
        %v1866 = vpack.c.b16 %v1760, %v1759
        %v1867 = vpack.c.b16 %v1762, %v1761
        %v1868 = vpack.c.b16 %v1764, %v1763
        %v1869 = vpack.c.b16 %v1766, %v1765
        %v1870 = vpack.c.b16 %v1768, %v1767
        %v1871 = vpack.c.b16 %v1770, %v1769
        %v1872 = vpack.c.b16 %v1772, %v1771
        %v1873 = vpack.c.b16 %v1774, %v1773
        %v1874 = vpack.c.b16 %v1776, %v1775
        %v1875 = vpack.c.b16 %v1778, %v1777
        %v1876 = vpack.c.b16 %v1780, %v1779
        %v1877 = vpack.c.b16 %v1782, %v1781
        %v1878 = vpack.c.b16 %v1784, %v1783
        %v1879 = vpack.c.b16 %v1786, %v1785
        %v1880 = vpack.c.b16 %v1788, %v1787
        %v1881 = vpack.c.b16 %v1790, %v1789
        %v1882 = vpack.c.b16 %v1792, %v1791
        %v1883 = vpack.c.b16 %v1794, %v1793
        %v1884 = vpack.c.b16 %v1796, %v1795
        %v1885 = vpack.c.b16 %v1798, %v1797
        %v1886 = vpack.c.b16 %v1800, %v1799
        %v1887 = vpack.c.b16 %v1802, %v1801
        %v1888 = vpack.c.b16 %v1804, %v1803
        %v1889 = vpack.c.b16 %v1806, %v1805
        %v1890 = vpack.c.b16 %v1808, %v1807
        %v1891 = vpack.c.b16 %v1810, %v1809
        %v1892 = vpack.c.b16 %v1812, %v1811
        %vm1893 = vcmask 31744
        %v1895 = vsel %vm1893, %v1813, 0
        %v1898 = vsel %vm1893, %v1814, 0
        %v1901 = vsel %vm1893, %v1815, 0
        %v1904 = vsel %vm1893, %v1816, 0
        %v1907 = vsel %vm1893, %v1817, 0
        %v1910 = vsel %vm1893, %v1818, 0
        %v1913 = vsel %vm1893, %v1819, 0
        %v1916 = vsel %vm1893, %v1820, 0
        %v1919 = vsel %vm1893, %v1821, 0
        %v1922 = vsel %vm1893, %v1822, 0
        %v1925 = vsel %vm1893, %v1823, 0
        %v1928 = vsel %vm1893, %v1824, 0
        %v1931 = vsel %vm1893, %v1825, 0
        %v1934 = vsel %vm1893, %v1826, 0
        %v1937 = vsel %vm1893, %v1827, 0
        %v1940 = vsel %vm1893, %v1828, 0
        %v1943 = vsel %vm1893, %v1829, 0
        %v1946 = vsel %vm1893, %v1830, 0
        %v1949 = vsel %vm1893, %v1831, 0
        %v1952 = vsel %vm1893, %v1832, 0
        %v1955 = vsel %vm1893, %v1833, 0
        %v1958 = vsel %vm1893, %v1834, 0
        %v1961 = vsel %vm1893, %v1835, 0
        %v1964 = vsel %vm1893, %v1836, 0
        %v1967 = vsel %vm1893, %v1837, 0
        %v1970 = vsel %vm1893, %v1838, 0
        %v1973 = vsel %vm1893, %v1839, 0
        %v1976 = vsel %vm1893, %v1840, 0
        %v1979 = vsel %vm1893, %v1841, 0
        %v1982 = vsel %vm1893, %v1842, 0
        %v1985 = vsel %vm1893, %v1843, 0
        %v1988 = vsel %vm1893, %v1844, 0
        %v1991 = vsel %vm1893, %v1845, 0
        %v1994 = vsel %vm1893, %v1846, 0
        %v1997 = vsel %vm1893, %v1847, 0
        %v2000 = vsel %vm1893, %v1848, 0
        %v2003 = vsel %vm1893, %v1849, 0
        %v2006 = vsel %vm1893, %v1850, 0
        %v2009 = vsel %vm1893, %v1851, 0
        %v2012 = vsel %vm1893, %v1852, 0
        %v2015 = vsel %vm1893, %v1853, 0
        %v2018 = vsel %vm1893, %v1854, 0
        %v2021 = vsel %vm1893, %v1855, 0
        %v2024 = vsel %vm1893, %v1856, 0
        %v2027 = vsel %vm1893, %v1857, 0
        %v2030 = vsel %vm1893, %v1858, 0
        %v2033 = vsel %vm1893, %v1859, 0
        %v2036 = vsel %vm1893, %v1860, 0
        %v2039 = vsel %vm1893, %v1861, 0
        %v2042 = vsel %vm1893, %v1862, 0
        %v2045 = vsel %vm1893, %v1863, 0
        %v2048 = vsel %vm1893, %v1864, 0
        %v2051 = vsel %vm1893, %v1865, 0
        %v2054 = vsel %vm1893, %v1866, 0
        %v2057 = vsel %vm1893, %v1867, 0
        %v2060 = vsel %vm1893, %v1868, 0
        %v2063 = vsel %vm1893, %v1869, 0
        %v2066 = vsel %vm1893, %v1870, 0
        %v2069 = vsel %vm1893, %v1871, 0
        %v2072 = vsel %vm1893, %v1872, 0
        %v2075 = vsel %vm1893, %v1873, 0
        %v2078 = vsel %vm1893, %v1874, 0
        %v2081 = vsel %vm1893, %v1875, 0
        %v2084 = vsel %vm1893, %v1876, 0
        %v2087 = vsel %vm1893, %v1877, 0
        %v2090 = vsel %vm1893, %v1878, 0
        %v2093 = vsel %vm1893, %v1879, 0
        %v2096 = vsel %vm1893, %v1880, 0
        %v2099 = vsel %vm1893, %v1881, 0
        %v2102 = vsel %vm1893, %v1882, 0
        %v2105 = vsel %vm1893, %v1883, 0
        %v2108 = vsel %vm1893, %v1884, 0
        %v2111 = vsel %vm1893, %v1885, 0
        %v2114 = vsel %vm1893, %v1886, 0
        %v2117 = vsel %vm1893, %v1887, 0
        %v2120 = vsel %vm1893, %v1888, 0
        %v2123 = vsel %vm1893, %v1889, 0
        %v2126 = vsel %vm1893, %v1890, 0
        %v2129 = vsel %vm1893, %v1891, 0
        %v2132 = vsel %vm1893, %v1892, 0
        %vm2134 = vcmask 1041408
        %v2136 = vsel %vm2134, %v692, 0
        %2138 = vmatpush.bf16.msra.mxu0 0
        %2139 = vmatpush.bf16.msra.mxu0 0
        %2140 = vmatpush.bf16.msra.mxu0 0
        %2141 = vmatpush.bf16.msra.mxu0 0
        %2142 = vmatpush.bf16.msra.mxu0 0
        %2143 = vmatpush.bf16.msra.mxu0 0
        %2144 = vmatpush.bf16.msra.mxu0 0
        %2145 = vmatpush.bf16.msra.mxu0 %v2136
        %2146 = vmatmul.bf16.gmra.mxu0 %v1895
        %v2147 = vpop.f32.mrf.mxu0
        %v2148 = vadd.f32 %v696, %v2147
        %v2149 = vpop.f32.mrf.mxu0
        %v2150 = vadd.f32 %v701, %v2149
        %2151 = vmatmul.bf16.gmra.mxu0 %v1898
        %v2152 = vpop.f32.mrf.mxu0
        %v2153 = vadd.f32 %v706, %v2152
        %v2154 = vpop.f32.mrf.mxu0
        %v2155 = vadd.f32 %v711, %v2154
        %2156 = vmatmul.bf16.gmra.mxu0 %v1901
        %v2157 = vpop.f32.mrf.mxu0
        %v2158 = vadd.f32 %v716, %v2157
        %v2159 = vpop.f32.mrf.mxu0
        %v2160 = vadd.f32 %v721, %v2159
        %2161 = vmatmul.bf16.gmra.mxu0 %v1904
        %v2162 = vpop.f32.mrf.mxu0
        %v2163 = vadd.f32 %v726, %v2162
        %v2164 = vpop.f32.mrf.mxu0
        %v2165 = vadd.f32 %v731, %v2164
        %2166 = vmatmul.bf16.gmra.mxu0 %v1907
        %v2167 = vpop.f32.mrf.mxu0
        %v2168 = vadd.f32 %v736, %v2167
        %v2169 = vpop.f32.mrf.mxu0
        %v2170 = vadd.f32 %v741, %v2169
        %2171 = vmatmul.bf16.gmra.mxu0 %v1910
        %v2172 = vpop.f32.mrf.mxu0
        %v2173 = vadd.f32 %v746, %v2172
        %v2174 = vpop.f32.mrf.mxu0
        %v2175 = vadd.f32 %v751, %v2174
        %2176 = vmatmul.bf16.gmra.mxu0 %v1913
        %v2177 = vpop.f32.mrf.mxu0
        %v2178 = vadd.f32 %v756, %v2177
        %v2179 = vpop.f32.mrf.mxu0
        %v2180 = vadd.f32 %v761, %v2179
        %2181 = vmatmul.bf16.gmra.mxu0 %v1916
        %v2182 = vpop.f32.mrf.mxu0
        %v2183 = vadd.f32 %v766, %v2182
        %v2184 = vpop.f32.mrf.mxu0
        %v2185 = vadd.f32 %v771, %v2184
        %2186 = vmatmul.bf16.gmra.mxu0 %v1919
        %v2187 = vpop.f32.mrf.mxu0
        %v2188 = vadd.f32 %v776, %v2187
        %v2189 = vpop.f32.mrf.mxu0
        %v2190 = vadd.f32 %v781, %v2189
        %2191 = vmatmul.bf16.gmra.mxu0 %v1922
        %v2192 = vpop.f32.mrf.mxu0
        %v2193 = vadd.f32 %v786, %v2192
        %v2194 = vpop.f32.mrf.mxu0
        %v2195 = vadd.f32 %v791, %v2194
        %2196 = vmatmul.bf16.gmra.mxu0 %v1925
        %v2197 = vpop.f32.mrf.mxu0
        %v2198 = vadd.f32 %v796, %v2197
        %v2199 = vpop.f32.mrf.mxu0
        %v2200 = vadd.f32 %v801, %v2199
        %2201 = vmatmul.bf16.gmra.mxu0 %v1928
        %v2202 = vpop.f32.mrf.mxu0
        %v2203 = vadd.f32 %v806, %v2202
        %v2204 = vpop.f32.mrf.mxu0
        %v2205 = vadd.f32 %v811, %v2204
        %2206 = vmatmul.bf16.gmra.mxu0 %v1931
        %v2207 = vpop.f32.mrf.mxu0
        %v2208 = vadd.f32 %v816, %v2207
        %v2209 = vpop.f32.mrf.mxu0
        %v2210 = vadd.f32 %v821, %v2209
        %2211 = vmatmul.bf16.gmra.mxu0 %v1934
        %v2212 = vpop.f32.mrf.mxu0
        %v2213 = vadd.f32 %v826, %v2212
        %v2214 = vpop.f32.mrf.mxu0
        %v2215 = vadd.f32 %v831, %v2214
        %2216 = vmatmul.bf16.gmra.mxu0 %v1937
        %v2217 = vpop.f32.mrf.mxu0
        %v2218 = vadd.f32 %v836, %v2217
        %v2219 = vpop.f32.mrf.mxu0
        %v2220 = vadd.f32 %v841, %v2219
        %2221 = vmatmul.bf16.gmra.mxu0 %v1940
        %v2222 = vpop.f32.mrf.mxu0
        %v2223 = vadd.f32 %v846, %v2222
        %v2224 = vpop.f32.mrf.mxu0
        %v2225 = vadd.f32 %v851, %v2224
        %2226 = vmatmul.bf16.gmra.mxu0 %v1943
        %v2227 = vpop.f32.mrf.mxu0
        %v2228 = vadd.f32 %v856, %v2227
        %v2229 = vpop.f32.mrf.mxu0
        %v2230 = vadd.f32 %v861, %v2229
        %2231 = vmatmul.bf16.gmra.mxu0 %v1946
        %v2232 = vpop.f32.mrf.mxu0
        %v2233 = vadd.f32 %v866, %v2232
        %v2234 = vpop.f32.mrf.mxu0
        %v2235 = vadd.f32 %v871, %v2234
        %2236 = vmatmul.bf16.gmra.mxu0 %v1949
        %v2237 = vpop.f32.mrf.mxu0
        %v2238 = vadd.f32 %v876, %v2237
        %v2239 = vpop.f32.mrf.mxu0
        %v2240 = vadd.f32 %v881, %v2239
        %2241 = vmatmul.bf16.gmra.mxu0 %v1952
        %v2242 = vpop.f32.mrf.mxu0
        %v2243 = vadd.f32 %v886, %v2242
        %v2244 = vpop.f32.mrf.mxu0
        %v2245 = vadd.f32 %v891, %v2244
        %2246 = vmatmul.bf16.gmra.mxu0 %v1955
        %v2247 = vpop.f32.mrf.mxu0
        %v2248 = vadd.f32 %v896, %v2247
        %v2249 = vpop.f32.mrf.mxu0
        %v2250 = vadd.f32 %v901, %v2249
        %2251 = vmatmul.bf16.gmra.mxu0 %v1958
        %v2252 = vpop.f32.mrf.mxu0
        %v2253 = vadd.f32 %v906, %v2252
        %v2254 = vpop.f32.mrf.mxu0
        %v2255 = vadd.f32 %v911, %v2254
        %2256 = vmatmul.bf16.gmra.mxu0 %v1961
        %v2257 = vpop.f32.mrf.mxu0
        %v2258 = vadd.f32 %v916, %v2257
        %v2259 = vpop.f32.mrf.mxu0
        %v2260 = vadd.f32 %v921, %v2259
        %2261 = vmatmul.bf16.gmra.mxu0 %v1964
        %v2262 = vpop.f32.mrf.mxu0
        %v2263 = vadd.f32 %v926, %v2262
        %v2264 = vpop.f32.mrf.mxu0
        %v2265 = vadd.f32 %v931, %v2264
        %2266 = vmatmul.bf16.gmra.mxu0 %v1967
        %v2267 = vpop.f32.mrf.mxu0
        %v2268 = vadd.f32 %v936, %v2267
        %v2269 = vpop.f32.mrf.mxu0
        %v2270 = vadd.f32 %v941, %v2269
        %2271 = vmatmul.bf16.gmra.mxu0 %v1970
        %v2272 = vpop.f32.mrf.mxu0
        %v2273 = vadd.f32 %v946, %v2272
        %v2274 = vpop.f32.mrf.mxu0
        %v2275 = vadd.f32 %v951, %v2274
        %2276 = vmatmul.bf16.gmra.mxu0 %v1973
        %v2277 = vpop.f32.mrf.mxu0
        %v2278 = vadd.f32 %v956, %v2277
        %v2279 = vpop.f32.mrf.mxu0
        %v2280 = vadd.f32 %v961, %v2279
        %2281 = vmatmul.bf16.gmra.mxu0 %v1976
        %v2282 = vpop.f32.mrf.mxu0
        %v2283 = vadd.f32 %v966, %v2282
        %v2284 = vpop.f32.mrf.mxu0
        %v2285 = vadd.f32 %v971, %v2284
        %2286 = vmatmul.bf16.gmra.mxu0 %v1979
        %v2287 = vpop.f32.mrf.mxu0
        %v2288 = vadd.f32 %v976, %v2287
        %v2289 = vpop.f32.mrf.mxu0
        %v2290 = vadd.f32 %v981, %v2289
        %2291 = vmatmul.bf16.gmra.mxu0 %v1982
        %v2292 = vpop.f32.mrf.mxu0
        %v2293 = vadd.f32 %v986, %v2292
        %v2294 = vpop.f32.mrf.mxu0
        %v2295 = vadd.f32 %v991, %v2294
        %2296 = vmatmul.bf16.gmra.mxu0 %v1985
        %v2297 = vpop.f32.mrf.mxu0
        %v2298 = vadd.f32 %v996, %v2297
        %v2299 = vpop.f32.mrf.mxu0
        %v2300 = vadd.f32 %v1001, %v2299
        %2301 = vmatmul.bf16.gmra.mxu0 %v1988
        %v2302 = vpop.f32.mrf.mxu0
        %v2303 = vadd.f32 %v1006, %v2302
        %v2304 = vpop.f32.mrf.mxu0
        %v2305 = vadd.f32 %v1011, %v2304
        %2306 = vmatmul.bf16.gmra.mxu0 %v1991
        %v2307 = vpop.f32.mrf.mxu0
        %v2308 = vadd.f32 %v1016, %v2307
        %v2309 = vpop.f32.mrf.mxu0
        %v2310 = vadd.f32 %v1021, %v2309
        %2311 = vmatmul.bf16.gmra.mxu0 %v1994
        %v2312 = vpop.f32.mrf.mxu0
        %v2313 = vadd.f32 %v1026, %v2312
        %v2314 = vpop.f32.mrf.mxu0
        %v2315 = vadd.f32 %v1031, %v2314
        %2316 = vmatmul.bf16.gmra.mxu0 %v1997
        %v2317 = vpop.f32.mrf.mxu0
        %v2318 = vadd.f32 %v1036, %v2317
        %v2319 = vpop.f32.mrf.mxu0
        %v2320 = vadd.f32 %v1041, %v2319
        %2321 = vmatmul.bf16.gmra.mxu0 %v2000
        %v2322 = vpop.f32.mrf.mxu0
        %v2323 = vadd.f32 %v1046, %v2322
        %v2324 = vpop.f32.mrf.mxu0
        %v2325 = vadd.f32 %v1051, %v2324
        %2326 = vmatmul.bf16.gmra.mxu0 %v2003
        %v2327 = vpop.f32.mrf.mxu0
        %v2328 = vadd.f32 %v1056, %v2327
        %v2329 = vpop.f32.mrf.mxu0
        %v2330 = vadd.f32 %v1061, %v2329
        %2331 = vmatmul.bf16.gmra.mxu0 %v2006
        %v2332 = vpop.f32.mrf.mxu0
        %v2333 = vadd.f32 %v1066, %v2332
        %v2334 = vpop.f32.mrf.mxu0
        %v2335 = vadd.f32 %v1071, %v2334
        %2336 = vmatmul.bf16.gmra.mxu0 %v2009
        %v2337 = vpop.f32.mrf.mxu0
        %v2338 = vadd.f32 %v1076, %v2337
        %v2339 = vpop.f32.mrf.mxu0
        %v2340 = vadd.f32 %v1081, %v2339
        %2341 = vmatmul.bf16.gmra.mxu0 %v2012
        %v2342 = vpop.f32.mrf.mxu0
        %v2343 = vadd.f32 %v1086, %v2342
        %v2344 = vpop.f32.mrf.mxu0
        %v2345 = vadd.f32 %v1091, %v2344
        %2346 = vmatmul.bf16.gmra.mxu0 %v2015
        %v2347 = vpop.f32.mrf.mxu0
        %v2348 = vadd.f32 %v1096, %v2347
        %v2349 = vpop.f32.mrf.mxu0
        %v2350 = vadd.f32 %v1101, %v2349
        %2351 = vmatmul.bf16.gmra.mxu0 %v2018
        %v2352 = vpop.f32.mrf.mxu0
        %v2353 = vadd.f32 %v1106, %v2352
        %v2354 = vpop.f32.mrf.mxu0
        %v2355 = vadd.f32 %v1111, %v2354
        %2356 = vmatmul.bf16.gmra.mxu0 %v2021
        %v2357 = vpop.f32.mrf.mxu0
        %v2358 = vadd.f32 %v1116, %v2357
        %v2359 = vpop.f32.mrf.mxu0
        %v2360 = vadd.f32 %v1121, %v2359
        %2361 = vmatmul.bf16.gmra.mxu0 %v2024
        %v2362 = vpop.f32.mrf.mxu0
        %v2363 = vadd.f32 %v1126, %v2362
        %v2364 = vpop.f32.mrf.mxu0
        %v2365 = vadd.f32 %v1131, %v2364
        %2366 = vmatmul.bf16.gmra.mxu0 %v2027
        %v2367 = vpop.f32.mrf.mxu0
        %v2368 = vadd.f32 %v1136, %v2367
        %v2369 = vpop.f32.mrf.mxu0
        %v2370 = vadd.f32 %v1141, %v2369
        %2371 = vmatmul.bf16.gmra.mxu0 %v2030
        %v2372 = vpop.f32.mrf.mxu0
        %v2373 = vadd.f32 %v1146, %v2372
        %v2374 = vpop.f32.mrf.mxu0
        %v2375 = vadd.f32 %v1151, %v2374
        %2376 = vmatmul.bf16.gmra.mxu0 %v2033
        %v2377 = vpop.f32.mrf.mxu0
        %v2378 = vadd.f32 %v1156, %v2377
        %v2379 = vpop.f32.mrf.mxu0
        %v2380 = vadd.f32 %v1161, %v2379
        %2381 = vmatmul.bf16.gmra.mxu0 %v2036
        %v2382 = vpop.f32.mrf.mxu0
        %v2383 = vadd.f32 %v1166, %v2382
        %v2384 = vpop.f32.mrf.mxu0
        %v2385 = vadd.f32 %v1171, %v2384
        %2386 = vmatmul.bf16.gmra.mxu0 %v2039
        %v2387 = vpop.f32.mrf.mxu0
        %v2388 = vadd.f32 %v1176, %v2387
        %v2389 = vpop.f32.mrf.mxu0
        %v2390 = vadd.f32 %v1181, %v2389
        %2391 = vmatmul.bf16.gmra.mxu0 %v2042
        %v2392 = vpop.f32.mrf.mxu0
        %v2393 = vadd.f32 %v1186, %v2392
        %v2394 = vpop.f32.mrf.mxu0
        %v2395 = vadd.f32 %v1191, %v2394
        %2396 = vmatmul.bf16.gmra.mxu0 %v2045
        %v2397 = vpop.f32.mrf.mxu0
        %v2398 = vadd.f32 %v1196, %v2397
        %v2399 = vpop.f32.mrf.mxu0
        %v2400 = vadd.f32 %v1201, %v2399
        %2401 = vmatmul.bf16.gmra.mxu0 %v2048
        %v2402 = vpop.f32.mrf.mxu0
        %v2403 = vadd.f32 %v1206, %v2402
        %v2404 = vpop.f32.mrf.mxu0
        %v2405 = vadd.f32 %v1211, %v2404
        %2406 = vmatmul.bf16.gmra.mxu0 %v2051
        %v2407 = vpop.f32.mrf.mxu0
        %v2408 = vadd.f32 %v1216, %v2407
        %v2409 = vpop.f32.mrf.mxu0
        %v2410 = vadd.f32 %v1221, %v2409
        %2411 = vmatmul.bf16.gmra.mxu0 %v2054
        %v2412 = vpop.f32.mrf.mxu0
        %v2413 = vadd.f32 %v1226, %v2412
        %v2414 = vpop.f32.mrf.mxu0
        %v2415 = vadd.f32 %v1231, %v2414
        %2416 = vmatmul.bf16.gmra.mxu0 %v2057
        %v2417 = vpop.f32.mrf.mxu0
        %v2418 = vadd.f32 %v1236, %v2417
        %v2419 = vpop.f32.mrf.mxu0
        %v2420 = vadd.f32 %v1241, %v2419
        %2421 = vmatmul.bf16.gmra.mxu0 %v2060
        %v2422 = vpop.f32.mrf.mxu0
        %v2423 = vadd.f32 %v1246, %v2422
        %v2424 = vpop.f32.mrf.mxu0
        %v2425 = vadd.f32 %v1251, %v2424
        %2426 = vmatmul.bf16.gmra.mxu0 %v2063
        %v2427 = vpop.f32.mrf.mxu0
        %v2428 = vadd.f32 %v1256, %v2427
        %v2429 = vpop.f32.mrf.mxu0
        %v2430 = vadd.f32 %v1261, %v2429
        %2431 = vmatmul.bf16.gmra.mxu0 %v2066
        %v2432 = vpop.f32.mrf.mxu0
        %v2433 = vadd.f32 %v1266, %v2432
        %v2434 = vpop.f32.mrf.mxu0
        %v2435 = vadd.f32 %v1271, %v2434
        %2436 = vmatmul.bf16.gmra.mxu0 %v2069
        %v2437 = vpop.f32.mrf.mxu0
        %v2438 = vadd.f32 %v1276, %v2437
        %v2439 = vpop.f32.mrf.mxu0
        %v2440 = vadd.f32 %v1281, %v2439
        %2441 = vmatmul.bf16.gmra.mxu0 %v2072
        %v2442 = vpop.f32.mrf.mxu0
        %v2443 = vadd.f32 %v1286, %v2442
        %v2444 = vpop.f32.mrf.mxu0
        %v2445 = vadd.f32 %v1291, %v2444
        %2446 = vmatmul.bf16.gmra.mxu0 %v2075
        %v2447 = vpop.f32.mrf.mxu0
        %v2448 = vadd.f32 %v1296, %v2447
        %v2449 = vpop.f32.mrf.mxu0
        %v2450 = vadd.f32 %v1301, %v2449
        %2451 = vmatmul.bf16.gmra.mxu0 %v2078
        %v2452 = vpop.f32.mrf.mxu0
        %v2453 = vadd.f32 %v1306, %v2452
        %v2454 = vpop.f32.mrf.mxu0
        %v2455 = vadd.f32 %v1311, %v2454
        %2456 = vmatmul.bf16.gmra.mxu0 %v2081
        %v2457 = vpop.f32.mrf.mxu0
        %v2458 = vadd.f32 %v1316, %v2457
        %v2459 = vpop.f32.mrf.mxu0
        %v2460 = vadd.f32 %v1321, %v2459
        %2461 = vmatmul.bf16.gmra.mxu0 %v2084
        %v2462 = vpop.f32.mrf.mxu0
        %v2463 = vadd.f32 %v1326, %v2462
        %v2464 = vpop.f32.mrf.mxu0
        %v2465 = vadd.f32 %v1331, %v2464
        %2466 = vmatmul.bf16.gmra.mxu0 %v2087
        %v2467 = vpop.f32.mrf.mxu0
        %v2468 = vadd.f32 %v1336, %v2467
        %v2469 = vpop.f32.mrf.mxu0
        %v2470 = vadd.f32 %v1341, %v2469
        %2471 = vmatmul.bf16.gmra.mxu0 %v2090
        %v2472 = vpop.f32.mrf.mxu0
        %v2473 = vadd.f32 %v1346, %v2472
        %v2474 = vpop.f32.mrf.mxu0
        %v2475 = vadd.f32 %v1351, %v2474
        %2476 = vmatmul.bf16.gmra.mxu0 %v2093
        %v2477 = vpop.f32.mrf.mxu0
        %v2478 = vadd.f32 %v1356, %v2477
        %v2479 = vpop.f32.mrf.mxu0
        %v2480 = vadd.f32 %v1361, %v2479
        %2481 = vmatmul.bf16.gmra.mxu0 %v2096
        %v2482 = vpop.f32.mrf.mxu0
        %v2483 = vadd.f32 %v1366, %v2482
        %v2484 = vpop.f32.mrf.mxu0
        %v2485 = vadd.f32 %v1371, %v2484
        %2486 = vmatmul.bf16.gmra.mxu0 %v2099
        %v2487 = vpop.f32.mrf.mxu0
        %v2488 = vadd.f32 %v1376, %v2487
        %v2489 = vpop.f32.mrf.mxu0
        %v2490 = vadd.f32 %v1381, %v2489
        %2491 = vmatmul.bf16.gmra.mxu0 %v2102
        %v2492 = vpop.f32.mrf.mxu0
        %v2493 = vadd.f32 %v1386, %v2492
        %v2494 = vpop.f32.mrf.mxu0
        %v2495 = vadd.f32 %v1391, %v2494
        %2496 = vmatmul.bf16.gmra.mxu0 %v2105
        %v2497 = vpop.f32.mrf.mxu0
        %v2498 = vadd.f32 %v1396, %v2497
        %v2499 = vpop.f32.mrf.mxu0
        %v2500 = vadd.f32 %v1401, %v2499
        %2501 = vmatmul.bf16.gmra.mxu0 %v2108
        %v2502 = vpop.f32.mrf.mxu0
        %v2503 = vadd.f32 %v1406, %v2502
        %v2504 = vpop.f32.mrf.mxu0
        %v2505 = vadd.f32 %v1411, %v2504
        %2506 = vmatmul.bf16.gmra.mxu0 %v2111
        %v2507 = vpop.f32.mrf.mxu0
        %v2508 = vadd.f32 %v1416, %v2507
        %v2509 = vpop.f32.mrf.mxu0
        %v2510 = vadd.f32 %v1421, %v2509
        %2511 = vmatmul.bf16.gmra.mxu0 %v2114
        %v2512 = vpop.f32.mrf.mxu0
        %v2513 = vadd.f32 %v1426, %v2512
        %v2514 = vpop.f32.mrf.mxu0
        %v2515 = vadd.f32 %v1431, %v2514
        %2516 = vmatmul.bf16.gmra.mxu0 %v2117
        %v2517 = vpop.f32.mrf.mxu0
        %v2518 = vadd.f32 %v1436, %v2517
        %v2519 = vpop.f32.mrf.mxu0
        %v2520 = vadd.f32 %v1441, %v2519
        %2521 = vmatmul.bf16.gmra.mxu0 %v2120
        %v2522 = vpop.f32.mrf.mxu0
        %v2523 = vadd.f32 %v1446, %v2522
        %v2524 = vpop.f32.mrf.mxu0
        %v2525 = vadd.f32 %v1451, %v2524
        %2526 = vmatmul.bf16.gmra.mxu0 %v2123
        %v2527 = vpop.f32.mrf.mxu0
        %v2528 = vadd.f32 %v1456, %v2527
        %v2529 = vpop.f32.mrf.mxu0
        %v2530 = vadd.f32 %v1461, %v2529
        %2531 = vmatmul.bf16.gmra.mxu0 %v2126
        %v2532 = vpop.f32.mrf.mxu0
        %v2533 = vadd.f32 %v1466, %v2532
        %v2534 = vpop.f32.mrf.mxu0
        %v2535 = vadd.f32 %v1471, %v2534
        %2536 = vmatmul.bf16.gmra.mxu0 %v2129
        %v2537 = vpop.f32.mrf.mxu0
        %v2538 = vadd.f32 %v1476, %v2537
        %v2539 = vpop.f32.mrf.mxu0
        %v2540 = vadd.f32 %v1481, %v2539
        %2541 = vmatmul.bf16.gmra.mxu0 %v2132
        %v2542 = vpop.f32.mrf.mxu0
        %v2543 = vadd.f32 %v1486, %v2542
        %v2544 = vpop.f32.mrf.mxu0
        %v2545 = vadd.f32 %v1491, %v2544
        %2546 = vdwg.mxu0
        %v2547 = vmul.f32 %v2148, 0.5
        %v2548 = vmul.f32 %v2150, 0.5
        %v2549 = vmul.f32 %v2153, 0.5
        %v2550 = vmul.f32 %v2155, 0.5
        %v2551 = vmul.f32 %v2158, 0.5
        %v2552 = vmul.f32 %v2160, 0.5
        %v2553 = vmul.f32 %v2163, 0.5
        %v2554 = vmul.f32 %v2165, 0.5
        %v2555 = vmul.f32 %v2168, 0.5
        %v2556 = vmul.f32 %v2170, 0.5
        %v2557 = vmul.f32 %v2173, 0.5
        %v2558 = vmul.f32 %v2175, 0.5
        %v2559 = vmul.f32 %v2178, 0.5
        %v2560 = vmul.f32 %v2180, 0.5
        %v2561 = vmul.f32 %v2183, 0.5
        %v2562 = vmul.f32 %v2185, 0.5
        %v2563 = vmul.f32 %v2188, 0.5
        %v2564 = vmul.f32 %v2190, 0.5
        %v2565 = vmul.f32 %v2193, 0.5
        %v2566 = vmul.f32 %v2195, 0.5
        %v2567 = vmul.f32 %v2198, 0.5
        %v2568 = vmul.f32 %v2200, 0.5
        %v2569 = vmul.f32 %v2203, 0.5
        %v2570 = vmul.f32 %v2205, 0.5
        %v2571 = vmul.f32 %v2208, 0.5
        %v2572 = vmul.f32 %v2210, 0.5
        %v2573 = vmul.f32 %v2213, 0.5
        %v2574 = vmul.f32 %v2215, 0.5
        %v2575 = vmul.f32 %v2218, 0.5
        %v2576 = vmul.f32 %v2220, 0.5
        %v2577 = vmul.f32 %v2223, 0.5
        %v2578 = vmul.f32 %v2225, 0.5
        %v2579 = vmul.f32 %v2228, 0.5
        %v2580 = vmul.f32 %v2230, 0.5
        %v2581 = vmul.f32 %v2233, 0.5
        %v2582 = vmul.f32 %v2235, 0.5
        %v2583 = vmul.f32 %v2238, 0.5
        %v2584 = vmul.f32 %v2240, 0.5
        %v2585 = vmul.f32 %v2243, 0.5
        %v2586 = vmul.f32 %v2245, 0.5
        %v2587 = vmul.f32 %v2248, 0.5
        %v2588 = vmul.f32 %v2250, 0.5
        %v2589 = vmul.f32 %v2253, 0.5
        %v2590 = vmul.f32 %v2255, 0.5
        %v2591 = vmul.f32 %v2258, 0.5
        %v2592 = vmul.f32 %v2260, 0.5
        %v2593 = vmul.f32 %v2263, 0.5
        %v2594 = vmul.f32 %v2265, 0.5
        %v2595 = vmul.f32 %v2268, 0.5
        %v2596 = vmul.f32 %v2270, 0.5
        %v2597 = vmul.f32 %v2273, 0.5
        %v2598 = vmul.f32 %v2275, 0.5
        %v2599 = vmul.f32 %v2278, 0.5
        %v2600 = vmul.f32 %v2280, 0.5
        %v2601 = vmul.f32 %v2283, 0.5
        %v2602 = vmul.f32 %v2285, 0.5
        %v2603 = vmul.f32 %v2288, 0.5
        %v2604 = vmul.f32 %v2290, 0.5
        %v2605 = vmul.f32 %v2293, 0.5
        %v2606 = vmul.f32 %v2295, 0.5
        %v2607 = vmul.f32 %v2298, 0.5
        %v2608 = vmul.f32 %v2300, 0.5
        %v2609 = vmul.f32 %v2303, 0.5
        %v2610 = vmul.f32 %v2305, 0.5
        %v2611 = vmul.f32 %v2308, 0.5
        %v2612 = vmul.f32 %v2310, 0.5
        %v2613 = vmul.f32 %v2313, 0.5
        %v2614 = vmul.f32 %v2315, 0.5
        %v2615 = vmul.f32 %v2318, 0.5
        %v2616 = vmul.f32 %v2320, 0.5
        %v2617 = vmul.f32 %v2323, 0.5
        %v2618 = vmul.f32 %v2325, 0.5
        %v2619 = vmul.f32 %v2328, 0.5
        %v2620 = vmul.f32 %v2330, 0.5
        %v2621 = vmul.f32 %v2333, 0.5
        %v2622 = vmul.f32 %v2335, 0.5
        %v2623 = vmul.f32 %v2338, 0.5
        %v2624 = vmul.f32 %v2340, 0.5
        %v2625 = vmul.f32 %v2343, 0.5
        %v2626 = vmul.f32 %v2345, 0.5
        %v2627 = vmul.f32 %v2348, 0.5
        %v2628 = vmul.f32 %v2350, 0.5
        %v2629 = vmul.f32 %v2353, 0.5
        %v2630 = vmul.f32 %v2355, 0.5
        %v2631 = vmul.f32 %v2358, 0.5
        %v2632 = vmul.f32 %v2360, 0.5
        %v2633 = vmul.f32 %v2363, 0.5
        %v2634 = vmul.f32 %v2365, 0.5
        %v2635 = vmul.f32 %v2368, 0.5
        %v2636 = vmul.f32 %v2370, 0.5
        %v2637 = vmul.f32 %v2373, 0.5
        %v2638 = vmul.f32 %v2375, 0.5
        %v2639 = vmul.f32 %v2378, 0.5
        %v2640 = vmul.f32 %v2380, 0.5
        %v2641 = vmul.f32 %v2383, 0.5
        %v2642 = vmul.f32 %v2385, 0.5
        %v2643 = vmul.f32 %v2388, 0.5
        %v2644 = vmul.f32 %v2390, 0.5
        %v2645 = vmul.f32 %v2393, 0.5
        %v2646 = vmul.f32 %v2395, 0.5
        %v2647 = vmul.f32 %v2398, 0.5
        %v2648 = vmul.f32 %v2400, 0.5
        %v2649 = vmul.f32 %v2403, 0.5
        %v2650 = vmul.f32 %v2405, 0.5
        %v2651 = vmul.f32 %v2408, 0.5
        %v2652 = vmul.f32 %v2410, 0.5
        %v2653 = vmul.f32 %v2413, 0.5
        %v2654 = vmul.f32 %v2415, 0.5
        %v2655 = vmul.f32 %v2418, 0.5
        %v2656 = vmul.f32 %v2420, 0.5
        %v2657 = vmul.f32 %v2423, 0.5
        %v2658 = vmul.f32 %v2425, 0.5
        %v2659 = vmul.f32 %v2428, 0.5
        %v2660 = vmul.f32 %v2430, 0.5
        %v2661 = vmul.f32 %v2433, 0.5
        %v2662 = vmul.f32 %v2435, 0.5
        %v2663 = vmul.f32 %v2438, 0.5
        %v2664 = vmul.f32 %v2440, 0.5
        %v2665 = vmul.f32 %v2443, 0.5
        %v2666 = vmul.f32 %v2445, 0.5
        %v2667 = vmul.f32 %v2448, 0.5
        %v2668 = vmul.f32 %v2450, 0.5
        %v2669 = vmul.f32 %v2453, 0.5
        %v2670 = vmul.f32 %v2455, 0.5
        %v2671 = vmul.f32 %v2458, 0.5
        %v2672 = vmul.f32 %v2460, 0.5
        %v2673 = vmul.f32 %v2463, 0.5
        %v2674 = vmul.f32 %v2465, 0.5
        %v2675 = vmul.f32 %v2468, 0.5
        %v2676 = vmul.f32 %v2470, 0.5
        %v2677 = vmul.f32 %v2473, 0.5
        %v2678 = vmul.f32 %v2475, 0.5
        %v2679 = vmul.f32 %v2478, 0.5
        %v2680 = vmul.f32 %v2480, 0.5
        %v2681 = vmul.f32 %v2483, 0.5
        %v2682 = vmul.f32 %v2485, 0.5
        %v2683 = vmul.f32 %v2488, 0.5
        %v2684 = vmul.f32 %v2490, 0.5
        %v2685 = vmul.f32 %v2493, 0.5
        %v2686 = vmul.f32 %v2495, 0.5
        %v2687 = vmul.f32 %v2498, 0.5
        %v2688 = vmul.f32 %v2500, 0.5
        %v2689 = vmul.f32 %v2503, 0.5
        %v2690 = vmul.f32 %v2505, 0.5
        %v2691 = vmul.f32 %v2508, 0.5
        %v2692 = vmul.f32 %v2510, 0.5
        %v2693 = vmul.f32 %v2513, 0.5
        %v2694 = vmul.f32 %v2515, 0.5
        %v2695 = vmul.f32 %v2518, 0.5
        %v2696 = vmul.f32 %v2520, 0.5
        %v2697 = vmul.f32 %v2523, 0.5
        %v2698 = vmul.f32 %v2525, 0.5
        %v2699 = vmul.f32 %v2528, 0.5
        %v2700 = vmul.f32 %v2530, 0.5
        %v2701 = vmul.f32 %v2533, 0.5
        %v2702 = vmul.f32 %v2535, 0.5
        %v2703 = vmul.f32 %v2538, 0.5
        %v2704 = vmul.f32 %v2540, 0.5
        %v2705 = vmul.f32 %v2543, 0.5
        %v2706 = vmul.f32 %v2545, 0.5
        %v2707 = vtanh.pop %v2547
        %v2708 = vtanh.pop %v2548
        %v2709 = vtanh.pop %v2549
        %v2710 = vtanh.pop %v2550
        %v2711 = vtanh.pop %v2551
        %v2712 = vtanh.pop %v2552
        %v2713 = vtanh.pop %v2553
        %v2714 = vtanh.pop %v2554
        %v2715 = vtanh.pop %v2555
        %v2716 = vtanh.pop %v2556
        %v2717 = vtanh.pop %v2557
        %v2718 = vtanh.pop %v2558
        %v2719 = vtanh.pop %v2559
        %v2720 = vtanh.pop %v2560
        %v2721 = vtanh.pop %v2561
        %v2722 = vtanh.pop %v2562
        %v2723 = vtanh.pop %v2563
        %v2724 = vtanh.pop %v2564
        %v2725 = vtanh.pop %v2565
        %v2726 = vtanh.pop %v2566
        %v2727 = vtanh.pop %v2567
        %v2728 = vtanh.pop %v2568
        %v2729 = vtanh.pop %v2569
        %v2730 = vtanh.pop %v2570
        %v2731 = vtanh.pop %v2571
        %v2732 = vtanh.pop %v2572
        %v2733 = vtanh.pop %v2573
        %v2734 = vtanh.pop %v2574
        %v2735 = vtanh.pop %v2575
        %v2736 = vtanh.pop %v2576
        %v2737 = vtanh.pop %v2577
        %v2738 = vtanh.pop %v2578
        %v2739 = vtanh.pop %v2579
        %v2740 = vtanh.pop %v2580
        %v2741 = vtanh.pop %v2581
        %v2742 = vtanh.pop %v2582
        %v2743 = vtanh.pop %v2583
        %v2744 = vtanh.pop %v2584
        %v2745 = vtanh.pop %v2585
        %v2746 = vtanh.pop %v2586
        %v2747 = vtanh.pop %v2587
        %v2748 = vtanh.pop %v2588
        %v2749 = vtanh.pop %v2589
        %v2750 = vtanh.pop %v2590
        %v2751 = vtanh.pop %v2591
        %v2752 = vtanh.pop %v2592
        %v2753 = vtanh.pop %v2593
        %v2754 = vtanh.pop %v2594
        %v2755 = vtanh.pop %v2595
        %v2756 = vtanh.pop %v2596
        %v2757 = vtanh.pop %v2597
        %v2758 = vtanh.pop %v2598
        %v2759 = vtanh.pop %v2599
        %v2760 = vtanh.pop %v2600
        %v2761 = vtanh.pop %v2601
        %v2762 = vtanh.pop %v2602
        %v2763 = vtanh.pop %v2603
        %v2764 = vtanh.pop %v2604
        %v2765 = vtanh.pop %v2605
        %v2766 = vtanh.pop %v2606
        %v2767 = vtanh.pop %v2607
        %v2768 = vtanh.pop %v2608
        %v2769 = vtanh.pop %v2609
        %v2770 = vtanh.pop %v2610
        %v2771 = vtanh.pop %v2611
        %v2772 = vtanh.pop %v2612
        %v2773 = vtanh.pop %v2613
        %v2774 = vtanh.pop %v2614
        %v2775 = vtanh.pop %v2615
        %v2776 = vtanh.pop %v2616
        %v2777 = vtanh.pop %v2617
        %v2778 = vtanh.pop %v2618
        %v2779 = vtanh.pop %v2619
        %v2780 = vtanh.pop %v2620
        %v2781 = vtanh.pop %v2621
        %v2782 = vtanh.pop %v2622
        %v2783 = vtanh.pop %v2623
        %v2784 = vtanh.pop %v2624
        %v2785 = vtanh.pop %v2625
        %v2786 = vtanh.pop %v2626
        %v2787 = vtanh.pop %v2627
        %v2788 = vtanh.pop %v2628
        %v2789 = vtanh.pop %v2629
        %v2790 = vtanh.pop %v2630
        %v2791 = vtanh.pop %v2631
        %v2792 = vtanh.pop %v2632
        %v2793 = vtanh.pop %v2633
        %v2794 = vtanh.pop %v2634
        %v2795 = vtanh.pop %v2635
        %v2796 = vtanh.pop %v2636
        %v2797 = vtanh.pop %v2637
        %v2798 = vtanh.pop %v2638
        %v2799 = vtanh.pop %v2639
        %v2800 = vtanh.pop %v2640
        %v2801 = vtanh.pop %v2641
        %v2802 = vtanh.pop %v2642
        %v2803 = vtanh.pop %v2643
        %v2804 = vtanh.pop %v2644
        %v2805 = vtanh.pop %v2645
        %v2806 = vtanh.pop %v2646
        %v2807 = vtanh.pop %v2647
        %v2808 = vtanh.pop %v2648
        %v2809 = vtanh.pop %v2649
        %v2810 = vtanh.pop %v2650
        %v2811 = vtanh.pop %v2651
        %v2812 = vtanh.pop %v2652
        %v2813 = vtanh.pop %v2653
        %v2814 = vtanh.pop %v2654
        %v2815 = vtanh.pop %v2655
        %v2816 = vtanh.pop %v2656
        %v2817 = vtanh.pop %v2657
        %v2818 = vtanh.pop %v2658
        %v2819 = vtanh.pop %v2659
        %v2820 = vtanh.pop %v2660
        %v2821 = vtanh.pop %v2661
        %v2822 = vtanh.pop %v2662
        %v2823 = vtanh.pop %v2663
        %v2824 = vtanh.pop %v2664
        %v2825 = vtanh.pop %v2665
        %v2826 = vtanh.pop %v2666
        %v2827 = vtanh.pop %v2667
        %v2828 = vtanh.pop %v2668
        %v2829 = vtanh.pop %v2669
        %v2830 = vtanh.pop %v2670
        %v2831 = vtanh.pop %v2671
        %v2832 = vtanh.pop %v2672
        %v2833 = vtanh.pop %v2673
        %v2834 = vtanh.pop %v2674
        %v2835 = vtanh.pop %v2675
        %v2836 = vtanh.pop %v2676
        %v2837 = vtanh.pop %v2677
        %v2838 = vtanh.pop %v2678
        %v2839 = vtanh.pop %v2679
        %v2840 = vtanh.pop %v2680
        %v2841 = vtanh.pop %v2681
        %v2842 = vtanh.pop %v2682
        %v2843 = vtanh.pop %v2683
        %v2844 = vtanh.pop %v2684
        %v2845 = vtanh.pop %v2685
        %v2846 = vtanh.pop %v2686
        %v2847 = vtanh.pop %v2687
        %v2848 = vtanh.pop %v2688
        %v2849 = vtanh.pop %v2689
        %v2850 = vtanh.pop %v2690
        %v2851 = vtanh.pop %v2691
        %v2852 = vtanh.pop %v2692
        %v2853 = vtanh.pop %v2693
        %v2854 = vtanh.pop %v2694
        %v2855 = vtanh.pop %v2695
        %v2856 = vtanh.pop %v2696
        %v2857 = vtanh.pop %v2697
        %v2858 = vtanh.pop %v2698
        %v2859 = vtanh.pop %v2699
        %v2860 = vtanh.pop %v2700
        %v2861 = vtanh.pop %v2701
        %v2862 = vtanh.pop %v2702
        %v2863 = vtanh.pop %v2703
        %v2864 = vtanh.pop %v2704
        %v2865 = vtanh.pop %v2705
        %v2866 = vtanh.pop %v2706
        %v2867 = vmul.f32 %v2707, 0.5
        %v2868 = vmul.f32 %v2708, 0.5
        %v2869 = vmul.f32 %v2709, 0.5
        %v2870 = vmul.f32 %v2710, 0.5
        %v2871 = vmul.f32 %v2711, 0.5
        %v2872 = vmul.f32 %v2712, 0.5
        %v2873 = vmul.f32 %v2713, 0.5
        %v2874 = vmul.f32 %v2714, 0.5
        %v2875 = vmul.f32 %v2715, 0.5
        %v2876 = vmul.f32 %v2716, 0.5
        %v2877 = vmul.f32 %v2717, 0.5
        %v2878 = vmul.f32 %v2718, 0.5
        %v2879 = vmul.f32 %v2719, 0.5
        %v2880 = vmul.f32 %v2720, 0.5
        %v2881 = vmul.f32 %v2721, 0.5
        %v2882 = vmul.f32 %v2722, 0.5
        %v2883 = vmul.f32 %v2723, 0.5
        %v2884 = vmul.f32 %v2724, 0.5
        %v2885 = vmul.f32 %v2725, 0.5
        %v2886 = vmul.f32 %v2726, 0.5
        %v2887 = vmul.f32 %v2727, 0.5
        %v2888 = vmul.f32 %v2728, 0.5
        %v2889 = vmul.f32 %v2729, 0.5
        %v2890 = vmul.f32 %v2730, 0.5
        %v2891 = vmul.f32 %v2731, 0.5
        %v2892 = vmul.f32 %v2732, 0.5
        %v2893 = vmul.f32 %v2733, 0.5
        %v2894 = vmul.f32 %v2734, 0.5
        %v2895 = vmul.f32 %v2735, 0.5
        %v2896 = vmul.f32 %v2736, 0.5
        %v2897 = vmul.f32 %v2737, 0.5
        %v2898 = vmul.f32 %v2738, 0.5
        %v2899 = vmul.f32 %v2739, 0.5
        %v2900 = vmul.f32 %v2740, 0.5
        %v2901 = vmul.f32 %v2741, 0.5
        %v2902 = vmul.f32 %v2742, 0.5
        %v2903 = vmul.f32 %v2743, 0.5
        %v2904 = vmul.f32 %v2744, 0.5
        %v2905 = vmul.f32 %v2745, 0.5
        %v2906 = vmul.f32 %v2746, 0.5
        %v2907 = vmul.f32 %v2747, 0.5
        %v2908 = vmul.f32 %v2748, 0.5
        %v2909 = vmul.f32 %v2749, 0.5
        %v2910 = vmul.f32 %v2750, 0.5
        %v2911 = vmul.f32 %v2751, 0.5
        %v2912 = vmul.f32 %v2752, 0.5
        %v2913 = vmul.f32 %v2753, 0.5
        %v2914 = vmul.f32 %v2754, 0.5
        %v2915 = vmul.f32 %v2755, 0.5
        %v2916 = vmul.f32 %v2756, 0.5
        %v2917 = vmul.f32 %v2757, 0.5
        %v2918 = vmul.f32 %v2758, 0.5
        %v2919 = vmul.f32 %v2759, 0.5
        %v2920 = vmul.f32 %v2760, 0.5
        %v2921 = vmul.f32 %v2761, 0.5
        %v2922 = vmul.f32 %v2762, 0.5
        %v2923 = vmul.f32 %v2763, 0.5
        %v2924 = vmul.f32 %v2764, 0.5
        %v2925 = vmul.f32 %v2765, 0.5
        %v2926 = vmul.f32 %v2766, 0.5
        %v2927 = vmul.f32 %v2767, 0.5
        %v2928 = vmul.f32 %v2768, 0.5
        %v2929 = vmul.f32 %v2769, 0.5
        %v2930 = vmul.f32 %v2770, 0.5
        %v2931 = vmul.f32 %v2771, 0.5
        %v2932 = vmul.f32 %v2772, 0.5
        %v2933 = vmul.f32 %v2773, 0.5
        %v2934 = vmul.f32 %v2774, 0.5
        %v2935 = vmul.f32 %v2775, 0.5
        %v2936 = vmul.f32 %v2776, 0.5
        %v2937 = vmul.f32 %v2777, 0.5
        %v2938 = vmul.f32 %v2778, 0.5
        %v2939 = vmul.f32 %v2779, 0.5
        %v2940 = vmul.f32 %v2780, 0.5
        %v2941 = vmul.f32 %v2781, 0.5
        %v2942 = vmul.f32 %v2782, 0.5
        %v2943 = vmul.f32 %v2783, 0.5
        %v2944 = vmul.f32 %v2784, 0.5
        %v2945 = vmul.f32 %v2785, 0.5
        %v2946 = vmul.f32 %v2786, 0.5
        %v2947 = vmul.f32 %v2787, 0.5
        %v2948 = vmul.f32 %v2788, 0.5
        %v2949 = vmul.f32 %v2789, 0.5
        %v2950 = vmul.f32 %v2790, 0.5
        %v2951 = vmul.f32 %v2791, 0.5
        %v2952 = vmul.f32 %v2792, 0.5
        %v2953 = vmul.f32 %v2793, 0.5
        %v2954 = vmul.f32 %v2794, 0.5
        %v2955 = vmul.f32 %v2795, 0.5
        %v2956 = vmul.f32 %v2796, 0.5
        %v2957 = vmul.f32 %v2797, 0.5
        %v2958 = vmul.f32 %v2798, 0.5
        %v2959 = vmul.f32 %v2799, 0.5
        %v2960 = vmul.f32 %v2800, 0.5
        %v2961 = vmul.f32 %v2801, 0.5
        %v2962 = vmul.f32 %v2802, 0.5
        %v2963 = vmul.f32 %v2803, 0.5
        %v2964 = vmul.f32 %v2804, 0.5
        %v2965 = vmul.f32 %v2805, 0.5
        %v2966 = vmul.f32 %v2806, 0.5
        %v2967 = vmul.f32 %v2807, 0.5
        %v2968 = vmul.f32 %v2808, 0.5
        %v2969 = vmul.f32 %v2809, 0.5
        %v2970 = vmul.f32 %v2810, 0.5
        %v2971 = vmul.f32 %v2811, 0.5
        %v2972 = vmul.f32 %v2812, 0.5
        %v2973 = vmul.f32 %v2813, 0.5
        %v2974 = vmul.f32 %v2814, 0.5
        %v2975 = vmul.f32 %v2815, 0.5
        %v2976 = vmul.f32 %v2816, 0.5
        %v2977 = vmul.f32 %v2817, 0.5
        %v2978 = vmul.f32 %v2818, 0.5
        %v2979 = vmul.f32 %v2819, 0.5
        %v2980 = vmul.f32 %v2820, 0.5
        %v2981 = vmul.f32 %v2821, 0.5
        %v2982 = vmul.f32 %v2822, 0.5
        %v2983 = vmul.f32 %v2823, 0.5
        %v2984 = vmul.f32 %v2824, 0.5
        %v2985 = vmul.f32 %v2825, 0.5
        %v2986 = vmul.f32 %v2826, 0.5
        %v2987 = vmul.f32 %v2827, 0.5
        %v2988 = vmul.f32 %v2828, 0.5
        %v2989 = vmul.f32 %v2829, 0.5
        %v2990 = vmul.f32 %v2830, 0.5
        %v2991 = vmul.f32 %v2831, 0.5
        %v2992 = vmul.f32 %v2832, 0.5
        %v2993 = vmul.f32 %v2833, 0.5
        %v2994 = vmul.f32 %v2834, 0.5
        %v2995 = vmul.f32 %v2835, 0.5
        %v2996 = vmul.f32 %v2836, 0.5
        %v2997 = vmul.f32 %v2837, 0.5
        %v2998 = vmul.f32 %v2838, 0.5
        %v2999 = vmul.f32 %v2839, 0.5
        %v3000 = vmul.f32 %v2840, 0.5
        %v3001 = vmul.f32 %v2841, 0.5
        %v3002 = vmul.f32 %v2842, 0.5
        %v3003 = vmul.f32 %v2843, 0.5
        %v3004 = vmul.f32 %v2844, 0.5
        %v3005 = vmul.f32 %v2845, 0.5
        %v3006 = vmul.f32 %v2846, 0.5
        %v3007 = vmul.f32 %v2847, 0.5
        %v3008 = vmul.f32 %v2848, 0.5
        %v3009 = vmul.f32 %v2849, 0.5
        %v3010 = vmul.f32 %v2850, 0.5
        %v3011 = vmul.f32 %v2851, 0.5
        %v3012 = vmul.f32 %v2852, 0.5
        %v3013 = vmul.f32 %v2853, 0.5
        %v3014 = vmul.f32 %v2854, 0.5
        %v3015 = vmul.f32 %v2855, 0.5
        %v3016 = vmul.f32 %v2856, 0.5
        %v3017 = vmul.f32 %v2857, 0.5
        %v3018 = vmul.f32 %v2858, 0.5
        %v3019 = vmul.f32 %v2859, 0.5
        %v3020 = vmul.f32 %v2860, 0.5
        %v3021 = vmul.f32 %v2861, 0.5
        %v3022 = vmul.f32 %v2862, 0.5
        %v3023 = vmul.f32 %v2863, 0.5
        %v3024 = vmul.f32 %v2864, 0.5
        %v3025 = vmul.f32 %v2865, 0.5
        %v3026 = vmul.f32 %v2866, 0.5
        %v3027 = vadd.f32 %v2867, 0.5
        %v3028 = vadd.f32 %v2868, 0.5
        %v3029 = vadd.f32 %v2869, 0.5
        %v3030 = vadd.f32 %v2870, 0.5
        %v3031 = vadd.f32 %v2871, 0.5
        %v3032 = vadd.f32 %v2872, 0.5
        %v3033 = vadd.f32 %v2873, 0.5
        %v3034 = vadd.f32 %v2874, 0.5
        %v3035 = vadd.f32 %v2875, 0.5
        %v3036 = vadd.f32 %v2876, 0.5
        %v3037 = vadd.f32 %v2877, 0.5
        %v3038 = vadd.f32 %v2878, 0.5
        %v3039 = vadd.f32 %v2879, 0.5
        %v3040 = vadd.f32 %v2880, 0.5
        %v3041 = vadd.f32 %v2881, 0.5
        %v3042 = vadd.f32 %v2882, 0.5
        %v3043 = vadd.f32 %v2883, 0.5
        %v3044 = vadd.f32 %v2884, 0.5
        %v3045 = vadd.f32 %v2885, 0.5
        %v3046 = vadd.f32 %v2886, 0.5
        %v3047 = vadd.f32 %v2887, 0.5
        %v3048 = vadd.f32 %v2888, 0.5
        %v3049 = vadd.f32 %v2889, 0.5
        %v3050 = vadd.f32 %v2890, 0.5
        %v3051 = vadd.f32 %v2891, 0.5
        %v3052 = vadd.f32 %v2892, 0.5
        %v3053 = vadd.f32 %v2893, 0.5
        %v3054 = vadd.f32 %v2894, 0.5
        %v3055 = vadd.f32 %v2895, 0.5
        %v3056 = vadd.f32 %v2896, 0.5
        %v3057 = vadd.f32 %v2897, 0.5
        %v3058 = vadd.f32 %v2898, 0.5
        %v3059 = vadd.f32 %v2899, 0.5
        %v3060 = vadd.f32 %v2900, 0.5
        %v3061 = vadd.f32 %v2901, 0.5
        %v3062 = vadd.f32 %v2902, 0.5
        %v3063 = vadd.f32 %v2903, 0.5
        %v3064 = vadd.f32 %v2904, 0.5
        %v3065 = vadd.f32 %v2905, 0.5
        %v3066 = vadd.f32 %v2906, 0.5
        %v3067 = vadd.f32 %v2907, 0.5
        %v3068 = vadd.f32 %v2908, 0.5
        %v3069 = vadd.f32 %v2909, 0.5
        %v3070 = vadd.f32 %v2910, 0.5
        %v3071 = vadd.f32 %v2911, 0.5
        %v3072 = vadd.f32 %v2912, 0.5
        %v3073 = vadd.f32 %v2913, 0.5
        %v3074 = vadd.f32 %v2914, 0.5
        %v3075 = vadd.f32 %v2915, 0.5
        %v3076 = vadd.f32 %v2916, 0.5
        %v3077 = vadd.f32 %v2917, 0.5
        %v3078 = vadd.f32 %v2918, 0.5
        %v3079 = vadd.f32 %v2919, 0.5
        %v3080 = vadd.f32 %v2920, 0.5
        %v3081 = vadd.f32 %v2921, 0.5
        %v3082 = vadd.f32 %v2922, 0.5
        %v3083 = vadd.f32 %v2923, 0.5
        %v3084 = vadd.f32 %v2924, 0.5
        %v3085 = vadd.f32 %v2925, 0.5
        %v3086 = vadd.f32 %v2926, 0.5
        %v3087 = vadd.f32 %v2927, 0.5
        %v3088 = vadd.f32 %v2928, 0.5
        %v3089 = vadd.f32 %v2929, 0.5
        %v3090 = vadd.f32 %v2930, 0.5
        %v3091 = vadd.f32 %v2931, 0.5
        %v3092 = vadd.f32 %v2932, 0.5
        %v3093 = vadd.f32 %v2933, 0.5
        %v3094 = vadd.f32 %v2934, 0.5
        %v3095 = vadd.f32 %v2935, 0.5
        %v3096 = vadd.f32 %v2936, 0.5
        %v3097 = vadd.f32 %v2937, 0.5
        %v3098 = vadd.f32 %v2938, 0.5
        %v3099 = vadd.f32 %v2939, 0.5
        %v3100 = vadd.f32 %v2940, 0.5
        %v3101 = vadd.f32 %v2941, 0.5
        %v3102 = vadd.f32 %v2942, 0.5
        %v3103 = vadd.f32 %v2943, 0.5
        %v3104 = vadd.f32 %v2944, 0.5
        %v3105 = vadd.f32 %v2945, 0.5
        %v3106 = vadd.f32 %v2946, 0.5
        %v3107 = vadd.f32 %v2947, 0.5
        %v3108 = vadd.f32 %v2948, 0.5
        %v3109 = vadd.f32 %v2949, 0.5
        %v3110 = vadd.f32 %v2950, 0.5
        %v3111 = vadd.f32 %v2951, 0.5
        %v3112 = vadd.f32 %v2952, 0.5
        %v3113 = vadd.f32 %v2953, 0.5
        %v3114 = vadd.f32 %v2954, 0.5
        %v3115 = vadd.f32 %v2955, 0.5
        %v3116 = vadd.f32 %v2956, 0.5
        %v3117 = vadd.f32 %v2957, 0.5
        %v3118 = vadd.f32 %v2958, 0.5
        %v3119 = vadd.f32 %v2959, 0.5
        %v3120 = vadd.f32 %v2960, 0.5
        %v3121 = vadd.f32 %v2961, 0.5
        %v3122 = vadd.f32 %v2962, 0.5
        %v3123 = vadd.f32 %v2963, 0.5
        %v3124 = vadd.f32 %v2964, 0.5
        %v3125 = vadd.f32 %v2965, 0.5
        %v3126 = vadd.f32 %v2966, 0.5
        %v3127 = vadd.f32 %v2967, 0.5
        %v3128 = vadd.f32 %v2968, 0.5
        %v3129 = vadd.f32 %v2969, 0.5
        %v3130 = vadd.f32 %v2970, 0.5
        %v3131 = vadd.f32 %v2971, 0.5
        %v3132 = vadd.f32 %v2972, 0.5
        %v3133 = vadd.f32 %v2973, 0.5
        %v3134 = vadd.f32 %v2974, 0.5
        %v3135 = vadd.f32 %v2975, 0.5
        %v3136 = vadd.f32 %v2976, 0.5
        %v3137 = vadd.f32 %v2977, 0.5
        %v3138 = vadd.f32 %v2978, 0.5
        %v3139 = vadd.f32 %v2979, 0.5
        %v3140 = vadd.f32 %v2980, 0.5
        %v3141 = vadd.f32 %v2981, 0.5
        %v3142 = vadd.f32 %v2982, 0.5
        %v3143 = vadd.f32 %v2983, 0.5
        %v3144 = vadd.f32 %v2984, 0.5
        %v3145 = vadd.f32 %v2985, 0.5
        %v3146 = vadd.f32 %v2986, 0.5
        %v3147 = vadd.f32 %v2987, 0.5
        %v3148 = vadd.f32 %v2988, 0.5
        %v3149 = vadd.f32 %v2989, 0.5
        %v3150 = vadd.f32 %v2990, 0.5
        %v3151 = vadd.f32 %v2991, 0.5
        %v3152 = vadd.f32 %v2992, 0.5
        %v3153 = vadd.f32 %v2993, 0.5
        %v3154 = vadd.f32 %v2994, 0.5
        %v3155 = vadd.f32 %v2995, 0.5
        %v3156 = vadd.f32 %v2996, 0.5
        %v3157 = vadd.f32 %v2997, 0.5
        %v3158 = vadd.f32 %v2998, 0.5
        %v3159 = vadd.f32 %v2999, 0.5
        %v3160 = vadd.f32 %v3000, 0.5
        %v3161 = vadd.f32 %v3001, 0.5
        %v3162 = vadd.f32 %v3002, 0.5
        %v3163 = vadd.f32 %v3003, 0.5
        %v3164 = vadd.f32 %v3004, 0.5
        %v3165 = vadd.f32 %v3005, 0.5
        %v3166 = vadd.f32 %v3006, 0.5
        %v3167 = vadd.f32 %v3007, 0.5
        %v3168 = vadd.f32 %v3008, 0.5
        %v3169 = vadd.f32 %v3009, 0.5
        %v3170 = vadd.f32 %v3010, 0.5
        %v3171 = vadd.f32 %v3011, 0.5
        %v3172 = vadd.f32 %v3012, 0.5
        %v3173 = vadd.f32 %v3013, 0.5
        %v3174 = vadd.f32 %v3014, 0.5
        %v3175 = vadd.f32 %v3015, 0.5
        %v3176 = vadd.f32 %v3016, 0.5
        %v3177 = vadd.f32 %v3017, 0.5
        %v3178 = vadd.f32 %v3018, 0.5
        %v3179 = vadd.f32 %v3019, 0.5
        %v3180 = vadd.f32 %v3020, 0.5
        %v3181 = vadd.f32 %v3021, 0.5
        %v3182 = vadd.f32 %v3022, 0.5
        %v3183 = vadd.f32 %v3023, 0.5
        %v3184 = vadd.f32 %v3024, 0.5
        %v3185 = vadd.f32 %v3025, 0.5
        %v3186 = vadd.f32 %v3026, 0.5
        %v3187 = vmul.f32 %v2148, %v3027
        %v3188 = vmul.f32 %v2150, %v3028
        %v3189 = vmul.f32 %v2153, %v3029
        %v3190 = vmul.f32 %v2155, %v3030
        %v3191 = vmul.f32 %v2158, %v3031
        %v3192 = vmul.f32 %v2160, %v3032
        %v3193 = vmul.f32 %v2163, %v3033
        %v3194 = vmul.f32 %v2165, %v3034
        %v3195 = vmul.f32 %v2168, %v3035
        %v3196 = vmul.f32 %v2170, %v3036
        %v3197 = vmul.f32 %v2173, %v3037
        %v3198 = vmul.f32 %v2175, %v3038
        %v3199 = vmul.f32 %v2178, %v3039
        %v3200 = vmul.f32 %v2180, %v3040
        %v3201 = vmul.f32 %v2183, %v3041
        %v3202 = vmul.f32 %v2185, %v3042
        %v3203 = vmul.f32 %v2188, %v3043
        %v3204 = vmul.f32 %v2190, %v3044
        %v3205 = vmul.f32 %v2193, %v3045
        %v3206 = vmul.f32 %v2195, %v3046
        %v3207 = vmul.f32 %v2198, %v3047
        %v3208 = vmul.f32 %v2200, %v3048
        %v3209 = vmul.f32 %v2203, %v3049
        %v3210 = vmul.f32 %v2205, %v3050
        %v3211 = vmul.f32 %v2208, %v3051
        %v3212 = vmul.f32 %v2210, %v3052
        %v3213 = vmul.f32 %v2213, %v3053
        %v3214 = vmul.f32 %v2215, %v3054
        %v3215 = vmul.f32 %v2218, %v3055
        %v3216 = vmul.f32 %v2220, %v3056
        %v3217 = vmul.f32 %v2223, %v3057
        %v3218 = vmul.f32 %v2225, %v3058
        %v3219 = vmul.f32 %v2228, %v3059
        %v3220 = vmul.f32 %v2230, %v3060
        %v3221 = vmul.f32 %v2233, %v3061
        %v3222 = vmul.f32 %v2235, %v3062
        %v3223 = vmul.f32 %v2238, %v3063
        %v3224 = vmul.f32 %v2240, %v3064
        %v3225 = vmul.f32 %v2243, %v3065
        %v3226 = vmul.f32 %v2245, %v3066
        %v3227 = vmul.f32 %v2248, %v3067
        %v3228 = vmul.f32 %v2250, %v3068
        %v3229 = vmul.f32 %v2253, %v3069
        %v3230 = vmul.f32 %v2255, %v3070
        %v3231 = vmul.f32 %v2258, %v3071
        %v3232 = vmul.f32 %v2260, %v3072
        %v3233 = vmul.f32 %v2263, %v3073
        %v3234 = vmul.f32 %v2265, %v3074
        %v3235 = vmul.f32 %v2268, %v3075
        %v3236 = vmul.f32 %v2270, %v3076
        %v3237 = vmul.f32 %v2273, %v3077
        %v3238 = vmul.f32 %v2275, %v3078
        %v3239 = vmul.f32 %v2278, %v3079
        %v3240 = vmul.f32 %v2280, %v3080
        %v3241 = vmul.f32 %v2283, %v3081
        %v3242 = vmul.f32 %v2285, %v3082
        %v3243 = vmul.f32 %v2288, %v3083
        %v3244 = vmul.f32 %v2290, %v3084
        %v3245 = vmul.f32 %v2293, %v3085
        %v3246 = vmul.f32 %v2295, %v3086
        %v3247 = vmul.f32 %v2298, %v3087
        %v3248 = vmul.f32 %v2300, %v3088
        %v3249 = vmul.f32 %v2303, %v3089
        %v3250 = vmul.f32 %v2305, %v3090
        %v3251 = vmul.f32 %v2308, %v3091
        %v3252 = vmul.f32 %v2310, %v3092
        %v3253 = vmul.f32 %v2313, %v3093
        %v3254 = vmul.f32 %v2315, %v3094
        %v3255 = vmul.f32 %v2318, %v3095
        %v3256 = vmul.f32 %v2320, %v3096
        %v3257 = vmul.f32 %v2323, %v3097
        %v3258 = vmul.f32 %v2325, %v3098
        %v3259 = vmul.f32 %v2328, %v3099
        %v3260 = vmul.f32 %v2330, %v3100
        %v3261 = vmul.f32 %v2333, %v3101
        %v3262 = vmul.f32 %v2335, %v3102
        %v3263 = vmul.f32 %v2338, %v3103
        %v3264 = vmul.f32 %v2340, %v3104
        %v3265 = vmul.f32 %v2343, %v3105
        %v3266 = vmul.f32 %v2345, %v3106
        %v3267 = vmul.f32 %v2348, %v3107
        %v3268 = vmul.f32 %v2350, %v3108
        %v3269 = vmul.f32 %v2353, %v3109
        %v3270 = vmul.f32 %v2355, %v3110
        %v3271 = vmul.f32 %v2358, %v3111
        %v3272 = vmul.f32 %v2360, %v3112
        %v3273 = vmul.f32 %v2363, %v3113
        %v3274 = vmul.f32 %v2365, %v3114
        %v3275 = vmul.f32 %v2368, %v3115
        %v3276 = vmul.f32 %v2370, %v3116
        %v3277 = vmul.f32 %v2373, %v3117
        %v3278 = vmul.f32 %v2375, %v3118
        %v3279 = vmul.f32 %v2378, %v3119
        %v3280 = vmul.f32 %v2380, %v3120
        %v3281 = vmul.f32 %v2383, %v3121
        %v3282 = vmul.f32 %v2385, %v3122
        %v3283 = vmul.f32 %v2388, %v3123
        %v3284 = vmul.f32 %v2390, %v3124
        %v3285 = vmul.f32 %v2393, %v3125
        %v3286 = vmul.f32 %v2395, %v3126
        %v3287 = vmul.f32 %v2398, %v3127
        %v3288 = vmul.f32 %v2400, %v3128
        %v3289 = vmul.f32 %v2403, %v3129
        %v3290 = vmul.f32 %v2405, %v3130
        %v3291 = vmul.f32 %v2408, %v3131
        %v3292 = vmul.f32 %v2410, %v3132
        %v3293 = vmul.f32 %v2413, %v3133
        %v3294 = vmul.f32 %v2415, %v3134
        %v3295 = vmul.f32 %v2418, %v3135
        %v3296 = vmul.f32 %v2420, %v3136
        %v3297 = vmul.f32 %v2423, %v3137
        %v3298 = vmul.f32 %v2425, %v3138
        %v3299 = vmul.f32 %v2428, %v3139
        %v3300 = vmul.f32 %v2430, %v3140
        %v3301 = vmul.f32 %v2433, %v3141
        %v3302 = vmul.f32 %v2435, %v3142
        %v3303 = vmul.f32 %v2438, %v3143
        %v3304 = vmul.f32 %v2440, %v3144
        %v3305 = vmul.f32 %v2443, %v3145
        %v3306 = vmul.f32 %v2445, %v3146
        %v3307 = vmul.f32 %v2448, %v3147
        %v3308 = vmul.f32 %v2450, %v3148
        %v3309 = vmul.f32 %v2453, %v3149
        %v3310 = vmul.f32 %v2455, %v3150
        %v3311 = vmul.f32 %v2458, %v3151
        %v3312 = vmul.f32 %v2460, %v3152
        %v3313 = vmul.f32 %v2463, %v3153
        %v3314 = vmul.f32 %v2465, %v3154
        %v3315 = vmul.f32 %v2468, %v3155
        %v3316 = vmul.f32 %v2470, %v3156
        %v3317 = vmul.f32 %v2473, %v3157
        %v3318 = vmul.f32 %v2475, %v3158
        %v3319 = vmul.f32 %v2478, %v3159
        %v3320 = vmul.f32 %v2480, %v3160
        %v3321 = vmul.f32 %v2483, %v3161
        %v3322 = vmul.f32 %v2485, %v3162
        %v3323 = vmul.f32 %v2488, %v3163
        %v3324 = vmul.f32 %v2490, %v3164
        %v3325 = vmul.f32 %v2493, %v3165
        %v3326 = vmul.f32 %v2495, %v3166
        %v3327 = vmul.f32 %v2498, %v3167
        %v3328 = vmul.f32 %v2500, %v3168
        %v3329 = vmul.f32 %v2503, %v3169
        %v3330 = vmul.f32 %v2505, %v3170
        %v3331 = vmul.f32 %v2508, %v3171
        %v3332 = vmul.f32 %v2510, %v3172
        %v3333 = vmul.f32 %v2513, %v3173
        %v3334 = vmul.f32 %v2515, %v3174
        %v3335 = vmul.f32 %v2518, %v3175
        %v3336 = vmul.f32 %v2520, %v3176
        %v3337 = vmul.f32 %v2523, %v3177
        %v3338 = vmul.f32 %v2525, %v3178
        %v3339 = vmul.f32 %v2528, %v3179
        %v3340 = vmul.f32 %v2530, %v3180
        %v3341 = vmul.f32 %v2533, %v3181
        %v3342 = vmul.f32 %v2535, %v3182
        %v3343 = vmul.f32 %v2538, %v3183
        %v3344 = vmul.f32 %v2540, %v3184
        %v3345 = vmul.f32 %v2543, %v3185
        %v3346 = vmul.f32 %v2545, %v3186
        %v3347 = vld [vmem:[#allocation2] sm:$0xff]
        %v3348 = vld [vmem:[#allocation2 + $0x8] sm:$0xff]
        %v3349 = vld [vmem:[#allocation2 + $0x10] sm:$0xff]
        %v3350 = vld [vmem:[#allocation2 + $0x18] sm:$0xff]
        %v3351 = vld [vmem:[#allocation2 + $0x20] sm:$0xff]
        %v3352 = vld [vmem:[#allocation2 + $0x28] sm:$0xff]
        %v3353 = vld [vmem:[#allocation2 + $0x30] sm:$0xff]
        %v3354 = vld [vmem:[#allocation2 + $0x38] sm:$0xff]
        %v3355 = vld [vmem:[#allocation2 + $0x40] sm:$0xff]
        %v3356 = vld [vmem:[#allocation2 + $0x48] sm:$0xff]
        %v3357 = vld [vmem:[#allocation2 + $0x50] sm:$0xff]
        %v3358 = vld [vmem:[#allocation2 + $0x58] sm:$0xff]
        %v3359 = vld [vmem:[#allocation2 + $0x60] sm:$0xff]
        %v3360 = vld [vmem:[#allocation2 + $0x68] sm:$0xff]
        %v3361 = vld [vmem:[#allocation2 + $0x70] sm:$0xff]
        %v3362 = vld [vmem:[#allocation2 + $0x78] sm:$0xff]
        %v3363 = vld [vmem:[#allocation2 + $0x80] sm:$0xff]
        %v3364 = vld [vmem:[#allocation2 + $0x88] sm:$0xff]
        %v3365 = vld [vmem:[#allocation2 + $0x90] sm:$0xff]
        %v3366 = vld [vmem:[#allocation2 + $0x98] sm:$0xff]
        %v3367 = vld [vmem:[#allocation2 + $0xa0] sm:$0xff]
        %v3368 = vld [vmem:[#allocation2 + $0xa8] sm:$0xff]
        %v3369 = vld [vmem:[#allocation2 + $0xb0] sm:$0xff]
        %v3370 = vld [vmem:[#allocation2 + $0xb8] sm:$0xff]
        %v3371 = vld [vmem:[#allocation2 + $0xc0] sm:$0xff]
        %v3372 = vld [vmem:[#allocation2 + $0xc8] sm:$0xff]
        %v3373 = vld [vmem:[#allocation2 + $0xd0] sm:$0xff]
        %v3374 = vld [vmem:[#allocation2 + $0xd8] sm:$0xff]
        %v3375 = vld [vmem:[#allocation2 + $0xe0] sm:$0xff]
        %v3376 = vld [vmem:[#allocation2 + $0xe8] sm:$0xff]
        %v3377 = vld [vmem:[#allocation2 + $0xf0] sm:$0xff]
        %v3378 = vld [vmem:[#allocation2 + $0xf8] sm:$0xff]
        %v3379 = vld [vmem:[#allocation2 + $0x100] sm:$0xff]
        %v3380 = vld [vmem:[#allocation2 + $0x108] sm:$0xff]
        %v3381 = vld [vmem:[#allocation2 + $0x110] sm:$0xff]
        %v3382 = vld [vmem:[#allocation2 + $0x118] sm:$0xff]
        %v3383 = vld [vmem:[#allocation2 + $0x120] sm:$0xff]
        %v3384 = vld [vmem:[#allocation2 + $0x128] sm:$0xff]
        %v3385 = vld [vmem:[#allocation2 + $0x130] sm:$0xff]
        %v3386 = vld [vmem:[#allocation2 + $0x138] sm:$0xff]
        %v3387 = vld [vmem:[#allocation2 + $0x140] sm:$0xff]
        %v3388 = vld [vmem:[#allocation2 + $0x148] sm:$0xff]
        %v3389 = vld [vmem:[#allocation2 + $0x150] sm:$0xff]
        %v3390 = vld [vmem:[#allocation2 + $0x158] sm:$0xff]
        %v3391 = vld [vmem:[#allocation2 + $0x160] sm:$0xff]
        %v3392 = vld [vmem:[#allocation2 + $0x168] sm:$0xff]
        %v3393 = vld [vmem:[#allocation2 + $0x170] sm:$0xff]
        %v3394 = vld [vmem:[#allocation2 + $0x178] sm:$0xff]
        %v3395 = vld [vmem:[#allocation2 + $0x180] sm:$0xff]
        %v3396 = vld [vmem:[#allocation2 + $0x188] sm:$0xff]
        %v3397 = vld [vmem:[#allocation2 + $0x190] sm:$0xff]
        %v3398 = vld [vmem:[#allocation2 + $0x198] sm:$0xff]
        %v3399 = vld [vmem:[#allocation2 + $0x1a0] sm:$0xff]
        %v3400 = vld [vmem:[#allocation2 + $0x1a8] sm:$0xff]
        %v3401 = vld [vmem:[#allocation2 + $0x1b0] sm:$0xff]
        %v3402 = vld [vmem:[#allocation2 + $0x1b8] sm:$0xff]
        %v3403 = vld [vmem:[#allocation2 + $0x1c0] sm:$0xff]
        %v3404 = vld [vmem:[#allocation2 + $0x1c8] sm:$0xff]
        %v3405 = vld [vmem:[#allocation2 + $0x1d0] sm:$0xff]
        %v3406 = vld [vmem:[#allocation2 + $0x1d8] sm:$0xff]
        %v3407 = vld [vmem:[#allocation2 + $0x1e0] sm:$0xff]
        %v3408 = vld [vmem:[#allocation2 + $0x1e8] sm:$0xff]
        %v3409 = vld [vmem:[#allocation2 + $0x1f0] sm:$0xff]
        %v3410 = vld [vmem:[#allocation2 + $0x1f8] sm:$0xff]
        %v3411 = vld [vmem:[#allocation2 + $0x200] sm:$0xff]
        %v3412 = vld [vmem:[#allocation2 + $0x208] sm:$0xff]
        %v3413 = vld [vmem:[#allocation2 + $0x210] sm:$0xff]
        %v3414 = vld [vmem:[#allocation2 + $0x218] sm:$0xff]
        %v3415 = vld [vmem:[#allocation2 + $0x220] sm:$0xff]
        %v3416 = vld [vmem:[#allocation2 + $0x228] sm:$0xff]
        %v3417 = vld [vmem:[#allocation2 + $0x230] sm:$0xff]
        %v3418 = vld [vmem:[#allocation2 + $0x238] sm:$0xff]
        %v3419 = vld [vmem:[#allocation2 + $0x240] sm:$0xff]
        %v3420 = vld [vmem:[#allocation2 + $0x248] sm:$0xff]
        %v3421 = vld [vmem:[#allocation2 + $0x250] sm:$0xff]
        %v3422 = vld [vmem:[#allocation2 + $0x258] sm:$0xff]
        %v3423 = vld [vmem:[#allocation2 + $0x260] sm:$0xff]
        %v3424 = vld [vmem:[#allocation2 + $0x268] sm:$0xff]
        %v3425 = vld [vmem:[#allocation2 + $0x270] sm:$0xff]
        %v3426 = vld [vmem:[#allocation2 + $0x278] sm:$0xff]
        %v3427 = vld [vmem:[#allocation2 + $0x280] sm:$0xff]
        %v3428 = vld [vmem:[#allocation2 + $0x288] sm:$0xff]
        %v3429 = vld [vmem:[#allocation2 + $0x290] sm:$0xff]
        %v3430 = vld [vmem:[#allocation2 + $0x298] sm:$0xff]
        %v3431 = vld [vmem:[#allocation2 + $0x2a0] sm:$0xff]
        %v3432 = vld [vmem:[#allocation2 + $0x2a8] sm:$0xff]
        %v3433 = vld [vmem:[#allocation2 + $0x2b0] sm:$0xff]
        %v3434 = vld [vmem:[#allocation2 + $0x2b8] sm:$0xff]
        %v3435 = vld [vmem:[#allocation2 + $0x2c0] sm:$0xff]
        %v3436 = vld [vmem:[#allocation2 + $0x2c8] sm:$0xff]
        %v3437 = vld [vmem:[#allocation2 + $0x2d0] sm:$0xff]
        %v3438 = vld [vmem:[#allocation2 + $0x2d8] sm:$0xff]
        %v3439 = vld [vmem:[#allocation2 + $0x2e0] sm:$0xff]
        %v3440 = vld [vmem:[#allocation2 + $0x2e8] sm:$0xff]
        %v3441 = vld [vmem:[#allocation2 + $0x2f0] sm:$0xff]
        %v3442 = vld [vmem:[#allocation2 + $0x2f8] sm:$0xff]
        %v3443 = vld [vmem:[#allocation2 + $0x300] sm:$0xff]
        %v3444 = vld [vmem:[#allocation2 + $0x308] sm:$0xff]
        %v3445 = vld [vmem:[#allocation2 + $0x310] sm:$0xff]
        %v3446 = vld [vmem:[#allocation2 + $0x318] sm:$0xff]
        %v3447 = vld [vmem:[#allocation2 + $0x320] sm:$0xff]
        %v3448 = vld [vmem:[#allocation2 + $0x328] sm:$0xff]
        %v3449 = vld [vmem:[#allocation2 + $0x330] sm:$0xff]
        %v3450 = vld [vmem:[#allocation2 + $0x338] sm:$0xff]
        %v3451 = vld [vmem:[#allocation2 + $0x340] sm:$0xff]
        %v3452 = vld [vmem:[#allocation2 + $0x348] sm:$0xff]
        %v3453 = vld [vmem:[#allocation2 + $0x350] sm:$0xff]
        %v3454 = vld [vmem:[#allocation2 + $0x358] sm:$0xff]
        %v3455 = vld [vmem:[#allocation2 + $0x360] sm:$0xff]
        %v3456 = vld [vmem:[#allocation2 + $0x368] sm:$0xff]
        %v3457 = vld [vmem:[#allocation2 + $0x370] sm:$0xff]
        %v3458 = vld [vmem:[#allocation2 + $0x378] sm:$0xff]
        %v3459 = vld [vmem:[#allocation2 + $0x380] sm:$0xff]
        %v3460 = vld [vmem:[#allocation2 + $0x388] sm:$0xff]
        %v3461 = vld [vmem:[#allocation2 + $0x390] sm:$0xff]
        %v3462 = vld [vmem:[#allocation2 + $0x398] sm:$0xff]
        %v3463 = vld [vmem:[#allocation2 + $0x3a0] sm:$0xff]
        %v3464 = vld [vmem:[#allocation2 + $0x3a8] sm:$0xff]
        %v3465 = vld [vmem:[#allocation2 + $0x3b0] sm:$0xff]
        %v3466 = vld [vmem:[#allocation2 + $0x3b8] sm:$0xff]
        %v3467 = vld [vmem:[#allocation2 + $0x3c0] sm:$0xff]
        %v3468 = vld [vmem:[#allocation2 + $0x3c8] sm:$0xff]
        %v3469 = vld [vmem:[#allocation2 + $0x3d0] sm:$0xff]
        %v3470 = vld [vmem:[#allocation2 + $0x3d8] sm:$0xff]
        %v3471 = vld [vmem:[#allocation2 + $0x3e0] sm:$0xff]
        %v3472 = vld [vmem:[#allocation2 + $0x3e8] sm:$0xff]
        %v3473 = vld [vmem:[#allocation2 + $0x3f0] sm:$0xff]
        %v3474 = vld [vmem:[#allocation2 + $0x3f8] sm:$0xff]
        %v3475 = vld [vmem:[#allocation2 + $0x400] sm:$0xff]
        %v3476 = vld [vmem:[#allocation2 + $0x408] sm:$0xff]
        %v3477 = vld [vmem:[#allocation2 + $0x410] sm:$0xff]
        %v3478 = vld [vmem:[#allocation2 + $0x418] sm:$0xff]
        %v3479 = vld [vmem:[#allocation2 + $0x420] sm:$0xff]
        %v3480 = vld [vmem:[#allocation2 + $0x428] sm:$0xff]
        %v3481 = vld [vmem:[#allocation2 + $0x430] sm:$0xff]
        %v3482 = vld [vmem:[#allocation2 + $0x438] sm:$0xff]
        %v3483 = vld [vmem:[#allocation2 + $0x440] sm:$0xff]
        %v3484 = vld [vmem:[#allocation2 + $0x448] sm:$0xff]
        %v3485 = vld [vmem:[#allocation2 + $0x450] sm:$0xff]
        %v3486 = vld [vmem:[#allocation2 + $0x458] sm:$0xff]
        %v3487 = vld [vmem:[#allocation2 + $0x460] sm:$0xff]
        %v3488 = vld [vmem:[#allocation2 + $0x468] sm:$0xff]
        %v3489 = vld [vmem:[#allocation2 + $0x470] sm:$0xff]
        %v3490 = vld [vmem:[#allocation2 + $0x478] sm:$0xff]
        %v3491 = vld [vmem:[#allocation2 + $0x480] sm:$0xff]
        %v3492 = vld [vmem:[#allocation2 + $0x488] sm:$0xff]
        %v3493 = vld [vmem:[#allocation2 + $0x490] sm:$0xff]
        %v3494 = vld [vmem:[#allocation2 + $0x498] sm:$0xff]
        %v3495 = vld [vmem:[#allocation2 + $0x4a0] sm:$0xff]
        %v3496 = vld [vmem:[#allocation2 + $0x4a8] sm:$0xff]
        %v3497 = vld [vmem:[#allocation2 + $0x4b0] sm:$0xff]
        %v3498 = vld [vmem:[#allocation2 + $0x4b8] sm:$0xff]
        %v3499 = vld [vmem:[#allocation2 + $0x4c0] sm:$0xff]
        %v3500 = vld [vmem:[#allocation2 + $0x4c8] sm:$0xff]
        %v3501 = vld [vmem:[#allocation2 + $0x4d0] sm:$0xff]
        %v3502 = vld [vmem:[#allocation2 + $0x4d8] sm:$0xff]
        %v3503 = vld [vmem:[#allocation2 + $0x4e0] sm:$0xff]
        %v3504 = vld [vmem:[#allocation2 + $0x4e8] sm:$0xff]
        %v3505 = vld [vmem:[#allocation2 + $0x4f0] sm:$0xff]
        %v3506 = vld [vmem:[#allocation2 + $0x4f8] sm:$0xff]
        %v3507 = vadd.f32 %v3347, %v3187
        %v3508 = vadd.f32 %v3348, %v3188
        %v3509 = vadd.f32 %v3349, %v3189
        %v3510 = vadd.f32 %v3350, %v3190
        %v3511 = vadd.f32 %v3351, %v3191
        %v3512 = vadd.f32 %v3352, %v3192
        %v3513 = vadd.f32 %v3353, %v3193
        %v3514 = vadd.f32 %v3354, %v3194
        %v3515 = vadd.f32 %v3355, %v3195
        %v3516 = vadd.f32 %v3356, %v3196
        %v3517 = vadd.f32 %v3357, %v3197
        %v3518 = vadd.f32 %v3358, %v3198
        %v3519 = vadd.f32 %v3359, %v3199
        %v3520 = vadd.f32 %v3360, %v3200
        %v3521 = vadd.f32 %v3361, %v3201
        %v3522 = vadd.f32 %v3362, %v3202
        %v3523 = vadd.f32 %v3363, %v3203
        %v3524 = vadd.f32 %v3364, %v3204
        %v3525 = vadd.f32 %v3365, %v3205
        %v3526 = vadd.f32 %v3366, %v3206
        %v3527 = vadd.f32 %v3367, %v3207
        %v3528 = vadd.f32 %v3368, %v3208
        %v3529 = vadd.f32 %v3369, %v3209
        %v3530 = vadd.f32 %v3370, %v3210
        %v3531 = vadd.f32 %v3371, %v3211
        %v3532 = vadd.f32 %v3372, %v3212
        %v3533 = vadd.f32 %v3373, %v3213
        %v3534 = vadd.f32 %v3374, %v3214
        %v3535 = vadd.f32 %v3375, %v3215
        %v3536 = vadd.f32 %v3376, %v3216
        %v3537 = vadd.f32 %v3377, %v3217
        %v3538 = vadd.f32 %v3378, %v3218
        %v3539 = vadd.f32 %v3379, %v3219
        %v3540 = vadd.f32 %v3380, %v3220
        %v3541 = vadd.f32 %v3381, %v3221
        %v3542 = vadd.f32 %v3382, %v3222
        %v3543 = vadd.f32 %v3383, %v3223
        %v3544 = vadd.f32 %v3384, %v3224
        %v3545 = vadd.f32 %v3385, %v3225
        %v3546 = vadd.f32 %v3386, %v3226
        %v3547 = vadd.f32 %v3387, %v3227
        %v3548 = vadd.f32 %v3388, %v3228
        %v3549 = vadd.f32 %v3389, %v3229
        %v3550 = vadd.f32 %v3390, %v3230
        %v3551 = vadd.f32 %v3391, %v3231
        %v3552 = vadd.f32 %v3392, %v3232
        %v3553 = vadd.f32 %v3393, %v3233
        %v3554 = vadd.f32 %v3394, %v3234
        %v3555 = vadd.f32 %v3395, %v3235
        %v3556 = vadd.f32 %v3396, %v3236
        %v3557 = vadd.f32 %v3397, %v3237
        %v3558 = vadd.f32 %v3398, %v3238
        %v3559 = vadd.f32 %v3399, %v3239
        %v3560 = vadd.f32 %v3400, %v3240
        %v3561 = vadd.f32 %v3401, %v3241
        %v3562 = vadd.f32 %v3402, %v3242
        %v3563 = vadd.f32 %v3403, %v3243
        %v3564 = vadd.f32 %v3404, %v3244
        %v3565 = vadd.f32 %v3405, %v3245
        %v3566 = vadd.f32 %v3406, %v3246
        %v3567 = vadd.f32 %v3407, %v3247
        %v3568 = vadd.f32 %v3408, %v3248
        %v3569 = vadd.f32 %v3409, %v3249
        %v3570 = vadd.f32 %v3410, %v3250
        %v3571 = vadd.f32 %v3411, %v3251
        %v3572 = vadd.f32 %v3412, %v3252
        %v3573 = vadd.f32 %v3413, %v3253
        %v3574 = vadd.f32 %v3414, %v3254
        %v3575 = vadd.f32 %v3415, %v3255
        %v3576 = vadd.f32 %v3416, %v3256
        %v3577 = vadd.f32 %v3417, %v3257
        %v3578 = vadd.f32 %v3418, %v3258
        %v3579 = vadd.f32 %v3419, %v3259
        %v3580 = vadd.f32 %v3420, %v3260
        %v3581 = vadd.f32 %v3421, %v3261
        %v3582 = vadd.f32 %v3422, %v3262
        %v3583 = vadd.f32 %v3423, %v3263
        %v3584 = vadd.f32 %v3424, %v3264
        %v3585 = vadd.f32 %v3425, %v3265
        %v3586 = vadd.f32 %v3426, %v3266
        %v3587 = vadd.f32 %v3427, %v3267
        %v3588 = vadd.f32 %v3428, %v3268
        %v3589 = vadd.f32 %v3429, %v3269
        %v3590 = vadd.f32 %v3430, %v3270
        %v3591 = vadd.f32 %v3431, %v3271
        %v3592 = vadd.f32 %v3432, %v3272
        %v3593 = vadd.f32 %v3433, %v3273
        %v3594 = vadd.f32 %v3434, %v3274
        %v3595 = vadd.f32 %v3435, %v3275
        %v3596 = vadd.f32 %v3436, %v3276
        %v3597 = vadd.f32 %v3437, %v3277
        %v3598 = vadd.f32 %v3438, %v3278
        %v3599 = vadd.f32 %v3439, %v3279
        %v3600 = vadd.f32 %v3440, %v3280
        %v3601 = vadd.f32 %v3441, %v3281
        %v3602 = vadd.f32 %v3442, %v3282
        %v3603 = vadd.f32 %v3443, %v3283
        %v3604 = vadd.f32 %v3444, %v3284
        %v3605 = vadd.f32 %v3445, %v3285
        %v3606 = vadd.f32 %v3446, %v3286
        %v3607 = vadd.f32 %v3447, %v3287
        %v3608 = vadd.f32 %v3448, %v3288
        %v3609 = vadd.f32 %v3449, %v3289
        %v3610 = vadd.f32 %v3450, %v3290
        %v3611 = vadd.f32 %v3451, %v3291
        %v3612 = vadd.f32 %v3452, %v3292
        %v3613 = vadd.f32 %v3453, %v3293
        %v3614 = vadd.f32 %v3454, %v3294
        %v3615 = vadd.f32 %v3455, %v3295
        %v3616 = vadd.f32 %v3456, %v3296
        %v3617 = vadd.f32 %v3457, %v3297
        %v3618 = vadd.f32 %v3458, %v3298
        %v3619 = vadd.f32 %v3459, %v3299
        %v3620 = vadd.f32 %v3460, %v3300
        %v3621 = vadd.f32 %v3461, %v3301
        %v3622 = vadd.f32 %v3462, %v3302
        %v3623 = vadd.f32 %v3463, %v3303
        %v3624 = vadd.f32 %v3464, %v3304
        %v3625 = vadd.f32 %v3465, %v3305
        %v3626 = vadd.f32 %v3466, %v3306
        %v3627 = vadd.f32 %v3467, %v3307
        %v3628 = vadd.f32 %v3468, %v3308
        %v3629 = vadd.f32 %v3469, %v3309
        %v3630 = vadd.f32 %v3470, %v3310
        %v3631 = vadd.f32 %v3471, %v3311
        %v3632 = vadd.f32 %v3472, %v3312
        %v3633 = vadd.f32 %v3473, %v3313
        %v3634 = vadd.f32 %v3474, %v3314
        %v3635 = vadd.f32 %v3475, %v3315
        %v3636 = vadd.f32 %v3476, %v3316
        %v3637 = vadd.f32 %v3477, %v3317
        %v3638 = vadd.f32 %v3478, %v3318
        %v3639 = vadd.f32 %v3479, %v3319
        %v3640 = vadd.f32 %v3480, %v3320
        %v3641 = vadd.f32 %v3481, %v3321
        %v3642 = vadd.f32 %v3482, %v3322
        %v3643 = vadd.f32 %v3483, %v3323
        %v3644 = vadd.f32 %v3484, %v3324
        %v3645 = vadd.f32 %v3485, %v3325
        %v3646 = vadd.f32 %v3486, %v3326
        %v3647 = vadd.f32 %v3487, %v3327
        %v3648 = vadd.f32 %v3488, %v3328
        %v3649 = vadd.f32 %v3489, %v3329
        %v3650 = vadd.f32 %v3490, %v3330
        %v3651 = vadd.f32 %v3491, %v3331
        %v3652 = vadd.f32 %v3492, %v3332
        %v3653 = vadd.f32 %v3493, %v3333
        %v3654 = vadd.f32 %v3494, %v3334
        %v3655 = vadd.f32 %v3495, %v3335
        %v3656 = vadd.f32 %v3496, %v3336
        %v3657 = vadd.f32 %v3497, %v3337
        %v3658 = vadd.f32 %v3498, %v3338
        %v3659 = vadd.f32 %v3499, %v3339
        %v3660 = vadd.f32 %v3500, %v3340
        %v3661 = vadd.f32 %v3501, %v3341
        %v3662 = vadd.f32 %v3502, %v3342
        %v3663 = vadd.f32 %v3503, %v3343
        %v3664 = vadd.f32 %v3504, %v3344
        %v3665 = vadd.f32 %v3505, %v3345
        %v3666 = vadd.f32 %v3506, %v3346
        %3667 = vst [vmem:[#allocation2] sm:$0xff] %v3507
        %3668 = vst [vmem:[#allocation2 + $0x8] sm:$0xff] %v3508
        %3669 = vst [vmem:[#allocation2 + $0x10] sm:$0xff] %v3509
        %3670 = vst [vmem:[#allocation2 + $0x18] sm:$0xff] %v3510
        %3671 = vst [vmem:[#allocation2 + $0x20] sm:$0xff] %v3511
        %3672 = vst [vmem:[#allocation2 + $0x28] sm:$0xff] %v3512
        %3673 = vst [vmem:[#allocation2 + $0x30] sm:$0xff] %v3513
        %3674 = vst [vmem:[#allocation2 + $0x38] sm:$0xff] %v3514
        %3675 = vst [vmem:[#allocation2 + $0x40] sm:$0xff] %v3515
        %3676 = vst [vmem:[#allocation2 + $0x48] sm:$0xff] %v3516
        %3677 = vst [vmem:[#allocation2 + $0x50] sm:$0xff] %v3517
        %3678 = vst [vmem:[#allocation2 + $0x58] sm:$0xff] %v3518
        %3679 = vst [vmem:[#allocation2 + $0x60] sm:$0xff] %v3519
        %3680 = vst [vmem:[#allocation2 + $0x68] sm:$0xff] %v3520
        %3681 = vst [vmem:[#allocation2 + $0x70] sm:$0xff] %v3521
        %3682 = vst [vmem:[#allocation2 + $0x78] sm:$0xff] %v3522
        %3683 = vst [vmem:[#allocation2 + $0x80] sm:$0xff] %v3523
        %3684 = vst [vmem:[#allocation2 + $0x88] sm:$0xff] %v3524
        %3685 = vst [vmem:[#allocation2 + $0x90] sm:$0xff] %v3525
        %3686 = vst [vmem:[#allocation2 + $0x98] sm:$0xff] %v3526
        %3687 = vst [vmem:[#allocation2 + $0xa0] sm:$0xff] %v3527
        %3688 = vst [vmem:[#allocation2 + $0xa8] sm:$0xff] %v3528
        %3689 = vst [vmem:[#allocation2 + $0xb0] sm:$0xff] %v3529
        %3690 = vst [vmem:[#allocation2 + $0xb8] sm:$0xff] %v3530
        %3691 = vst [vmem:[#allocation2 + $0xc0] sm:$0xff] %v3531
        %3692 = vst [vmem:[#allocation2 + $0xc8] sm:$0xff] %v3532
        %3693 = vst [vmem:[#allocation2 + $0xd0] sm:$0xff] %v3533
        %3694 = vst [vmem:[#allocation2 + $0xd8] sm:$0xff] %v3534
        %3695 = vst [vmem:[#allocation2 + $0xe0] sm:$0xff] %v3535
        %3696 = vst [vmem:[#allocation2 + $0xe8] sm:$0xff] %v3536
        %3697 = vst [vmem:[#allocation2 + $0xf0] sm:$0xff] %v3537
        %3698 = vst [vmem:[#allocation2 + $0xf8] sm:$0xff] %v3538
        %3699 = vst [vmem:[#allocation2 + $0x100] sm:$0xff] %v3539
        %3700 = vst [vmem:[#allocation2 + $0x108] sm:$0xff] %v3540
        %3701 = vst [vmem:[#allocation2 + $0x110] sm:$0xff] %v3541
        %3702 = vst [vmem:[#allocation2 + $0x118] sm:$0xff] %v3542
        %3703 = vst [vmem:[#allocation2 + $0x120] sm:$0xff] %v3543
        %3704 = vst [vmem:[#allocation2 + $0x128] sm:$0xff] %v3544
        %3705 = vst [vmem:[#allocation2 + $0x130] sm:$0xff] %v3545
        %3706 = vst [vmem:[#allocation2 + $0x138] sm:$0xff] %v3546
        %3707 = vst [vmem:[#allocation2 + $0x140] sm:$0xff] %v3547
        %3708 = vst [vmem:[#allocation2 + $0x148] sm:$0xff] %v3548
        %3709 = vst [vmem:[#allocation2 + $0x150] sm:$0xff] %v3549
        %3710 = vst [vmem:[#allocation2 + $0x158] sm:$0xff] %v3550
        %3711 = vst [vmem:[#allocation2 + $0x160] sm:$0xff] %v3551
        %3712 = vst [vmem:[#allocation2 + $0x168] sm:$0xff] %v3552
        %3713 = vst [vmem:[#allocation2 + $0x170] sm:$0xff] %v3553
        %3714 = vst [vmem:[#allocation2 + $0x178] sm:$0xff] %v3554
        %3715 = vst [vmem:[#allocation2 + $0x180] sm:$0xff] %v3555
        %3716 = vst [vmem:[#allocation2 + $0x188] sm:$0xff] %v3556
        %3717 = vst [vmem:[#allocation2 + $0x190] sm:$0xff] %v3557
        %3718 = vst [vmem:[#allocation2 + $0x198] sm:$0xff] %v3558
        %3719 = vst [vmem:[#allocation2 + $0x1a0] sm:$0xff] %v3559
        %3720 = vst [vmem:[#allocation2 + $0x1a8] sm:$0xff] %v3560
        %3721 = vst [vmem:[#allocation2 + $0x1b0] sm:$0xff] %v3561
        %3722 = vst [vmem:[#allocation2 + $0x1b8] sm:$0xff] %v3562
        %3723 = vst [vmem:[#allocation2 + $0x1c0] sm:$0xff] %v3563
        %3724 = vst [vmem:[#allocation2 + $0x1c8] sm:$0xff] %v3564
        %3725 = vst [vmem:[#allocation2 + $0x1d0] sm:$0xff] %v3565
        %3726 = vst [vmem:[#allocation2 + $0x1d8] sm:$0xff] %v3566
        %3727 = vst [vmem:[#allocation2 + $0x1e0] sm:$0xff] %v3567
        %3728 = vst [vmem:[#allocation2 + $0x1e8] sm:$0xff] %v3568
        %3729 = vst [vmem:[#allocation2 + $0x1f0] sm:$0xff] %v3569
        %3730 = vst [vmem:[#allocation2 + $0x1f8] sm:$0xff] %v3570
        %3731 = vst [vmem:[#allocation2 + $0x200] sm:$0xff] %v3571
        %3732 = vst [vmem:[#allocation2 + $0x208] sm:$0xff] %v3572
        %3733 = vst [vmem:[#allocation2 + $0x210] sm:$0xff] %v3573
        %3734 = vst [vmem:[#allocation2 + $0x218] sm:$0xff] %v3574
        %3735 = vst [vmem:[#allocation2 + $0x220] sm:$0xff] %v3575
        %3736 = vst [vmem:[#allocation2 + $0x228] sm:$0xff] %v3576
        %3737 = vst [vmem:[#allocation2 + $0x230] sm:$0xff] %v3577
        %3738 = vst [vmem:[#allocation2 + $0x238] sm:$0xff] %v3578
        %3739 = vst [vmem:[#allocation2 + $0x240] sm:$0xff] %v3579
        %3740 = vst [vmem:[#allocation2 + $0x248] sm:$0xff] %v3580
        %3741 = vst [vmem:[#allocation2 + $0x250] sm:$0xff] %v3581
        %3742 = vst [vmem:[#allocation2 + $0x258] sm:$0xff] %v3582
        %3743 = vst [vmem:[#allocation2 + $0x260] sm:$0xff] %v3583
        %3744 = vst [vmem:[#allocation2 + $0x268] sm:$0xff] %v3584
        %3745 = vst [vmem:[#allocation2 + $0x270] sm:$0xff] %v3585
        %3746 = vst [vmem:[#allocation2 + $0x278] sm:$0xff] %v3586
        %3747 = vst [vmem:[#allocation2 + $0x280] sm:$0xff] %v3587
        %3748 = vst [vmem:[#allocation2 + $0x288] sm:$0xff] %v3588
        %3749 = vst [vmem:[#allocation2 + $0x290] sm:$0xff] %v3589
        %3750 = vst [vmem:[#allocation2 + $0x298] sm:$0xff] %v3590
        %3751 = vst [vmem:[#allocation2 + $0x2a0] sm:$0xff] %v3591
        %3752 = vst [vmem:[#allocation2 + $0x2a8] sm:$0xff] %v3592
        %3753 = vst [vmem:[#allocation2 + $0x2b0] sm:$0xff] %v3593
        %3754 = vst [vmem:[#allocation2 + $0x2b8] sm:$0xff] %v3594
        %3755 = vst [vmem:[#allocation2 + $0x2c0] sm:$0xff] %v3595
        %3756 = vst [vmem:[#allocation2 + $0x2c8] sm:$0xff] %v3596
        %3757 = vst [vmem:[#allocation2 + $0x2d0] sm:$0xff] %v3597
        %3758 = vst [vmem:[#allocation2 + $0x2d8] sm:$0xff] %v3598
        %3759 = vst [vmem:[#allocation2 + $0x2e0] sm:$0xff] %v3599
        %3760 = vst [vmem:[#allocation2 + $0x2e8] sm:$0xff] %v3600
        %3761 = vst [vmem:[#allocation2 + $0x2f0] sm:$0xff] %v3601
        %3762 = vst [vmem:[#allocation2 + $0x2f8] sm:$0xff] %v3602
        %3763 = vst [vmem:[#allocation2 + $0x300] sm:$0xff] %v3603
        %3764 = vst [vmem:[#allocation2 + $0x308] sm:$0xff] %v3604
        %3765 = vst [vmem:[#allocation2 + $0x310] sm:$0xff] %v3605
        %3766 = vst [vmem:[#allocation2 + $0x318] sm:$0xff] %v3606
        %3767 = vst [vmem:[#allocation2 + $0x320] sm:$0xff] %v3607
        %3768 = vst [vmem:[#allocation2 + $0x328] sm:$0xff] %v3608
        %3769 = vst [vmem:[#allocation2 + $0x330] sm:$0xff] %v3609
        %3770 = vst [vmem:[#allocation2 + $0x338] sm:$0xff] %v3610
        %3771 = vst [vmem:[#allocation2 + $0x340] sm:$0xff] %v3611
        %3772 = vst [vmem:[#allocation2 + $0x348] sm:$0xff] %v3612
        %3773 = vst [vmem:[#allocation2 + $0x350] sm:$0xff] %v3613
        %3774 = vst [vmem:[#allocation2 + $0x358] sm:$0xff] %v3614
        %3775 = vst [vmem:[#allocation2 + $0x360] sm:$0xff] %v3615
        %3776 = vst [vmem:[#allocation2 + $0x368] sm:$0xff] %v3616
        %3777 = vst [vmem:[#allocation2 + $0x370] sm:$0xff] %v3617
        %3778 = vst [vmem:[#allocation2 + $0x378] sm:$0xff] %v3618
        %3779 = vst [vmem:[#allocation2 + $0x380] sm:$0xff] %v3619
        %3780 = vst [vmem:[#allocation2 + $0x388] sm:$0xff] %v3620
        %3781 = vst [vmem:[#allocation2 + $0x390] sm:$0xff] %v3621
        %3782 = vst [vmem:[#allocation2 + $0x398] sm:$0xff] %v3622
        %3783 = vst [vmem:[#allocation2 + $0x3a0] sm:$0xff] %v3623
        %3784 = vst [vmem:[#allocation2 + $0x3a8] sm:$0xff] %v3624
        %3785 = vst [vmem:[#allocation2 + $0x3b0] sm:$0xff] %v3625
        %3786 = vst [vmem:[#allocation2 + $0x3b8] sm:$0xff] %v3626
        %3787 = vst [vmem:[#allocation2 + $0x3c0] sm:$0xff] %v3627
        %3788 = vst [vmem:[#allocation2 + $0x3c8] sm:$0xff] %v3628
        %3789 = vst [vmem:[#allocation2 + $0x3d0] sm:$0xff] %v3629
        %3790 = vst [vmem:[#allocation2 + $0x3d8] sm:$0xff] %v3630
        %3791 = vst [vmem:[#allocation2 + $0x3e0] sm:$0xff] %v3631
        %3792 = vst [vmem:[#allocation2 + $0x3e8] sm:$0xff] %v3632
        %3793 = vst [vmem:[#allocation2 + $0x3f0] sm:$0xff] %v3633
        %3794 = vst [vmem:[#allocation2 + $0x3f8] sm:$0xff] %v3634
        %3795 = vst [vmem:[#allocation2 + $0x400] sm:$0xff] %v3635
        %3796 = vst [vmem:[#allocation2 + $0x408] sm:$0xff] %v3636
        %3797 = vst [vmem:[#allocation2 + $0x410] sm:$0xff] %v3637
        %3798 = vst [vmem:[#allocation2 + $0x418] sm:$0xff] %v3638
        %3799 = vst [vmem:[#allocation2 + $0x420] sm:$0xff] %v3639
        %3800 = vst [vmem:[#allocation2 + $0x428] sm:$0xff] %v3640
        %3801 = vst [vmem:[#allocation2 + $0x430] sm:$0xff] %v3641
        %3802 = vst [vmem:[#allocation2 + $0x438] sm:$0xff] %v3642
        %3803 = vst [vmem:[#allocation2 + $0x440] sm:$0xff] %v3643
        %3804 = vst [vmem:[#allocation2 + $0x448] sm:$0xff] %v3644
        %3805 = vst [vmem:[#allocation2 + $0x450] sm:$0xff] %v3645
        %3806 = vst [vmem:[#allocation2 + $0x458] sm:$0xff] %v3646
        %3807 = vst [vmem:[#allocation2 + $0x460] sm:$0xff] %v3647
        %3808 = vst [vmem:[#allocation2 + $0x468] sm:$0xff] %v3648
        %3809 = vst [vmem:[#allocation2 + $0x470] sm:$0xff] %v3649
        %3810 = vst [vmem:[#allocation2 + $0x478] sm:$0xff] %v3650
        %3811 = vst [vmem:[#allocation2 + $0x480] sm:$0xff] %v3651
        %3812 = vst [vmem:[#allocation2 + $0x488] sm:$0xff] %v3652
        %3813 = vst [vmem:[#allocation2 + $0x490] sm:$0xff] %v3653
        %3814 = vst [vmem:[#allocation2 + $0x498] sm:$0xff] %v3654
        %3815 = vst [vmem:[#allocation2 + $0x4a0] sm:$0xff] %v3655
        %3816 = vst [vmem:[#allocation2 + $0x4a8] sm:$0xff] %v3656
        %3817 = vst [vmem:[#allocation2 + $0x4b0] sm:$0xff] %v3657
        %3818 = vst [vmem:[#allocation2 + $0x4b8] sm:$0xff] %v3658
        %3819 = vst [vmem:[#allocation2 + $0x4c0] sm:$0xff] %v3659
        %3820 = vst [vmem:[#allocation2 + $0x4c8] sm:$0xff] %v3660
        %3821 = vst [vmem:[#allocation2 + $0x4d0] sm:$0xff] %v3661
        %3822 = vst [vmem:[#allocation2 + $0x4d8] sm:$0xff] %v3662
        %3823 = vst [vmem:[#allocation2 + $0x4e0] sm:$0xff] %v3663
        %3824 = vst [vmem:[#allocation2 + $0x4e8] sm:$0xff] %v3664
        %3825 = vst [vmem:[#allocation2 + $0x4f0] sm:$0xff] %v3665
        %3826 = vst [vmem:[#allocation2 + $0x4f8] sm:$0xff] %v3666
        %p3827 = scmp.eq.s32.totalorder %s22, 1
        // Predicated region
        $region41: #{tpu_custom_call.1} parent=31 // pred_check
          %p3828 = pneg %p3827
        $region42: #{tpu_custom_call.1} parent=31 // pred_check_branch
          %3830 = sbr.rel (%p3828) target = $region44
        $region43: #{tpu_custom_call.1} parent=31 // pred_region
          %v3831 = vld [vmem:[#allocation2] sm:$0xff]
          %v3832 = vld [vmem:[#allocation2 + $0x8] sm:$0xff]
          %v3833 = vld [vmem:[#allocation2 + $0x10] sm:$0xff]
          %v3834 = vld [vmem:[#allocation2 + $0x18] sm:$0xff]
          %v3835 = vld [vmem:[#allocation2 + $0x20] sm:$0xff]
          %v3836 = vld [vmem:[#allocation2 + $0x28] sm:$0xff]
          %v3837 = vld [vmem:[#allocation2 + $0x30] sm:$0xff]
          %v3838 = vld [vmem:[#allocation2 + $0x38] sm:$0xff]
          %v3839 = vld [vmem:[#allocation2 + $0x40] sm:$0xff]
          %v3840 = vld [vmem:[#allocation2 + $0x48] sm:$0xff]
          %v3841 = vld [vmem:[#allocation2 + $0x50] sm:$0xff]
          %v3842 = vld [vmem:[#allocation2 + $0x58] sm:$0xff]
          %v3843 = vld [vmem:[#allocation2 + $0x60] sm:$0xff]
          %v3844 = vld [vmem:[#allocation2 + $0x68] sm:$0xff]
          %v3845 = vld [vmem:[#allocation2 + $0x70] sm:$0xff]
          %v3846 = vld [vmem:[#allocation2 + $0x78] sm:$0xff]
          %v3847 = vld [vmem:[#allocation2 + $0x80] sm:$0xff]
          %v3848 = vld [vmem:[#allocation2 + $0x88] sm:$0xff]
          %v3849 = vld [vmem:[#allocation2 + $0x90] sm:$0xff]
          %v3850 = vld [vmem:[#allocation2 + $0x98] sm:$0xff]
          %v3851 = vld [vmem:[#allocation2 + $0xa0] sm:$0xff]
          %v3852 = vld [vmem:[#allocation2 + $0xa8] sm:$0xff]
          %v3853 = vld [vmem:[#allocation2 + $0xb0] sm:$0xff]
          %v3854 = vld [vmem:[#allocation2 + $0xb8] sm:$0xff]
          %v3855 = vld [vmem:[#allocation2 + $0xc0] sm:$0xff]
          %v3856 = vld [vmem:[#allocation2 + $0xc8] sm:$0xff]
          %v3857 = vld [vmem:[#allocation2 + $0xd0] sm:$0xff]
          %v3858 = vld [vmem:[#allocation2 + $0xd8] sm:$0xff]
          %v3859 = vld [vmem:[#allocation2 + $0xe0] sm:$0xff]
          %v3860 = vld [vmem:[#allocation2 + $0xe8] sm:$0xff]
          %v3861 = vld [vmem:[#allocation2 + $0xf0] sm:$0xff]
          %v3862 = vld [vmem:[#allocation2 + $0xf8] sm:$0xff]
          %v3863 = vld [vmem:[#allocation2 + $0x100] sm:$0xff]
          %v3864 = vld [vmem:[#allocation2 + $0x108] sm:$0xff]
          %v3865 = vld [vmem:[#allocation2 + $0x110] sm:$0xff]
          %v3866 = vld [vmem:[#allocation2 + $0x118] sm:$0xff]
          %v3867 = vld [vmem:[#allocation2 + $0x120] sm:$0xff]
          %v3868 = vld [vmem:[#allocation2 + $0x128] sm:$0xff]
          %v3869 = vld [vmem:[#allocation2 + $0x130] sm:$0xff]
          %v3870 = vld [vmem:[#allocation2 + $0x138] sm:$0xff]
          %v3871 = vld [vmem:[#allocation2 + $0x140] sm:$0xff]
          %v3872 = vld [vmem:[#allocation2 + $0x148] sm:$0xff]
          %v3873 = vld [vmem:[#allocation2 + $0x150] sm:$0xff]
          %v3874 = vld [vmem:[#allocation2 + $0x158] sm:$0xff]
          %v3875 = vld [vmem:[#allocation2 + $0x160] sm:$0xff]
          %v3876 = vld [vmem:[#allocation2 + $0x168] sm:$0xff]
          %v3877 = vld [vmem:[#allocation2 + $0x170] sm:$0xff]
          %v3878 = vld [vmem:[#allocation2 + $0x178] sm:$0xff]
          %v3879 = vld [vmem:[#allocation2 + $0x180] sm:$0xff]
          %v3880 = vld [vmem:[#allocation2 + $0x188] sm:$0xff]
          %v3881 = vld [vmem:[#allocation2 + $0x190] sm:$0xff]
          %v3882 = vld [vmem:[#allocation2 + $0x198] sm:$0xff]
          %v3883 = vld [vmem:[#allocation2 + $0x1a0] sm:$0xff]
          %v3884 = vld [vmem:[#allocation2 + $0x1a8] sm:$0xff]
          %v3885 = vld [vmem:[#allocation2 + $0x1b0] sm:$0xff]
          %v3886 = vld [vmem:[#allocation2 + $0x1b8] sm:$0xff]
          %v3887 = vld [vmem:[#allocation2 + $0x1c0] sm:$0xff]
          %v3888 = vld [vmem:[#allocation2 + $0x1c8] sm:$0xff]
          %v3889 = vld [vmem:[#allocation2 + $0x1d0] sm:$0xff]
          %v3890 = vld [vmem:[#allocation2 + $0x1d8] sm:$0xff]
          %v3891 = vld [vmem:[#allocation2 + $0x1e0] sm:$0xff]
          %v3892 = vld [vmem:[#allocation2 + $0x1e8] sm:$0xff]
          %v3893 = vld [vmem:[#allocation2 + $0x1f0] sm:$0xff]
          %v3894 = vld [vmem:[#allocation2 + $0x1f8] sm:$0xff]
          %v3895 = vld [vmem:[#allocation2 + $0x200] sm:$0xff]
          %v3896 = vld [vmem:[#allocation2 + $0x208] sm:$0xff]
          %v3897 = vld [vmem:[#allocation2 + $0x210] sm:$0xff]
          %v3898 = vld [vmem:[#allocation2 + $0x218] sm:$0xff]
          %v3899 = vld [vmem:[#allocation2 + $0x220] sm:$0xff]
          %v3900 = vld [vmem:[#allocation2 + $0x228] sm:$0xff]
          %v3901 = vld [vmem:[#allocation2 + $0x230] sm:$0xff]
          %v3902 = vld [vmem:[#allocation2 + $0x238] sm:$0xff]
          %v3903 = vld [vmem:[#allocation2 + $0x240] sm:$0xff]
          %v3904 = vld [vmem:[#allocation2 + $0x248] sm:$0xff]
          %v3905 = vld [vmem:[#allocation2 + $0x250] sm:$0xff]
          %v3906 = vld [vmem:[#allocation2 + $0x258] sm:$0xff]
          %v3907 = vld [vmem:[#allocation2 + $0x260] sm:$0xff]
          %v3908 = vld [vmem:[#allocation2 + $0x268] sm:$0xff]
          %v3909 = vld [vmem:[#allocation2 + $0x270] sm:$0xff]
          %v3910 = vld [vmem:[#allocation2 + $0x278] sm:$0xff]
          %v3911 = vld [vmem:[#allocation2 + $0x280] sm:$0xff]
          %v3912 = vld [vmem:[#allocation2 + $0x288] sm:$0xff]
          %v3913 = vld [vmem:[#allocation2 + $0x290] sm:$0xff]
          %v3914 = vld [vmem:[#allocation2 + $0x298] sm:$0xff]
          %v3915 = vld [vmem:[#allocation2 + $0x2a0] sm:$0xff]
          %v3916 = vld [vmem:[#allocation2 + $0x2a8] sm:$0xff]
          %v3917 = vld [vmem:[#allocation2 + $0x2b0] sm:$0xff]
          %v3918 = vld [vmem:[#allocation2 + $0x2b8] sm:$0xff]
          %v3919 = vld [vmem:[#allocation2 + $0x2c0] sm:$0xff]
          %v3920 = vld [vmem:[#allocation2 + $0x2c8] sm:$0xff]
          %v3921 = vld [vmem:[#allocation2 + $0x2d0] sm:$0xff]
          %v3922 = vld [vmem:[#allocation2 + $0x2d8] sm:$0xff]
          %v3923 = vld [vmem:[#allocation2 + $0x2e0] sm:$0xff]
          %v3924 = vld [vmem:[#allocation2 + $0x2e8] sm:$0xff]
          %v3925 = vld [vmem:[#allocation2 + $0x2f0] sm:$0xff]
          %v3926 = vld [vmem:[#allocation2 + $0x2f8] sm:$0xff]
          %v3927 = vld [vmem:[#allocation2 + $0x300] sm:$0xff]
          %v3928 = vld [vmem:[#allocation2 + $0x308] sm:$0xff]
          %v3929 = vld [vmem:[#allocation2 + $0x310] sm:$0xff]
          %v3930 = vld [vmem:[#allocation2 + $0x318] sm:$0xff]
          %v3931 = vld [vmem:[#allocation2 + $0x320] sm:$0xff]
          %v3932 = vld [vmem:[#allocation2 + $0x328] sm:$0xff]
          %v3933 = vld [vmem:[#allocation2 + $0x330] sm:$0xff]
          %v3934 = vld [vmem:[#allocation2 + $0x338] sm:$0xff]
          %v3935 = vld [vmem:[#allocation2 + $0x340] sm:$0xff]
          %v3936 = vld [vmem:[#allocation2 + $0x348] sm:$0xff]
          %v3937 = vld [vmem:[#allocation2 + $0x350] sm:$0xff]
          %v3938 = vld [vmem:[#allocation2 + $0x358] sm:$0xff]
          %v3939 = vld [vmem:[#allocation2 + $0x360] sm:$0xff]
          %v3940 = vld [vmem:[#allocation2 + $0x368] sm:$0xff]
          %v3941 = vld [vmem:[#allocation2 + $0x370] sm:$0xff]
          %v3942 = vld [vmem:[#allocation2 + $0x378] sm:$0xff]
          %v3943 = vld [vmem:[#allocation2 + $0x380] sm:$0xff]
          %v3944 = vld [vmem:[#allocation2 + $0x388] sm:$0xff]
          %v3945 = vld [vmem:[#allocation2 + $0x390] sm:$0xff]
          %v3946 = vld [vmem:[#allocation2 + $0x398] sm:$0xff]
          %v3947 = vld [vmem:[#allocation2 + $0x3a0] sm:$0xff]
          %v3948 = vld [vmem:[#allocation2 + $0x3a8] sm:$0xff]
          %v3949 = vld [vmem:[#allocation2 + $0x3b0] sm:$0xff]
          %v3950 = vld [vmem:[#allocation2 + $0x3b8] sm:$0xff]
          %v3951 = vld [vmem:[#allocation2 + $0x3c0] sm:$0xff]
          %v3952 = vld [vmem:[#allocation2 + $0x3c8] sm:$0xff]
          %v3953 = vld [vmem:[#allocation2 + $0x3d0] sm:$0xff]
          %v3954 = vld [vmem:[#allocation2 + $0x3d8] sm:$0xff]
          %v3955 = vld [vmem:[#allocation2 + $0x3e0] sm:$0xff]
          %v3956 = vld [vmem:[#allocation2 + $0x3e8] sm:$0xff]
          %v3957 = vld [vmem:[#allocation2 + $0x3f0] sm:$0xff]
          %v3958 = vld [vmem:[#allocation2 + $0x3f8] sm:$0xff]
          %v3959 = vld [vmem:[#allocation2 + $0x400] sm:$0xff]
          %v3960 = vld [vmem:[#allocation2 + $0x408] sm:$0xff]
          %v3961 = vld [vmem:[#allocation2 + $0x410] sm:$0xff]
          %v3962 = vld [vmem:[#allocation2 + $0x418] sm:$0xff]
          %v3963 = vld [vmem:[#allocation2 + $0x420] sm:$0xff]
          %v3964 = vld [vmem:[#allocation2 + $0x428] sm:$0xff]
          %v3965 = vld [vmem:[#allocation2 + $0x430] sm:$0xff]
          %v3966 = vld [vmem:[#allocation2 + $0x438] sm:$0xff]
          %v3967 = vld [vmem:[#allocation2 + $0x440] sm:$0xff]
          %v3968 = vld [vmem:[#allocation2 + $0x448] sm:$0xff]
          %v3969 = vld [vmem:[#allocation2 + $0x450] sm:$0xff]
          %v3970 = vld [vmem:[#allocation2 + $0x458] sm:$0xff]
          %v3971 = vld [vmem:[#allocation2 + $0x460] sm:$0xff]
          %v3972 = vld [vmem:[#allocation2 + $0x468] sm:$0xff]
          %v3973 = vld [vmem:[#allocation2 + $0x470] sm:$0xff]
          %v3974 = vld [vmem:[#allocation2 + $0x478] sm:$0xff]
          %v3975 = vld [vmem:[#allocation2 + $0x480] sm:$0xff]
          %v3976 = vld [vmem:[#allocation2 + $0x488] sm:$0xff]
          %v3977 = vld [vmem:[#allocation2 + $0x490] sm:$0xff]
          %v3978 = vld [vmem:[#allocation2 + $0x498] sm:$0xff]
          %v3979 = vld [vmem:[#allocation2 + $0x4a0] sm:$0xff]
          %v3980 = vld [vmem:[#allocation2 + $0x4a8] sm:$0xff]
          %v3981 = vld [vmem:[#allocation2 + $0x4b0] sm:$0xff]
          %v3982 = vld [vmem:[#allocation2 + $0x4b8] sm:$0xff]
          %v3983 = vld [vmem:[#allocation2 + $0x4c0] sm:$0xff]
          %v3984 = vld [vmem:[#allocation2 + $0x4c8] sm:$0xff]
          %v3985 = vld [vmem:[#allocation2 + $0x4d0] sm:$0xff]
          %v3986 = vld [vmem:[#allocation2 + $0x4d8] sm:$0xff]
          %v3987 = vld [vmem:[#allocation2 + $0x4e0] sm:$0xff]
          %v3988 = vld [vmem:[#allocation2 + $0x4e8] sm:$0xff]
          %v3989 = vld [vmem:[#allocation2 + $0x4f0] sm:$0xff]
          %v3990 = vld [vmem:[#allocation2 + $0x4f8] sm:$0xff]
          %3991 = vadd.xlane.f32.xlu0 %v3831
          %v3992 = vpop.xlane.xlu0 %3991
          %3993 = vadd.xlane.f32.xlu0 %v3832
          %v3994 = vpop.xlane.xlu0 %3993
          %3995 = vadd.xlane.f32.xlu0 %v3833
          %v3996 = vpop.xlane.xlu0 %3995
          %3997 = vadd.xlane.f32.xlu0 %v3834
          %v3998 = vpop.xlane.xlu0 %3997
          %3999 = vadd.xlane.f32.xlu0 %v3835
          %v4000 = vpop.xlane.xlu0 %3999
          %4001 = vadd.xlane.f32.xlu0 %v3836
          %v4002 = vpop.xlane.xlu0 %4001
          %4003 = vadd.xlane.f32.xlu0 %v3837
          %v4004 = vpop.xlane.xlu0 %4003
          %4005 = vadd.xlane.f32.xlu0 %v3838
          %v4006 = vpop.xlane.xlu0 %4005
          %4007 = vadd.xlane.f32.xlu0 %v3839
          %v4008 = vpop.xlane.xlu0 %4007
          %4009 = vadd.xlane.f32.xlu0 %v3840
          %v4010 = vpop.xlane.xlu0 %4009
          %4011 = vadd.xlane.f32.xlu0 %v3841
          %v4012 = vpop.xlane.xlu0 %4011
          %4013 = vadd.xlane.f32.xlu0 %v3842
          %v4014 = vpop.xlane.xlu0 %4013
          %4015 = vadd.xlane.f32.xlu0 %v3843
          %v4016 = vpop.xlane.xlu0 %4015
          %4017 = vadd.xlane.f32.xlu0 %v3844
          %v4018 = vpop.xlane.xlu0 %4017
          %4019 = vadd.xlane.f32.xlu0 %v3845
          %v4020 = vpop.xlane.xlu0 %4019
          %4021 = vadd.xlane.f32.xlu0 %v3846
          %v4022 = vpop.xlane.xlu0 %4021
          %4023 = vadd.xlane.f32.xlu0 %v3847
          %v4024 = vpop.xlane.xlu0 %4023
          %4025 = vadd.xlane.f32.xlu0 %v3848
          %v4026 = vpop.xlane.xlu0 %4025
          %4027 = vadd.xlane.f32.xlu0 %v3849
          %v4028 = vpop.xlane.xlu0 %4027
          %4029 = vadd.xlane.f32.xlu0 %v3850
          %v4030 = vpop.xlane.xlu0 %4029
          %4031 = vadd.xlane.f32.xlu0 %v3851
          %v4032 = vpop.xlane.xlu0 %4031
          %4033 = vadd.xlane.f32.xlu0 %v3852
          %v4034 = vpop.xlane.xlu0 %4033
          %4035 = vadd.xlane.f32.xlu0 %v3853
          %v4036 = vpop.xlane.xlu0 %4035
          %4037 = vadd.xlane.f32.xlu0 %v3854
          %v4038 = vpop.xlane.xlu0 %4037
          %4039 = vadd.xlane.f32.xlu0 %v3855
          %v4040 = vpop.xlane.xlu0 %4039
          %4041 = vadd.xlane.f32.xlu0 %v3856
          %v4042 = vpop.xlane.xlu0 %4041
          %4043 = vadd.xlane.f32.xlu0 %v3857
          %v4044 = vpop.xlane.xlu0 %4043
          %4045 = vadd.xlane.f32.xlu0 %v3858
          %v4046 = vpop.xlane.xlu0 %4045
          %4047 = vadd.xlane.f32.xlu0 %v3859
          %v4048 = vpop.xlane.xlu0 %4047
          %4049 = vadd.xlane.f32.xlu0 %v3860
          %v4050 = vpop.xlane.xlu0 %4049
          %4051 = vadd.xlane.f32.xlu0 %v3861
          %v4052 = vpop.xlane.xlu0 %4051
          %4053 = vadd.xlane.f32.xlu0 %v3862
          %v4054 = vpop.xlane.xlu0 %4053
          %4055 = vadd.xlane.f32.xlu0 %v3863
          %v4056 = vpop.xlane.xlu0 %4055
          %4057 = vadd.xlane.f32.xlu0 %v3864
          %v4058 = vpop.xlane.xlu0 %4057
          %4059 = vadd.xlane.f32.xlu0 %v3865
          %v4060 = vpop.xlane.xlu0 %4059
          %4061 = vadd.xlane.f32.xlu0 %v3866
          %v4062 = vpop.xlane.xlu0 %4061
          %4063 = vadd.xlane.f32.xlu0 %v3867
          %v4064 = vpop.xlane.xlu0 %4063
          %4065 = vadd.xlane.f32.xlu0 %v3868
          %v4066 = vpop.xlane.xlu0 %4065
          %4067 = vadd.xlane.f32.xlu0 %v3869
          %v4068 = vpop.xlane.xlu0 %4067
          %4069 = vadd.xlane.f32.xlu0 %v3870
          %v4070 = vpop.xlane.xlu0 %4069
          %4071 = vadd.xlane.f32.xlu0 %v3871
          %v4072 = vpop.xlane.xlu0 %4071
          %4073 = vadd.xlane.f32.xlu0 %v3872
          %v4074 = vpop.xlane.xlu0 %4073
          %4075 = vadd.xlane.f32.xlu0 %v3873
          %v4076 = vpop.xlane.xlu0 %4075
          %4077 = vadd.xlane.f32.xlu0 %v3874
          %v4078 = vpop.xlane.xlu0 %4077
          %4079 = vadd.xlane.f32.xlu0 %v3875
          %v4080 = vpop.xlane.xlu0 %4079
          %4081 = vadd.xlane.f32.xlu0 %v3876
          %v4082 = vpop.xlane.xlu0 %4081
          %4083 = vadd.xlane.f32.xlu0 %v3877
          %v4084 = vpop.xlane.xlu0 %4083
          %4085 = vadd.xlane.f32.xlu0 %v3878
          %v4086 = vpop.xlane.xlu0 %4085
          %4087 = vadd.xlane.f32.xlu0 %v3879
          %v4088 = vpop.xlane.xlu0 %4087
          %4089 = vadd.xlane.f32.xlu0 %v3880
          %v4090 = vpop.xlane.xlu0 %4089
          %4091 = vadd.xlane.f32.xlu0 %v3881
          %v4092 = vpop.xlane.xlu0 %4091
          %4093 = vadd.xlane.f32.xlu0 %v3882
          %v4094 = vpop.xlane.xlu0 %4093
          %4095 = vadd.xlane.f32.xlu0 %v3883
          %v4096 = vpop.xlane.xlu0 %4095
          %4097 = vadd.xlane.f32.xlu0 %v3884
          %v4098 = vpop.xlane.xlu0 %4097
          %4099 = vadd.xlane.f32.xlu0 %v3885
          %v4100 = vpop.xlane.xlu0 %4099
          %4101 = vadd.xlane.f32.xlu0 %v3886
          %v4102 = vpop.xlane.xlu0 %4101
          %4103 = vadd.xlane.f32.xlu0 %v3887
          %v4104 = vpop.xlane.xlu0 %4103
          %4105 = vadd.xlane.f32.xlu0 %v3888
          %v4106 = vpop.xlane.xlu0 %4105
          %4107 = vadd.xlane.f32.xlu0 %v3889
          %v4108 = vpop.xlane.xlu0 %4107
          %4109 = vadd.xlane.f32.xlu0 %v3890
          %v4110 = vpop.xlane.xlu0 %4109
          %4111 = vadd.xlane.f32.xlu0 %v3891
          %v4112 = vpop.xlane.xlu0 %4111
          %4113 = vadd.xlane.f32.xlu0 %v3892
          %v4114 = vpop.xlane.xlu0 %4113
          %4115 = vadd.xlane.f32.xlu0 %v3893
          %v4116 = vpop.xlane.xlu0 %4115
          %4117 = vadd.xlane.f32.xlu0 %v3894
          %v4118 = vpop.xlane.xlu0 %4117
          %4119 = vadd.xlane.f32.xlu0 %v3895
          %v4120 = vpop.xlane.xlu0 %4119
          %4121 = vadd.xlane.f32.xlu0 %v3896
          %v4122 = vpop.xlane.xlu0 %4121
          %4123 = vadd.xlane.f32.xlu0 %v3897
          %v4124 = vpop.xlane.xlu0 %4123
          %4125 = vadd.xlane.f32.xlu0 %v3898
          %v4126 = vpop.xlane.xlu0 %4125
          %4127 = vadd.xlane.f32.xlu0 %v3899
          %v4128 = vpop.xlane.xlu0 %4127
          %4129 = vadd.xlane.f32.xlu0 %v3900
          %v4130 = vpop.xlane.xlu0 %4129
          %4131 = vadd.xlane.f32.xlu0 %v3901
          %v4132 = vpop.xlane.xlu0 %4131
          %4133 = vadd.xlane.f32.xlu0 %v3902
          %v4134 = vpop.xlane.xlu0 %4133
          %4135 = vadd.xlane.f32.xlu0 %v3903
          %v4136 = vpop.xlane.xlu0 %4135
          %4137 = vadd.xlane.f32.xlu0 %v3904
          %v4138 = vpop.xlane.xlu0 %4137
          %4139 = vadd.xlane.f32.xlu0 %v3905
          %v4140 = vpop.xlane.xlu0 %4139
          %4141 = vadd.xlane.f32.xlu0 %v3906
          %v4142 = vpop.xlane.xlu0 %4141
          %4143 = vadd.xlane.f32.xlu0 %v3907
          %v4144 = vpop.xlane.xlu0 %4143
          %4145 = vadd.xlane.f32.xlu0 %v3908
          %v4146 = vpop.xlane.xlu0 %4145
          %4147 = vadd.xlane.f32.xlu0 %v3909
          %v4148 = vpop.xlane.xlu0 %4147
          %4149 = vadd.xlane.f32.xlu0 %v3910
          %v4150 = vpop.xlane.xlu0 %4149
          %4151 = vadd.xlane.f32.xlu0 %v3911
          %v4152 = vpop.xlane.xlu0 %4151
          %4153 = vadd.xlane.f32.xlu0 %v3912
          %v4154 = vpop.xlane.xlu0 %4153
          %4155 = vadd.xlane.f32.xlu0 %v3913
          %v4156 = vpop.xlane.xlu0 %4155
          %4157 = vadd.xlane.f32.xlu0 %v3914
          %v4158 = vpop.xlane.xlu0 %4157
          %4159 = vadd.xlane.f32.xlu0 %v3915
          %v4160 = vpop.xlane.xlu0 %4159
          %4161 = vadd.xlane.f32.xlu0 %v3916
          %v4162 = vpop.xlane.xlu0 %4161
          %4163 = vadd.xlane.f32.xlu0 %v3917
          %v4164 = vpop.xlane.xlu0 %4163
          %4165 = vadd.xlane.f32.xlu0 %v3918
          %v4166 = vpop.xlane.xlu0 %4165
          %4167 = vadd.xlane.f32.xlu0 %v3919
          %v4168 = vpop.xlane.xlu0 %4167
          %4169 = vadd.xlane.f32.xlu0 %v3920
          %v4170 = vpop.xlane.xlu0 %4169
          %4171 = vadd.xlane.f32.xlu0 %v3921
          %v4172 = vpop.xlane.xlu0 %4171
          %4173 = vadd.xlane.f32.xlu0 %v3922
          %v4174 = vpop.xlane.xlu0 %4173
          %4175 = vadd.xlane.f32.xlu0 %v3923
          %v4176 = vpop.xlane.xlu0 %4175
          %4177 = vadd.xlane.f32.xlu0 %v3924
          %v4178 = vpop.xlane.xlu0 %4177
          %4179 = vadd.xlane.f32.xlu0 %v3925
          %v4180 = vpop.xlane.xlu0 %4179
          %4181 = vadd.xlane.f32.xlu0 %v3926
          %v4182 = vpop.xlane.xlu0 %4181
          %4183 = vadd.xlane.f32.xlu0 %v3927
          %v4184 = vpop.xlane.xlu0 %4183
          %4185 = vadd.xlane.f32.xlu0 %v3928
          %v4186 = vpop.xlane.xlu0 %4185
          %4187 = vadd.xlane.f32.xlu0 %v3929
          %v4188 = vpop.xlane.xlu0 %4187
          %4189 = vadd.xlane.f32.xlu0 %v3930
          %v4190 = vpop.xlane.xlu0 %4189
          %4191 = vadd.xlane.f32.xlu0 %v3931
          %v4192 = vpop.xlane.xlu0 %4191
          %4193 = vadd.xlane.f32.xlu0 %v3932
          %v4194 = vpop.xlane.xlu0 %4193
          %4195 = vadd.xlane.f32.xlu0 %v3933
          %v4196 = vpop.xlane.xlu0 %4195
          %4197 = vadd.xlane.f32.xlu0 %v3934
          %v4198 = vpop.xlane.xlu0 %4197
          %4199 = vadd.xlane.f32.xlu0 %v3935
          %v4200 = vpop.xlane.xlu0 %4199
          %4201 = vadd.xlane.f32.xlu0 %v3936
          %v4202 = vpop.xlane.xlu0 %4201
          %4203 = vadd.xlane.f32.xlu0 %v3937
          %v4204 = vpop.xlane.xlu0 %4203
          %4205 = vadd.xlane.f32.xlu0 %v3938
          %v4206 = vpop.xlane.xlu0 %4205
          %4207 = vadd.xlane.f32.xlu0 %v3939
          %v4208 = vpop.xlane.xlu0 %4207
          %4209 = vadd.xlane.f32.xlu0 %v3940
          %v4210 = vpop.xlane.xlu0 %4209
          %4211 = vadd.xlane.f32.xlu0 %v3941
          %v4212 = vpop.xlane.xlu0 %4211
          %4213 = vadd.xlane.f32.xlu0 %v3942
          %v4214 = vpop.xlane.xlu0 %4213
          %4215 = vadd.xlane.f32.xlu0 %v3943
          %v4216 = vpop.xlane.xlu0 %4215
          %4217 = vadd.xlane.f32.xlu0 %v3944
          %v4218 = vpop.xlane.xlu0 %4217
          %4219 = vadd.xlane.f32.xlu0 %v3945
          %v4220 = vpop.xlane.xlu0 %4219
          %4221 = vadd.xlane.f32.xlu0 %v3946
          %v4222 = vpop.xlane.xlu0 %4221
          %4223 = vadd.xlane.f32.xlu0 %v3947
          %v4224 = vpop.xlane.xlu0 %4223
          %4225 = vadd.xlane.f32.xlu0 %v3948
          %v4226 = vpop.xlane.xlu0 %4225
          %4227 = vadd.xlane.f32.xlu0 %v3949
          %v4228 = vpop.xlane.xlu0 %4227
          %4229 = vadd.xlane.f32.xlu0 %v3950
          %v4230 = vpop.xlane.xlu0 %4229
          %4231 = vadd.xlane.f32.xlu0 %v3951
          %v4232 = vpop.xlane.xlu0 %4231
          %4233 = vadd.xlane.f32.xlu0 %v3952
          %v4234 = vpop.xlane.xlu0 %4233
          %4235 = vadd.xlane.f32.xlu0 %v3953
          %v4236 = vpop.xlane.xlu0 %4235
          %4237 = vadd.xlane.f32.xlu0 %v3954
          %v4238 = vpop.xlane.xlu0 %4237
          %4239 = vadd.xlane.f32.xlu0 %v3955
          %v4240 = vpop.xlane.xlu0 %4239
          %4241 = vadd.xlane.f32.xlu0 %v3956
          %v4242 = vpop.xlane.xlu0 %4241
          %4243 = vadd.xlane.f32.xlu0 %v3957
          %v4244 = vpop.xlane.xlu0 %4243
          %4245 = vadd.xlane.f32.xlu0 %v3958
          %v4246 = vpop.xlane.xlu0 %4245
          %4247 = vadd.xlane.f32.xlu0 %v3959
          %v4248 = vpop.xlane.xlu0 %4247
          %4249 = vadd.xlane.f32.xlu0 %v3960
          %v4250 = vpop.xlane.xlu0 %4249
          %4251 = vadd.xlane.f32.xlu0 %v3961
          %v4252 = vpop.xlane.xlu0 %4251
          %4253 = vadd.xlane.f32.xlu0 %v3962
          %v4254 = vpop.xlane.xlu0 %4253
          %4255 = vadd.xlane.f32.xlu0 %v3963
          %v4256 = vpop.xlane.xlu0 %4255
          %4257 = vadd.xlane.f32.xlu0 %v3964
          %v4258 = vpop.xlane.xlu0 %4257
          %4259 = vadd.xlane.f32.xlu0 %v3965
          %v4260 = vpop.xlane.xlu0 %4259
          %4261 = vadd.xlane.f32.xlu0 %v3966
          %v4262 = vpop.xlane.xlu0 %4261
          %4263 = vadd.xlane.f32.xlu0 %v3967
          %v4264 = vpop.xlane.xlu0 %4263
          %4265 = vadd.xlane.f32.xlu0 %v3968
          %v4266 = vpop.xlane.xlu0 %4265
          %4267 = vadd.xlane.f32.xlu0 %v3969
          %v4268 = vpop.xlane.xlu0 %4267
          %4269 = vadd.xlane.f32.xlu0 %v3970
          %v4270 = vpop.xlane.xlu0 %4269
          %4271 = vadd.xlane.f32.xlu0 %v3971
          %v4272 = vpop.xlane.xlu0 %4271
          %4273 = vadd.xlane.f32.xlu0 %v3972
          %v4274 = vpop.xlane.xlu0 %4273
          %4275 = vadd.xlane.f32.xlu0 %v3973
          %v4276 = vpop.xlane.xlu0 %4275
          %4277 = vadd.xlane.f32.xlu0 %v3974
          %v4278 = vpop.xlane.xlu0 %4277
          %4279 = vadd.xlane.f32.xlu0 %v3975
          %v4280 = vpop.xlane.xlu0 %4279
          %4281 = vadd.xlane.f32.xlu0 %v3976
          %v4282 = vpop.xlane.xlu0 %4281
          %4283 = vadd.xlane.f32.xlu0 %v3977
          %v4284 = vpop.xlane.xlu0 %4283
          %4285 = vadd.xlane.f32.xlu0 %v3978
          %v4286 = vpop.xlane.xlu0 %4285
          %4287 = vadd.xlane.f32.xlu0 %v3979
          %v4288 = vpop.xlane.xlu0 %4287
          %4289 = vadd.xlane.f32.xlu0 %v3980
          %v4290 = vpop.xlane.xlu0 %4289
          %4291 = vadd.xlane.f32.xlu0 %v3981
          %v4292 = vpop.xlane.xlu0 %4291
          %4293 = vadd.xlane.f32.xlu0 %v3982
          %v4294 = vpop.xlane.xlu0 %4293
          %4295 = vadd.xlane.f32.xlu0 %v3983
          %v4296 = vpop.xlane.xlu0 %4295
          %4297 = vadd.xlane.f32.xlu0 %v3984
          %v4298 = vpop.xlane.xlu0 %4297
          %4299 = vadd.xlane.f32.xlu0 %v3985
          %v4300 = vpop.xlane.xlu0 %4299
          %4301 = vadd.xlane.f32.xlu0 %v3986
          %v4302 = vpop.xlane.xlu0 %4301
          %4303 = vadd.xlane.f32.xlu0 %v3987
          %v4304 = vpop.xlane.xlu0 %4303
          %4305 = vadd.xlane.f32.xlu0 %v3988
          %v4306 = vpop.xlane.xlu0 %4305
          %4307 = vadd.xlane.f32.xlu0 %v3989
          %v4308 = vpop.xlane.xlu0 %4307
          %4309 = vadd.xlane.f32.xlu0 %v3990
          %v4310 = vpop.xlane.xlu0 %4309
          %v4311 = vmul.f32 %v3992, 0.00390625
          %v4312 = vmul.f32 %v3994, 0.00390625
          %v4313 = vmul.f32 %v3996, 0.00390625
          %v4314 = vmul.f32 %v3998, 0.00390625
          %v4315 = vmul.f32 %v4000, 0.00390625
          %v4316 = vmul.f32 %v4002, 0.00390625
          %v4317 = vmul.f32 %v4004, 0.00390625
          %v4318 = vmul.f32 %v4006, 0.00390625
          %v4319 = vmul.f32 %v4008, 0.00390625
          %v4320 = vmul.f32 %v4010, 0.00390625
          %v4321 = vmul.f32 %v4012, 0.00390625
          %v4322 = vmul.f32 %v4014, 0.00390625
          %v4323 = vmul.f32 %v4016, 0.00390625
          %v4324 = vmul.f32 %v4018, 0.00390625
          %v4325 = vmul.f32 %v4020, 0.00390625
          %v4326 = vmul.f32 %v4022, 0.00390625
          %v4327 = vmul.f32 %v4024, 0.00390625
          %v4328 = vmul.f32 %v4026, 0.00390625
          %v4329 = vmul.f32 %v4028, 0.00390625
          %v4330 = vmul.f32 %v4030, 0.00390625
          %v4331 = vmul.f32 %v4032, 0.00390625
          %v4332 = vmul.f32 %v4034, 0.00390625
          %v4333 = vmul.f32 %v4036, 0.00390625
          %v4334 = vmul.f32 %v4038, 0.00390625
          %v4335 = vmul.f32 %v4040, 0.00390625
          %v4336 = vmul.f32 %v4042, 0.00390625
          %v4337 = vmul.f32 %v4044, 0.00390625
          %v4338 = vmul.f32 %v4046, 0.00390625
          %v4339 = vmul.f32 %v4048, 0.00390625
          %v4340 = vmul.f32 %v4050, 0.00390625
          %v4341 = vmul.f32 %v4052, 0.00390625
          %v4342 = vmul.f32 %v4054, 0.00390625
          %v4343 = vmul.f32 %v4056, 0.00390625
          %v4344 = vmul.f32 %v4058, 0.00390625
          %v4345 = vmul.f32 %v4060, 0.00390625
          %v4346 = vmul.f32 %v4062, 0.00390625
          %v4347 = vmul.f32 %v4064, 0.00390625
          %v4348 = vmul.f32 %v4066, 0.00390625
          %v4349 = vmul.f32 %v4068, 0.00390625
          %v4350 = vmul.f32 %v4070, 0.00390625
          %v4351 = vmul.f32 %v4072, 0.00390625
          %v4352 = vmul.f32 %v4074, 0.00390625
          %v4353 = vmul.f32 %v4076, 0.00390625
          %v4354 = vmul.f32 %v4078, 0.00390625
          %v4355 = vmul.f32 %v4080, 0.00390625
          %v4356 = vmul.f32 %v4082, 0.00390625
          %v4357 = vmul.f32 %v4084, 0.00390625
          %v4358 = vmul.f32 %v4086, 0.00390625
          %v4359 = vmul.f32 %v4088, 0.00390625
          %v4360 = vmul.f32 %v4090, 0.00390625
          %v4361 = vmul.f32 %v4092, 0.00390625
          %v4362 = vmul.f32 %v4094, 0.00390625
          %v4363 = vmul.f32 %v4096, 0.00390625
          %v4364 = vmul.f32 %v4098, 0.00390625
          %v4365 = vmul.f32 %v4100, 0.00390625
          %v4366 = vmul.f32 %v4102, 0.00390625
          %v4367 = vmul.f32 %v4104, 0.00390625
          %v4368 = vmul.f32 %v4106, 0.00390625
          %v4369 = vmul.f32 %v4108, 0.00390625
          %v4370 = vmul.f32 %v4110, 0.00390625
          %v4371 = vmul.f32 %v4112, 0.00390625
          %v4372 = vmul.f32 %v4114, 0.00390625
          %v4373 = vmul.f32 %v4116, 0.00390625
          %v4374 = vmul.f32 %v4118, 0.00390625
          %v4375 = vmul.f32 %v4120, 0.00390625
          %v4376 = vmul.f32 %v4122, 0.00390625
          %v4377 = vmul.f32 %v4124, 0.00390625
          %v4378 = vmul.f32 %v4126, 0.00390625
          %v4379 = vmul.f32 %v4128, 0.00390625
          %v4380 = vmul.f32 %v4130, 0.00390625
          %v4381 = vmul.f32 %v4132, 0.00390625
          %v4382 = vmul.f32 %v4134, 0.00390625
          %v4383 = vmul.f32 %v4136, 0.00390625
          %v4384 = vmul.f32 %v4138, 0.00390625
          %v4385 = vmul.f32 %v4140, 0.00390625
          %v4386 = vmul.f32 %v4142, 0.00390625
          %v4387 = vmul.f32 %v4144, 0.00390625
          %v4388 = vmul.f32 %v4146, 0.00390625
          %v4389 = vmul.f32 %v4148, 0.00390625
          %v4390 = vmul.f32 %v4150, 0.00390625
          %v4391 = vmul.f32 %v4152, 0.00390625
          %v4392 = vmul.f32 %v4154, 0.00390625
          %v4393 = vmul.f32 %v4156, 0.00390625
          %v4394 = vmul.f32 %v4158, 0.00390625
          %v4395 = vmul.f32 %v4160, 0.00390625
          %v4396 = vmul.f32 %v4162, 0.00390625
          %v4397 = vmul.f32 %v4164, 0.00390625
          %v4398 = vmul.f32 %v4166, 0.00390625
          %v4399 = vmul.f32 %v4168, 0.00390625
          %v4400 = vmul.f32 %v4170, 0.00390625
          %v4401 = vmul.f32 %v4172, 0.00390625
          %v4402 = vmul.f32 %v4174, 0.00390625
          %v4403 = vmul.f32 %v4176, 0.00390625
          %v4404 = vmul.f32 %v4178, 0.00390625
          %v4405 = vmul.f32 %v4180, 0.00390625
          %v4406 = vmul.f32 %v4182, 0.00390625
          %v4407 = vmul.f32 %v4184, 0.00390625
          %v4408 = vmul.f32 %v4186, 0.00390625
          %v4409 = vmul.f32 %v4188, 0.00390625
          %v4410 = vmul.f32 %v4190, 0.00390625
          %v4411 = vmul.f32 %v4192, 0.00390625
          %v4412 = vmul.f32 %v4194, 0.00390625
          %v4413 = vmul.f32 %v4196, 0.00390625
          %v4414 = vmul.f32 %v4198, 0.00390625
          %v4415 = vmul.f32 %v4200, 0.00390625
          %v4416 = vmul.f32 %v4202, 0.00390625
          %v4417 = vmul.f32 %v4204, 0.00390625
          %v4418 = vmul.f32 %v4206, 0.00390625
          %v4419 = vmul.f32 %v4208, 0.00390625
          %v4420 = vmul.f32 %v4210, 0.00390625
          %v4421 = vmul.f32 %v4212, 0.00390625
          %v4422 = vmul.f32 %v4214, 0.00390625
          %v4423 = vmul.f32 %v4216, 0.00390625
          %v4424 = vmul.f32 %v4218, 0.00390625
          %v4425 = vmul.f32 %v4220, 0.00390625
          %v4426 = vmul.f32 %v4222, 0.00390625
          %v4427 = vmul.f32 %v4224, 0.00390625
          %v4428 = vmul.f32 %v4226, 0.00390625
          %v4429 = vmul.f32 %v4228, 0.00390625
          %v4430 = vmul.f32 %v4230, 0.00390625
          %v4431 = vmul.f32 %v4232, 0.00390625
          %v4432 = vmul.f32 %v4234, 0.00390625
          %v4433 = vmul.f32 %v4236, 0.00390625
          %v4434 = vmul.f32 %v4238, 0.00390625
          %v4435 = vmul.f32 %v4240, 0.00390625
          %v4436 = vmul.f32 %v4242, 0.00390625
          %v4437 = vmul.f32 %v4244, 0.00390625
          %v4438 = vmul.f32 %v4246, 0.00390625
          %v4439 = vmul.f32 %v4248, 0.00390625
          %v4440 = vmul.f32 %v4250, 0.00390625
          %v4441 = vmul.f32 %v4252, 0.00390625
          %v4442 = vmul.f32 %v4254, 0.00390625
          %v4443 = vmul.f32 %v4256, 0.00390625
          %v4444 = vmul.f32 %v4258, 0.00390625
          %v4445 = vmul.f32 %v4260, 0.00390625
          %v4446 = vmul.f32 %v4262, 0.00390625
          %v4447 = vmul.f32 %v4264, 0.00390625
          %v4448 = vmul.f32 %v4266, 0.00390625
          %v4449 = vmul.f32 %v4268, 0.00390625
          %v4450 = vmul.f32 %v4270, 0.00390625
          %v4451 = vmul.f32 %v4272, 0.00390625
          %v4452 = vmul.f32 %v4274, 0.00390625
          %v4453 = vmul.f32 %v4276, 0.00390625
          %v4454 = vmul.f32 %v4278, 0.00390625
          %v4455 = vmul.f32 %v4280, 0.00390625
          %v4456 = vmul.f32 %v4282, 0.00390625
          %v4457 = vmul.f32 %v4284, 0.00390625
          %v4458 = vmul.f32 %v4286, 0.00390625
          %v4459 = vmul.f32 %v4288, 0.00390625
          %v4460 = vmul.f32 %v4290, 0.00390625
          %v4461 = vmul.f32 %v4292, 0.00390625
          %v4462 = vmul.f32 %v4294, 0.00390625
          %v4463 = vmul.f32 %v4296, 0.00390625
          %v4464 = vmul.f32 %v4298, 0.00390625
          %v4465 = vmul.f32 %v4300, 0.00390625
          %v4466 = vmul.f32 %v4302, 0.00390625
          %v4467 = vmul.f32 %v4304, 0.00390625
          %v4468 = vmul.f32 %v4306, 0.00390625
          %v4469 = vmul.f32 %v4308, 0.00390625
          %v4470 = vmul.f32 %v4310, 0.00390625
          %vm4471 = vcmask 7168
          %4472 = vst.msk [vmem:[%s205] sm:$0xff] %vm4471, %v4311
          %4473 = vst.msk [vmem:[%s205 + $0x8] sm:$0xff] %vm4471, %v4312
          %4474 = vst.msk [vmem:[%s205 + $0x10] sm:$0xff] %vm4471, %v4313
          %4475 = vst.msk [vmem:[%s205 + $0x18] sm:$0xff] %vm4471, %v4314
          %4476 = vst.msk [vmem:[%s205 + $0x20] sm:$0xff] %vm4471, %v4315
          %4477 = vst.msk [vmem:[%s205 + $0x28] sm:$0xff] %vm4471, %v4316
          %4478 = vst.msk [vmem:[%s205 + $0x30] sm:$0xff] %vm4471, %v4317
          %4479 = vst.msk [vmem:[%s205 + $0x38] sm:$0xff] %vm4471, %v4318
          %4480 = vst.msk [vmem:[%s205 + $0x40] sm:$0xff] %vm4471, %v4319
          %4481 = vst.msk [vmem:[%s205 + $0x48] sm:$0xff] %vm4471, %v4320
          %4482 = vst.msk [vmem:[%s205 + $0x50] sm:$0xff] %vm4471, %v4321
          %4483 = vst.msk [vmem:[%s205 + $0x58] sm:$0xff] %vm4471, %v4322
          %4484 = vst.msk [vmem:[%s205 + $0x60] sm:$0xff] %vm4471, %v4323
          %4485 = vst.msk [vmem:[%s205 + $0x68] sm:$0xff] %vm4471, %v4324
          %4486 = vst.msk [vmem:[%s205 + $0x70] sm:$0xff] %vm4471, %v4325
          %4487 = vst.msk [vmem:[%s205 + $0x78] sm:$0xff] %vm4471, %v4326
          %4488 = vst.msk [vmem:[%s205 + $0x80] sm:$0xff] %vm4471, %v4327
          %4489 = vst.msk [vmem:[%s205 + $0x88] sm:$0xff] %vm4471, %v4328
          %4490 = vst.msk [vmem:[%s205 + $0x90] sm:$0xff] %vm4471, %v4329
          %4491 = vst.msk [vmem:[%s205 + $0x98] sm:$0xff] %vm4471, %v4330
          %4492 = vst.msk [vmem:[%s205 + $0xa0] sm:$0xff] %vm4471, %v4331
          %4493 = vst.msk [vmem:[%s205 + $0xa8] sm:$0xff] %vm4471, %v4332
          %4494 = vst.msk [vmem:[%s205 + $0xb0] sm:$0xff] %vm4471, %v4333
          %4495 = vst.msk [vmem:[%s205 + $0xb8] sm:$0xff] %vm4471, %v4334
          %4496 = vst.msk [vmem:[%s205 + $0xc0] sm:$0xff] %vm4471, %v4335
          %4497 = vst.msk [vmem:[%s205 + $0xc8] sm:$0xff] %vm4471, %v4336
          %4498 = vst.msk [vmem:[%s205 + $0xd0] sm:$0xff] %vm4471, %v4337
          %4499 = vst.msk [vmem:[%s205 + $0xd8] sm:$0xff] %vm4471, %v4338
          %4500 = vst.msk [vmem:[%s205 + $0xe0] sm:$0xff] %vm4471, %v4339
          %4501 = vst.msk [vmem:[%s205 + $0xe8] sm:$0xff] %vm4471, %v4340
          %4502 = vst.msk [vmem:[%s205 + $0xf0] sm:$0xff] %vm4471, %v4341
          %4503 = vst.msk [vmem:[%s205 + $0xf8] sm:$0xff] %vm4471, %v4342
          %4504 = vst.msk [vmem:[%s205 + $0x100] sm:$0xff] %vm4471, %v4343
          %4505 = vst.msk [vmem:[%s205 + $0x108] sm:$0xff] %vm4471, %v4344
          %4506 = vst.msk [vmem:[%s205 + $0x110] sm:$0xff] %vm4471, %v4345
          %4507 = vst.msk [vmem:[%s205 + $0x118] sm:$0xff] %vm4471, %v4346
          %4508 = vst.msk [vmem:[%s205 + $0x120] sm:$0xff] %vm4471, %v4347
          %4509 = vst.msk [vmem:[%s205 + $0x128] sm:$0xff] %vm4471, %v4348
          %4510 = vst.msk [vmem:[%s205 + $0x130] sm:$0xff] %vm4471, %v4349
          %4511 = vst.msk [vmem:[%s205 + $0x138] sm:$0xff] %vm4471, %v4350
          %4512 = vst.msk [vmem:[%s205 + $0x140] sm:$0xff] %vm4471, %v4351
          %4513 = vst.msk [vmem:[%s205 + $0x148] sm:$0xff] %vm4471, %v4352
          %4514 = vst.msk [vmem:[%s205 + $0x150] sm:$0xff] %vm4471, %v4353
          %4515 = vst.msk [vmem:[%s205 + $0x158] sm:$0xff] %vm4471, %v4354
          %4516 = vst.msk [vmem:[%s205 + $0x160] sm:$0xff] %vm4471, %v4355
          %4517 = vst.msk [vmem:[%s205 + $0x168] sm:$0xff] %vm4471, %v4356
          %4518 = vst.msk [vmem:[%s205 + $0x170] sm:$0xff] %vm4471, %v4357
          %4519 = vst.msk [vmem:[%s205 + $0x178] sm:$0xff] %vm4471, %v4358
          %4520 = vst.msk [vmem:[%s205 + $0x180] sm:$0xff] %vm4471, %v4359
          %4521 = vst.msk [vmem:[%s205 + $0x188] sm:$0xff] %vm4471, %v4360
          %4522 = vst.msk [vmem:[%s205 + $0x190] sm:$0xff] %vm4471, %v4361
          %4523 = vst.msk [vmem:[%s205 + $0x198] sm:$0xff] %vm4471, %v4362
          %4524 = vst.msk [vmem:[%s205 + $0x1a0] sm:$0xff] %vm4471, %v4363
          %4525 = vst.msk [vmem:[%s205 + $0x1a8] sm:$0xff] %vm4471, %v4364
          %4526 = vst.msk [vmem:[%s205 + $0x1b0] sm:$0xff] %vm4471, %v4365
          %4527 = vst.msk [vmem:[%s205 + $0x1b8] sm:$0xff] %vm4471, %v4366
          %4528 = vst.msk [vmem:[%s205 + $0x1c0] sm:$0xff] %vm4471, %v4367
          %4529 = vst.msk [vmem:[%s205 + $0x1c8] sm:$0xff] %vm4471, %v4368
          %4530 = vst.msk [vmem:[%s205 + $0x1d0] sm:$0xff] %vm4471, %v4369
          %4531 = vst.msk [vmem:[%s205 + $0x1d8] sm:$0xff] %vm4471, %v4370
          %4532 = vst.msk [vmem:[%s205 + $0x1e0] sm:$0xff] %vm4471, %v4371
          %4533 = vst.msk [vmem:[%s205 + $0x1e8] sm:$0xff] %vm4471, %v4372
          %4534 = vst.msk [vmem:[%s205 + $0x1f0] sm:$0xff] %vm4471, %v4373
          %4535 = vst.msk [vmem:[%s205 + $0x1f8] sm:$0xff] %vm4471, %v4374
          %4536 = vst.msk [vmem:[%s205 + $0x200] sm:$0xff] %vm4471, %v4375
          %4537 = vst.msk [vmem:[%s205 + $0x208] sm:$0xff] %vm4471, %v4376
          %4538 = vst.msk [vmem:[%s205 + $0x210] sm:$0xff] %vm4471, %v4377
          %4539 = vst.msk [vmem:[%s205 + $0x218] sm:$0xff] %vm4471, %v4378
          %4540 = vst.msk [vmem:[%s205 + $0x220] sm:$0xff] %vm4471, %v4379
          %4541 = vst.msk [vmem:[%s205 + $0x228] sm:$0xff] %vm4471, %v4380
          %4542 = vst.msk [vmem:[%s205 + $0x230] sm:$0xff] %vm4471, %v4381
          %4543 = vst.msk [vmem:[%s205 + $0x238] sm:$0xff] %vm4471, %v4382
          %4544 = vst.msk [vmem:[%s205 + $0x240] sm:$0xff] %vm4471, %v4383
          %4545 = vst.msk [vmem:[%s205 + $0x248] sm:$0xff] %vm4471, %v4384
          %4546 = vst.msk [vmem:[%s205 + $0x250] sm:$0xff] %vm4471, %v4385
          %4547 = vst.msk [vmem:[%s205 + $0x258] sm:$0xff] %vm4471, %v4386
          %4548 = vst.msk [vmem:[%s205 + $0x260] sm:$0xff] %vm4471, %v4387
          %4549 = vst.msk [vmem:[%s205 + $0x268] sm:$0xff] %vm4471, %v4388
          %4550 = vst.msk [vmem:[%s205 + $0x270] sm:$0xff] %vm4471, %v4389
          %4551 = vst.msk [vmem:[%s205 + $0x278] sm:$0xff] %vm4471, %v4390
          %4552 = vst.msk [vmem:[%s205 + $0x280] sm:$0xff] %vm4471, %v4391
          %4553 = vst.msk [vmem:[%s205 + $0x288] sm:$0xff] %vm4471, %v4392
          %4554 = vst.msk [vmem:[%s205 + $0x290] sm:$0xff] %vm4471, %v4393
          %4555 = vst.msk [vmem:[%s205 + $0x298] sm:$0xff] %vm4471, %v4394
          %4556 = vst.msk [vmem:[%s205 + $0x2a0] sm:$0xff] %vm4471, %v4395
          %4557 = vst.msk [vmem:[%s205 + $0x2a8] sm:$0xff] %vm4471, %v4396
          %4558 = vst.msk [vmem:[%s205 + $0x2b0] sm:$0xff] %vm4471, %v4397
          %4559 = vst.msk [vmem:[%s205 + $0x2b8] sm:$0xff] %vm4471, %v4398
          %4560 = vst.msk [vmem:[%s205 + $0x2c0] sm:$0xff] %vm4471, %v4399
          %4561 = vst.msk [vmem:[%s205 + $0x2c8] sm:$0xff] %vm4471, %v4400
          %4562 = vst.msk [vmem:[%s205 + $0x2d0] sm:$0xff] %vm4471, %v4401
          %4563 = vst.msk [vmem:[%s205 + $0x2d8] sm:$0xff] %vm4471, %v4402
          %4564 = vst.msk [vmem:[%s205 + $0x2e0] sm:$0xff] %vm4471, %v4403
          %4565 = vst.msk [vmem:[%s205 + $0x2e8] sm:$0xff] %vm4471, %v4404
          %4566 = vst.msk [vmem:[%s205 + $0x2f0] sm:$0xff] %vm4471, %v4405
          %4567 = vst.msk [vmem:[%s205 + $0x2f8] sm:$0xff] %vm4471, %v4406
          %4568 = vst.msk [vmem:[%s205 + $0x300] sm:$0xff] %vm4471, %v4407
          %4569 = vst.msk [vmem:[%s205 + $0x308] sm:$0xff] %vm4471, %v4408
          %4570 = vst.msk [vmem:[%s205 + $0x310] sm:$0xff] %vm4471, %v4409
          %4571 = vst.msk [vmem:[%s205 + $0x318] sm:$0xff] %vm4471, %v4410
          %4572 = vst.msk [vmem:[%s205 + $0x320] sm:$0xff] %vm4471, %v4411
          %4573 = vst.msk [vmem:[%s205 + $0x328] sm:$0xff] %vm4471, %v4412
          %4574 = vst.msk [vmem:[%s205 + $0x330] sm:$0xff] %vm4471, %v4413
          %4575 = vst.msk [vmem:[%s205 + $0x338] sm:$0xff] %vm4471, %v4414
          %4576 = vst.msk [vmem:[%s205 + $0x340] sm:$0xff] %vm4471, %v4415
          %4577 = vst.msk [vmem:[%s205 + $0x348] sm:$0xff] %vm4471, %v4416
          %4578 = vst.msk [vmem:[%s205 + $0x350] sm:$0xff] %vm4471, %v4417
          %4579 = vst.msk [vmem:[%s205 + $0x358] sm:$0xff] %vm4471, %v4418
          %4580 = vst.msk [vmem:[%s205 + $0x360] sm:$0xff] %vm4471, %v4419
          %4581 = vst.msk [vmem:[%s205 + $0x368] sm:$0xff] %vm4471, %v4420
          %4582 = vst.msk [vmem:[%s205 + $0x370] sm:$0xff] %vm4471, %v4421
          %4583 = vst.msk [vmem:[%s205 + $0x378] sm:$0xff] %vm4471, %v4422
          %4584 = vst.msk [vmem:[%s205 + $0x380] sm:$0xff] %vm4471, %v4423
          %4585 = vst.msk [vmem:[%s205 + $0x388] sm:$0xff] %vm4471, %v4424
          %4586 = vst.msk [vmem:[%s205 + $0x390] sm:$0xff] %vm4471, %v4425
          %4587 = vst.msk [vmem:[%s205 + $0x398] sm:$0xff] %vm4471, %v4426
          %4588 = vst.msk [vmem:[%s205 + $0x3a0] sm:$0xff] %vm4471, %v4427
          %4589 = vst.msk [vmem:[%s205 + $0x3a8] sm:$0xff] %vm4471, %v4428
          %4590 = vst.msk [vmem:[%s205 + $0x3b0] sm:$0xff] %vm4471, %v4429
          %4591 = vst.msk [vmem:[%s205 + $0x3b8] sm:$0xff] %vm4471, %v4430
          %4592 = vst.msk [vmem:[%s205 + $0x3c0] sm:$0xff] %vm4471, %v4431
          %4593 = vst.msk [vmem:[%s205 + $0x3c8] sm:$0xff] %vm4471, %v4432
          %4594 = vst.msk [vmem:[%s205 + $0x3d0] sm:$0xff] %vm4471, %v4433
          %4595 = vst.msk [vmem:[%s205 + $0x3d8] sm:$0xff] %vm4471, %v4434
          %4596 = vst.msk [vmem:[%s205 + $0x3e0] sm:$0xff] %vm4471, %v4435
          %4597 = vst.msk [vmem:[%s205 + $0x3e8] sm:$0xff] %vm4471, %v4436
          %4598 = vst.msk [vmem:[%s205 + $0x3f0] sm:$0xff] %vm4471, %v4437
          %4599 = vst.msk [vmem:[%s205 + $0x3f8] sm:$0xff] %vm4471, %v4438
          %4600 = vst.msk [vmem:[%s205 + $0x400] sm:$0xff] %vm4471, %v4439
          %4601 = vst.msk [vmem:[%s205 + $0x408] sm:$0xff] %vm4471, %v4440
          %4602 = vst.msk [vmem:[%s205 + $0x410] sm:$0xff] %vm4471, %v4441
          %4603 = vst.msk [vmem:[%s205 + $0x418] sm:$0xff] %vm4471, %v4442
          %4604 = vst.msk [vmem:[%s205 + $0x420] sm:$0xff] %vm4471, %v4443
          %4605 = vst.msk [vmem:[%s205 + $0x428] sm:$0xff] %vm4471, %v4444
          %4606 = vst.msk [vmem:[%s205 + $0x430] sm:$0xff] %vm4471, %v4445
          %4607 = vst.msk [vmem:[%s205 + $0x438] sm:$0xff] %vm4471, %v4446
          %4608 = vst.msk [vmem:[%s205 + $0x440] sm:$0xff] %vm4471, %v4447
          %4609 = vst.msk [vmem:[%s205 + $0x448] sm:$0xff] %vm4471, %v4448
          %4610 = vst.msk [vmem:[%s205 + $0x450] sm:$0xff] %vm4471, %v4449
          %4611 = vst.msk [vmem:[%s205 + $0x458] sm:$0xff] %vm4471, %v4450
          %4612 = vst.msk [vmem:[%s205 + $0x460] sm:$0xff] %vm4471, %v4451
          %4613 = vst.msk [vmem:[%s205 + $0x468] sm:$0xff] %vm4471, %v4452
          %4614 = vst.msk [vmem:[%s205 + $0x470] sm:$0xff] %vm4471, %v4453
          %4615 = vst.msk [vmem:[%s205 + $0x478] sm:$0xff] %vm4471, %v4454
          %4616 = vst.msk [vmem:[%s205 + $0x480] sm:$0xff] %vm4471, %v4455
          %4617 = vst.msk [vmem:[%s205 + $0x488] sm:$0xff] %vm4471, %v4456
          %4618 = vst.msk [vmem:[%s205 + $0x490] sm:$0xff] %vm4471, %v4457
          %4619 = vst.msk [vmem:[%s205 + $0x498] sm:$0xff] %vm4471, %v4458
          %4620 = vst.msk [vmem:[%s205 + $0x4a0] sm:$0xff] %vm4471, %v4459
          %4621 = vst.msk [vmem:[%s205 + $0x4a8] sm:$0xff] %vm4471, %v4460
          %4622 = vst.msk [vmem:[%s205 + $0x4b0] sm:$0xff] %vm4471, %v4461
          %4623 = vst.msk [vmem:[%s205 + $0x4b8] sm:$0xff] %vm4471, %v4462
          %4624 = vst.msk [vmem:[%s205 + $0x4c0] sm:$0xff] %vm4471, %v4463
          %4625 = vst.msk [vmem:[%s205 + $0x4c8] sm:$0xff] %vm4471, %v4464
          %4626 = vst.msk [vmem:[%s205 + $0x4d0] sm:$0xff] %vm4471, %v4465
          %4627 = vst.msk [vmem:[%s205 + $0x4d8] sm:$0xff] %vm4471, %v4466
          %4628 = vst.msk [vmem:[%s205 + $0x4e0] sm:$0xff] %vm4471, %v4467
          %4629 = vst.msk [vmem:[%s205 + $0x4e8] sm:$0xff] %vm4471, %v4468
          %4630 = vst.msk [vmem:[%s205 + $0x4f0] sm:$0xff] %vm4471, %v4469
          %4631 = vst.msk [vmem:[%s205 + $0x4f8] sm:$0xff] %vm4471, %v4470
        $region44: #{tpu_custom_call.1} parent=31 // pred_fallthru
          _
        %p4632 = scmp.lt.s32.totalorder %s21, 1
        %s4633 = scalar_select %p4632, %s21, 1
        %s4634 = smul.addr %s4633, 160
        %s4635 = smul.addr %s4634, 8
        %s4636 = scalar_lea.vmem %s3, %s4635
        // Predicated region
        $region45: #{tpu_custom_call.1} parent=31 // pred_check
          %p4637 = pneg %p117
        $region46: #{tpu_custom_call.1} parent=31 // pred_check_branch
          %4639 = sbr.rel (%p4637) target = $region48
        $region47: #{tpu_custom_call.1} parent=31 // pred_region
          _
        $region48: #{tpu_custom_call.1} parent=31 // pred_fallthru
          _
      $region32: #{tpu_custom_call.1} parent=5 // pred_fallthru
        _
      %p4640 = scmp.le.s32.totalorder 2, %s12
      // Predicated region
      $region49: #{tpu_custom_call.1} parent=5 // pred_check
        %p4641 = pneg %p4640
      $region50: #{tpu_custom_call.1} parent=5 // pred_check_branch
        %4643 = sbr.rel (%p4641) target = $region52
      $region51: #{tpu_custom_call.1} parent=5 // pred_region
        %s4644 = ssub.s32 %s12, 2
        // Predicated region
        $region53: #{tpu_custom_call.1} parent=51 // pred_check
          %p4645 = pneg %p123
        $region54: #{tpu_custom_call.1} parent=51 // pred_check_branch
          %4647 = sbr.rel (%p4645) target = $region56
        $region55: #{tpu_custom_call.1} parent=51 // pred_region
          %p4648 = scmp.lt.s32.totalorder %s23, 1
          %s4649 = scalar_select %p4648, %s23, 1
          %s4650 = smul.addr %s4649, 160
          %s4651 = smul.addr %s4650, 8
          %s4652 = scalar_lea.vmem %s3, %s4651
        $region56: #{tpu_custom_call.1} parent=51 // pred_fallthru
          _
      $region52: #{tpu_custom_call.1} parent=5 // pred_fallthru
        _
    $region6: #{tpu_custom_call.1} parent=1 // loop_footer
      %s16 = sadd.s32 1, %s12
    $region7: #{tpu_custom_call.1} parent=1 // loop_footer_branch
      %11 = sbr.rel target = $region3
    $region8: #{tpu_custom_call.1} parent=1 // loop_exit
      _
    %4653 = vsyncpa [#allocation4], 1
    %s4654 = scalar_lea.sflag [#allocation4], 1
    %4655 = vsyncpa %s4654, 1

</llo_original>
